<compile_context>
chip_gen: v6e
topology: v6e:2x2x1
jax: 0.10.0
libtpu: 0.0.40
codegen_flags: <defaults>
</compile_context>

<pallas_src>
import functools

import jax
import jax.numpy as jnp
from jax.experimental import pallas as pl
from jax.experimental.pallas import tpu as pltpu


def _res_film_kernel(x_ref, g_ref,
                     n1w_ref, n1b_ref, w1_ref, b1_ref,
                     w2_ref, b2_ref, n2w_ref, n2b_ref,
                     fsw_ref, fsb_ref, ftw_ref, ftb_ref,
                     out_ref, pad_ref, *, W, P, eps):
    C = x_ref.shape[1]
    HW = x_ref.shape[2]

    x = x_ref[0]                                    # (C, HW) f32, residual input

    # Column-wrap masks for the flattened 3x3 taps (hoisted; used by both convs).
    lane = jax.lax.broadcasted_iota(jnp.int32, (1, HW), 1)
    col = (lane & (W - 1)) if (W & (W - 1)) == 0 else (lane % W)
    mask_l = (col != 0).astype(jnp.float32)         # tap reads w-1: kill w == 0
    mask_r = (col != (W - 1)).astype(jnp.float32)   # tap reads w+1: kill w == W-1

    # Zero the padded scratch once; both convs only overwrite the interior,
    # so the P-wide zero margins stay valid.
    pad_ref[...] = jnp.zeros_like(pad_ref)

    def layer_norm(h, w_ref_, b_ref_):
        m = jnp.mean(h, axis=(0, 1), keepdims=True)
        v = jnp.mean((h - m) ** 2, axis=(0, 1), keepdims=True)
        return (h - m) * jax.lax.rsqrt(v + eps) * w_ref_[...] + b_ref_[...]

    def conv3x3(h, w_ref_, b_ref_):
        # h: (C, HW).  out[co] = b[co] + sum_{ci,ky,kx} w[ky,kx,co,ci] * shift(h[ci]).
        pad_ref[:, P:P + HW] = h                    # lane-aligned interior store
        acc = jnp.zeros((C, HW), jnp.float32)
        for ky in range(3):
            for kx in range(3):
                dy, dx = ky - 1, kx - 1
                off = P + dy * W + dx
                xs = pad_ref[:, off:off + HW]       # (C_in, HW) shifted tap
                if dx == -1:
                    xs = xs * mask_l
                elif dx == 1:
                    xs = xs * mask_r
                w_tap = w_ref_[ky * 3 + kx]         # (C_out, C_in)
                # C_in is tiny -> pure-VPU broadcast-FMA contraction (skip MXU).
                for ci in range(C):
                    acc = acc + w_tap[:, ci:ci + 1] * xs[ci:ci + 1, :]
        return acc + b_ref_[...]

    h = layer_norm(x, n1w_ref, n1b_ref)
    h = jnp.maximum(conv3x3(h, w1_ref, b1_ref), 0.0)
    h = conv3x3(h, w2_ref, b2_ref)
    h = layer_norm(h, n2w_ref, n2b_ref)

    # FiLM: per-channel scale/shift from the gating vector (tiny G-contraction
    # as VPU multiply + lane reduction, keeps everything lane-dense f32).
    g = g_ref[0]                                                    # (1, G)
    scale = jnp.sum(fsw_ref[...] * g, axis=1, keepdims=True) + fsb_ref[...]  # (C,1)
    shift = jnp.sum(ftw_ref[...] * g, axis=1, keepdims=True) + ftb_ref[...]  # (C,1)
    h = jnp.maximum(scale * h + shift, 0.0)

    out_ref[0] = h + x


class ResidualFiLMBlockPallas:
    """JAX/Pallas re-implementation of ResidualFiLMBlock (LN -> conv -> ReLU ->
    conv -> LN -> FiLM -> ReLU -> +residual)."""

    EPS = 1e-5

    def __init__(self, in_layers, size, gating_size, key):
        C, S, G = in_layers, size, gating_size
        self.C, self.S, self.G = C, S, G
        f32 = jnp.float32
        ks = jax.random.split(key, 12)
        cscale = 1.0 / float(jnp.sqrt(9.0 * C))
        lscale = 1.0 / float(jnp.sqrt(float(G)))
        self.p = {
            "n1_w": 1.0 + 0.1 * jax.random.normal(ks[0], (C, S, S), f32),
            "n1_b": 0.1 * jax.random.normal(ks[1], (C, S, S), f32),
            "w1": cscale * jax.random.normal(ks[2], (C, C, 3, 3), f32),
            "b1": 0.1 * jax.random.normal(ks[3], (C,), f32),
            "w2": cscale * jax.random.normal(ks[4], (C, C, 3, 3), f32),
            "b2": 0.1 * jax.random.normal(ks[5], (C,), f32),
            "n2_w": 1.0 + 0.1 * jax.random.normal(ks[6], (C, S, S), f32),
            "n2_b": 0.1 * jax.random.normal(ks[7], (C, S, S), f32),
            "fs_w": lscale * jax.random.normal(ks[8], (C, G), f32),
            "fs_b": 1.0 + 0.1 * jax.random.normal(ks[9], (C,), f32),
            "ft_w": lscale * jax.random.normal(ks[10], (C, G), f32),
            "ft_b": 0.1 * jax.random.normal(ks[11], (C,), f32),
        }
        # Kernel-layout parameters (precomputed once; tiny arrays, no per-call work).
        p = self.p
        HW = S * S
        self.k_args = (
            p["n1_w"].reshape(C, HW), p["n1_b"].reshape(C, HW),
            jnp.transpose(p["w1"], (2, 3, 0, 1)).reshape(9, C, C),   # (tap, Cout, Cin)
            p["b1"].reshape(C, 1),
            jnp.transpose(p["w2"], (2, 3, 0, 1)).reshape(9, C, C),
            p["b2"].reshape(C, 1),
            p["n2_w"].reshape(C, HW), p["n2_b"].reshape(C, HW),
            p["fs_w"], p["fs_b"].reshape(C, 1),
            p["ft_w"], p["ft_b"].reshape(C, 1),
        )

    def __call__(self, x, gating):
        B, C, H, W = x.shape
        assert C == self.C and H == self.S and W == self.S
        G = self.G
        HW = H * W
        # Free, contiguous reshapes only (no wrapper transposes of activations).
        x3 = x.reshape(B, C, HW).astype(jnp.float32)
        g3 = gating.reshape(B, 1, G).astype(jnp.float32)

        # Zero-pad margin for the flattened 3x3 taps; rounded up to a lane tile
        # so the interior store is lane-aligned.
        pad = 128 * ((W + 1 + 127) // 128)

        kernel = functools.partial(_res_film_kernel, W=W, P=pad, eps=self.EPS)

        const2 = lambda b: (0, 0)
        const3 = lambda b: (0, 0, 0)
        in_specs = [
            pl.BlockSpec((1, C, HW), lambda b: (b, 0, 0)),   # x (spatial on lanes)
            pl.BlockSpec((1, 1, G), lambda b: (b, 0, 0)),    # gating
            pl.BlockSpec((C, HW), const2),                   # n1 weight
            pl.BlockSpec((C, HW), const2),                   # n1 bias
            pl.BlockSpec((9, C, C), const3),                 # conv1 weight (tap,Cout,Cin)
            pl.BlockSpec((C, 1), const2),                    # conv1 bias
            pl.BlockSpec((9, C, C), const3),                 # conv2 weight
            pl.BlockSpec((C, 1), const2),                    # conv2 bias
            pl.BlockSpec((C, HW), const2),                   # n2 weight
            pl.BlockSpec((C, HW), const2),                   # n2 bias
            pl.BlockSpec((C, G), const2),                    # FiLM scale weight
            pl.BlockSpec((C, 1), const2),                    # FiLM scale bias
            pl.BlockSpec((C, G), const2),                    # FiLM shift weight
            pl.BlockSpec((C, 1), const2),                    # FiLM shift bias
        ]

        out = pl.pallas_call(
            kernel,
            out_shape=jax.ShapeDtypeStruct((B, C, HW), jnp.float32),
            grid=(B,),
            in_specs=in_specs,
            out_specs=pl.BlockSpec((1, C, HW), lambda b: (b, 0, 0)),
            scratch_shapes=[pltpu.VMEM((C, HW + 2 * pad), jnp.float32)],
            compiler_params=pltpu.CompilerParams(
                dimension_semantics=("parallel",)),
        )(x3, g3, *self.k_args)

        return out.reshape(B, C, H, W)

    # Pure-JAX reference of the PyTorch forward (for the correctness check).
    def reference(self, x, gating):
        p = self.p
        hp = jax.lax.Precision.HIGHEST

        def layer_norm(v, w, b):
            m = jnp.mean(v, axis=(1, 2, 3), keepdims=True)
            var = jnp.mean((v - m) ** 2, axis=(1, 2, 3), keepdims=True)
            return (v - m) * jax.lax.rsqrt(var + self.EPS) * w[None] + b[None]

        def conv(v, w, b):
            y = jax.lax.conv_general_dilated(
                v, w, window_strides=(1, 1), padding=((1, 1), (1, 1)),
                dimension_numbers=("NCHW", "OIHW", "NCHW"), precision=hp)
            return y + b[None, :, None, None]

        old = x
        h = layer_norm(x, p["n1_w"], p["n1_b"])
        h = jnp.maximum(conv(h, p["w1"], p["b1"]), 0.0)
        h = conv(h, p["w2"], p["b2"])
        h = layer_norm(h, p["n2_w"], p["n2_b"])
        scale = jnp.einsum("bg,cg->bc", gating, p["fs_w"], precision=hp) + p["fs_b"]
        shift = jnp.einsum("bg,cg->bc", gating, p["ft_w"], precision=hp) + p["ft_b"]
        h = jnp.maximum(scale[:, :, None, None] * h + shift[:, :, None, None], 0.0)
        return h + old


if __name__ == "__main__":
    key = jax.random.PRNGKey(0)
    k_param, k_x, k_g = jax.random.split(key, 3)

    B, C, S, G = 2, 4, 16, 32          # batch, in_layers, size, gating_size
    block = ResidualFiLMBlockPallas(C, S, G, k_param)

    x = jax.random.normal(k_x, (B, C, S, S), dtype=jnp.float32)
    gating = jax.random.normal(k_g, (B, G), dtype=jnp.float32)

    y = block(x, gating)
    jax.block_until_ready(y)

    y_ref = block.reference(x, gating)
    assert y.shape == (B, C, S, S), y.shape
    max_err = float(jnp.max(jnp.abs(y - y_ref)))
    assert jnp.allclose(y, y_ref, atol=1e-3, rtol=1e-3), f"max abs err {max_err}"

    print("KERNEL_OK")
</pallas_src>

<mosaic_0001>
module attributes {stable_mosaic.version = 11 : i64} {
  func.func @_res_film_kernel(%arg0: i32, %arg1: memref<1x4x256xf32, #tpu.memory_space<vmem>>, %arg2: memref<1x1x32xf32, #tpu.memory_space<vmem>>, %arg3: memref<4x256xf32, #tpu.memory_space<vmem>>, %arg4: memref<4x256xf32, #tpu.memory_space<vmem>>, %arg5: memref<9x4x4xf32, #tpu.memory_space<vmem>>, %arg6: memref<4x1xf32, #tpu.memory_space<vmem>>, %arg7: memref<9x4x4xf32, #tpu.memory_space<vmem>>, %arg8: memref<4x1xf32, #tpu.memory_space<vmem>>, %arg9: memref<4x256xf32, #tpu.memory_space<vmem>>, %arg10: memref<4x256xf32, #tpu.memory_space<vmem>>, %arg11: memref<4x32xf32, #tpu.memory_space<vmem>>, %arg12: memref<4x1xf32, #tpu.memory_space<vmem>>, %arg13: memref<4x32xf32, #tpu.memory_space<vmem>>, %arg14: memref<4x1xf32, #tpu.memory_space<vmem>>, %arg15: memref<1x4x256xf32, #tpu.memory_space<vmem>>, %arg16: memref<4x512xf32, #tpu.memory_space<vmem>>) attributes {dimension_semantics = [#tpu.dimension_semantics<parallel>], iteration_bounds = array<i64: 2>, scalar_prefetch = 0 : i64, scratch_operands = 1 : i64, tpu.core_type = #tpu.core_type<tc>, window_params = [{transform_indices = @transform_0, window_bounds = array<i64: 1, 4, 256>}, {transform_indices = @transform_1, window_bounds = array<i64: 1, 1, 32>}, {pipeline_mode = #tpu.pipeline_mode<synchronous>, transform_indices = @transform_2, window_bounds = array<i64: 4, 256>}, {pipeline_mode = #tpu.pipeline_mode<synchronous>, transform_indices = @transform_3, window_bounds = array<i64: 4, 256>}, {pipeline_mode = #tpu.pipeline_mode<synchronous>, transform_indices = @transform_4, window_bounds = array<i64: 9, 4, 4>}, {pipeline_mode = #tpu.pipeline_mode<synchronous>, transform_indices = @transform_5, window_bounds = array<i64: 4, 1>}, {pipeline_mode = #tpu.pipeline_mode<synchronous>, transform_indices = @transform_6, window_bounds = array<i64: 9, 4, 4>}, {pipeline_mode = #tpu.pipeline_mode<synchronous>, transform_indices = @transform_7, window_bounds = array<i64: 4, 1>}, {pipeline_mode = #tpu.pipeline_mode<synchronous>, transform_indices = @transform_8, window_bounds = array<i64: 4, 256>}, {pipeline_mode = #tpu.pipeline_mode<synchronous>, transform_indices = @transform_9, window_bounds = array<i64: 4, 256>}, {pipeline_mode = #tpu.pipeline_mode<synchronous>, transform_indices = @transform_10, window_bounds = array<i64: 4, 32>}, {pipeline_mode = #tpu.pipeline_mode<synchronous>, transform_indices = @transform_11, window_bounds = array<i64: 4, 1>}, {pipeline_mode = #tpu.pipeline_mode<synchronous>, transform_indices = @transform_12, window_bounds = array<i64: 4, 32>}, {pipeline_mode = #tpu.pipeline_mode<synchronous>, transform_indices = @transform_13, window_bounds = array<i64: 4, 1>}, {transform_indices = @transform_14, window_bounds = array<i64: 1, 4, 256>}]} {
    %c0 = arith.constant 0 : index
    %c0_0 = arith.constant 0 : index
    %c0_1 = arith.constant 0 : index
    %0 = vector.load %arg1[%c0, %c0_0, %c0_1] : memref<1x4x256xf32, #tpu.memory_space<vmem>>, vector<1x4x256xf32>
    %1 = vector.shape_cast %0 : vector<1x4x256xf32> to vector<4x256xf32>
    %2 = tpu.iota {dimensions = array<i32: 1>} : vector<1x256xi32>
    %c15_i32 = arith.constant 15 : i32
    %3 = vector.broadcast %c15_i32 : i32 to vector<1x256xi32>
    %4 = arith.andi %2, %3 : vector<1x256xi32>
    %c0_i32 = arith.constant 0 : i32
    %5 = vector.broadcast %c0_i32 : i32 to vector<1x256xi32>
    %6 = arith.cmpi ne, %4, %5 : vector<1x256xi32>
    %7 = arith.extui %6 : vector<1x256xi1> to vector<1x256xi32>
    %8 = arith.sitofp %7 : vector<1x256xi32> to vector<1x256xf32>
    %c15_i32_2 = arith.constant 15 : i32
    %9 = vector.broadcast %c15_i32_2 : i32 to vector<1x256xi32>
    %10 = arith.cmpi ne, %4, %9 : vector<1x256xi32>
    %11 = arith.extui %10 : vector<1x256xi1> to vector<1x256xi32>
    %12 = arith.sitofp %11 : vector<1x256xi32> to vector<1x256xf32>
    %cst = arith.constant 0.000000e+00 : f32
    %13 = vector.broadcast %cst : f32 to vector<4x512xf32>
    %c0_3 = arith.constant 0 : index
    %c0_4 = arith.constant 0 : index
    %14 = vector.load %arg16[%c0_3, %c0_4] : memref<4x512xf32, #tpu.memory_space<vmem>>, vector<4x512xf32>
    tpu.vector_store %arg16[%c0_3, %c0_4], %13 {strides = array<i32>} : memref<4x512xf32, #tpu.memory_space<vmem>>, vector<4x512xf32>,
    %15 = vector.shape_cast %1 : vector<4x256xf32> to vector<1x4x256xf32>
    %cst_5 = arith.constant dense<0.000000e+00> : vector<1xf32>
    %16 = vector.multi_reduction <add>, %15, %cst_5 [1, 2] : vector<1x4x256xf32> to vector<1xf32>
    %17 = vector.shape_cast %16 : vector<1xf32> to vector<1x1x1xf32>
    %18 = vector.extract %17[0, 0, 0] : f32 from vector<1x1x1xf32>
    %19 = vector.broadcast %18 : f32 to vector<1x1xf32>
    %cst_6 = arith.constant 1.024000e+03 : f32
    %20 = vector.broadcast %cst_6 : f32 to vector<1x1xf32>
    %21 = arith.divf %19, %20 : vector<1x1xf32>
    %22 = vector.broadcast %21 : vector<1x1xf32> to vector<4x256xf32>
    %23 = arith.subf %1, %22 : vector<4x256xf32>
    %24 = arith.mulf %23, %23 : vector<4x256xf32>
    %25 = vector.shape_cast %24 : vector<4x256xf32> to vector<1x4x256xf32>
    %cst_7 = arith.constant dense<0.000000e+00> : vector<1xf32>
    %26 = vector.multi_reduction <add>, %25, %cst_7 [1, 2] : vector<1x4x256xf32> to vector<1xf32>
    %27 = vector.shape_cast %26 : vector<1xf32> to vector<1x1x1xf32>
    %28 = vector.extract %27[0, 0, 0] : f32 from vector<1x1x1xf32>
    %29 = vector.broadcast %28 : f32 to vector<1x1xf32>
    %cst_8 = arith.constant 1.024000e+03 : f32
    %30 = vector.broadcast %cst_8 : f32 to vector<1x1xf32>
    %31 = arith.divf %29, %30 : vector<1x1xf32>
    %32 = vector.broadcast %21 : vector<1x1xf32> to vector<4x256xf32>
    %33 = arith.subf %1, %32 : vector<4x256xf32>
    %cst_9 = arith.constant 9.99999974E-6 : f32
    %34 = vector.broadcast %cst_9 : f32 to vector<1x1xf32>
    %35 = arith.addf %31, %34 : vector<1x1xf32>
    %36 = math.rsqrt %35 : vector<1x1xf32>
    %37 = vector.broadcast %36 : vector<1x1xf32> to vector<4x256xf32>
    %38 = arith.mulf %33, %37 : vector<4x256xf32>
    %c0_10 = arith.constant 0 : index
    %c0_11 = arith.constant 0 : index
    %39 = vector.load %arg3[%c0_10, %c0_11] : memref<4x256xf32, #tpu.memory_space<vmem>>, vector<4x256xf32>
    %40 = arith.mulf %38, %39 : vector<4x256xf32>
    %c0_12 = arith.constant 0 : index
    %c0_13 = arith.constant 0 : index
    %41 = vector.load %arg4[%c0_12, %c0_13] : memref<4x256xf32, #tpu.memory_space<vmem>>, vector<4x256xf32>
    %42 = arith.addf %40, %41 : vector<4x256xf32>
    %c0_14 = arith.constant 0 : index
    %c128 = arith.constant 128 : index
    %43 = vector.load %arg16[%c0_14, %c128] : memref<4x512xf32, #tpu.memory_space<vmem>>, vector<4x256xf32>
    tpu.vector_store %arg16[%c0_14, %c128], %42 {strides = array<i32>} : memref<4x512xf32, #tpu.memory_space<vmem>>, vector<4x256xf32>,
    %cst_15 = arith.constant 0.000000e+00 : f32
    %44 = vector.broadcast %cst_15 : f32 to vector<4x256xf32>
    %c0_16 = arith.constant 0 : index
    %c111 = arith.constant 111 : index
    %45 = vector.load %arg16[%c0_16, %c111] : memref<4x512xf32, #tpu.memory_space<vmem>>, vector<4x256xf32>
    %46 = vector.broadcast %8 : vector<1x256xf32> to vector<4x256xf32>
    %47 = arith.mulf %45, %46 : vector<4x256xf32>
    %c0_17 = arith.constant 0 : index
    %c0_18 = arith.constant 0 : index
    %c0_19 = arith.constant 0 : index
    %48 = vector.load %arg5[%c0_17, %c0_18, %c0_19] : memref<9x4x4xf32, #tpu.memory_space<vmem>>, vector<1x4x4xf32>
    %49 = vector.shape_cast %48 : vector<1x4x4xf32> to vector<4x4xf32>
    %50 = vector.extract_strided_slice %49 {offsets = [0, 0], sizes = [4, 1], strides = [1, 1]} : vector<4x4xf32> to vector<4x1xf32>
    %51 = vector.extract_strided_slice %47 {offsets = [0, 0], sizes = [1, 256], strides = [1, 1]} : vector<4x256xf32> to vector<1x256xf32>
    %52 = vector.broadcast %50 : vector<4x1xf32> to vector<4x256xf32>
    %53 = vector.broadcast %51 : vector<1x256xf32> to vector<4x256xf32>
    %54 = arith.mulf %52, %53 : vector<4x256xf32>
    %55 = arith.addf %44, %54 : vector<4x256xf32>
    %56 = vector.extract_strided_slice %49 {offsets = [0, 1], sizes = [4, 1], strides = [1, 1]} : vector<4x4xf32> to vector<4x1xf32>
    %57 = vector.extract_strided_slice %47 {offsets = [1, 0], sizes = [1, 256], strides = [1, 1]} : vector<4x256xf32> to vector<1x256xf32>
    %58 = vector.broadcast %56 : vector<4x1xf32> to vector<4x256xf32>
    %59 = vector.broadcast %57 : vector<1x256xf32> to vector<4x256xf32>
    %60 = arith.mulf %58, %59 : vector<4x256xf32>
    %61 = arith.addf %55, %60 : vector<4x256xf32>
    %62 = vector.extract_strided_slice %49 {offsets = [0, 2], sizes = [4, 1], strides = [1, 1]} : vector<4x4xf32> to vector<4x1xf32>
    %63 = vector.extract_strided_slice %47 {offsets = [2, 0], sizes = [1, 256], strides = [1, 1]} : vector<4x256xf32> to vector<1x256xf32>
    %64 = vector.broadcast %62 : vector<4x1xf32> to vector<4x256xf32>
    %65 = vector.broadcast %63 : vector<1x256xf32> to vector<4x256xf32>
    %66 = arith.mulf %64, %65 : vector<4x256xf32>
    %67 = arith.addf %61, %66 : vector<4x256xf32>
    %68 = vector.extract_strided_slice %49 {offsets = [0, 3], sizes = [4, 1], strides = [1, 1]} : vector<4x4xf32> to vector<4x1xf32>
    %69 = vector.extract_strided_slice %47 {offsets = [3, 0], sizes = [1, 256], strides = [1, 1]} : vector<4x256xf32> to vector<1x256xf32>
    %70 = vector.broadcast %68 : vector<4x1xf32> to vector<4x256xf32>
    %71 = vector.broadcast %69 : vector<1x256xf32> to vector<4x256xf32>
    %72 = arith.mulf %70, %71 : vector<4x256xf32>
    %73 = arith.addf %67, %72 : vector<4x256xf32>
    %c0_20 = arith.constant 0 : index
    %c112 = arith.constant 112 : index
    %74 = vector.load %arg16[%c0_20, %c112] : memref<4x512xf32, #tpu.memory_space<vmem>>, vector<4x256xf32>
    %c1 = arith.constant 1 : index
    %c0_21 = arith.constant 0 : index
    %c0_22 = arith.constant 0 : index
    %75 = vector.load %arg5[%c1, %c0_21, %c0_22] : memref<9x4x4xf32, #tpu.memory_space<vmem>>, vector<1x4x4xf32>
    %76 = vector.shape_cast %75 : vector<1x4x4xf32> to vector<4x4xf32>
    %77 = vector.extract_strided_slice %76 {offsets = [0, 0], sizes = [4, 1], strides = [1, 1]} : vector<4x4xf32> to vector<4x1xf32>
    %78 = vector.extract_strided_slice %74 {offsets = [0, 0], sizes = [1, 256], strides = [1, 1]} : vector<4x256xf32> to vector<1x256xf32>
    %79 = vector.broadcast %77 : vector<4x1xf32> to vector<4x256xf32>
    %80 = vector.broadcast %78 : vector<1x256xf32> to vector<4x256xf32>
    %81 = arith.mulf %79, %80 : vector<4x256xf32>
    %82 = arith.addf %73, %81 : vector<4x256xf32>
    %83 = vector.extract_strided_slice %76 {offsets = [0, 1], sizes = [4, 1], strides = [1, 1]} : vector<4x4xf32> to vector<4x1xf32>
    %84 = vector.extract_strided_slice %74 {offsets = [1, 0], sizes = [1, 256], strides = [1, 1]} : vector<4x256xf32> to vector<1x256xf32>
    %85 = vector.broadcast %83 : vector<4x1xf32> to vector<4x256xf32>
    %86 = vector.broadcast %84 : vector<1x256xf32> to vector<4x256xf32>
    %87 = arith.mulf %85, %86 : vector<4x256xf32>
    %88 = arith.addf %82, %87 : vector<4x256xf32>
    %89 = vector.extract_strided_slice %76 {offsets = [0, 2], sizes = [4, 1], strides = [1, 1]} : vector<4x4xf32> to vector<4x1xf32>
    %90 = vector.extract_strided_slice %74 {offsets = [2, 0], sizes = [1, 256], strides = [1, 1]} : vector<4x256xf32> to vector<1x256xf32>
    %91 = vector.broadcast %89 : vector<4x1xf32> to vector<4x256xf32>
    %92 = vector.broadcast %90 : vector<1x256xf32> to vector<4x256xf32>
    %93 = arith.mulf %91, %92 : vector<4x256xf32>
    %94 = arith.addf %88, %93 : vector<4x256xf32>
    %95 = vector.extract_strided_slice %76 {offsets = [0, 3], sizes = [4, 1], strides = [1, 1]} : vector<4x4xf32> to vector<4x1xf32>
    %96 = vector.extract_strided_slice %74 {offsets = [3, 0], sizes = [1, 256], strides = [1, 1]} : vector<4x256xf32> to vector<1x256xf32>
    %97 = vector.broadcast %95 : vector<4x1xf32> to vector<4x256xf32>
    %98 = vector.broadcast %96 : vector<1x256xf32> to vector<4x256xf32>
    %99 = arith.mulf %97, %98 : vector<4x256xf32>
    %100 = arith.addf %94, %99 : vector<4x256xf32>
    %c0_23 = arith.constant 0 : index
    %c113 = arith.constant 113 : index
    %101 = vector.load %arg16[%c0_23, %c113] : memref<4x512xf32, #tpu.memory_space<vmem>>, vector<4x256xf32>
    %102 = vector.broadcast %12 : vector<1x256xf32> to vector<4x256xf32>
    %103 = arith.mulf %101, %102 : vector<4x256xf32>
    %c2 = arith.constant 2 : index
    %c0_24 = arith.constant 0 : index
    %c0_25 = arith.constant 0 : index
    %104 = vector.load %arg5[%c2, %c0_24, %c0_25] : memref<9x4x4xf32, #tpu.memory_space<vmem>>, vector<1x4x4xf32>
    %105 = vector.shape_cast %104 : vector<1x4x4xf32> to vector<4x4xf32>
    %106 = vector.extract_strided_slice %105 {offsets = [0, 0], sizes = [4, 1], strides = [1, 1]} : vector<4x4xf32> to vector<4x1xf32>
    %107 = vector.extract_strided_slice %103 {offsets = [0, 0], sizes = [1, 256], strides = [1, 1]} : vector<4x256xf32> to vector<1x256xf32>
    %108 = vector.broadcast %106 : vector<4x1xf32> to vector<4x256xf32>
    %109 = vector.broadcast %107 : vector<1x256xf32> to vector<4x256xf32>
    %110 = arith.mulf %108, %109 : vector<4x256xf32>
    %111 = arith.addf %100, %110 : vector<4x256xf32>
    %112 = vector.extract_strided_slice %105 {offsets = [0, 1], sizes = [4, 1], strides = [1, 1]} : vector<4x4xf32> to vector<4x1xf32>
    %113 = vector.extract_strided_slice %103 {offsets = [1, 0], sizes = [1, 256], strides = [1, 1]} : vector<4x256xf32> to vector<1x256xf32>
    %114 = vector.broadcast %112 : vector<4x1xf32> to vector<4x256xf32>
    %115 = vector.broadcast %113 : vector<1x256xf32> to vector<4x256xf32>
    %116 = arith.mulf %114, %115 : vector<4x256xf32>
    %117 = arith.addf %111, %116 : vector<4x256xf32>
    %118 = vector.extract_strided_slice %105 {offsets = [0, 2], sizes = [4, 1], strides = [1, 1]} : vector<4x4xf32> to vector<4x1xf32>
    %119 = vector.extract_strided_slice %103 {offsets = [2, 0], sizes = [1, 256], strides = [1, 1]} : vector<4x256xf32> to vector<1x256xf32>
    %120 = vector.broadcast %118 : vector<4x1xf32> to vector<4x256xf32>
    %121 = vector.broadcast %119 : vector<1x256xf32> to vector<4x256xf32>
    %122 = arith.mulf %120, %121 : vector<4x256xf32>
    %123 = arith.addf %117, %122 : vector<4x256xf32>
    %124 = vector.extract_strided_slice %105 {offsets = [0, 3], sizes = [4, 1], strides = [1, 1]} : vector<4x4xf32> to vector<4x1xf32>
    %125 = vector.extract_strided_slice %103 {offsets = [3, 0], sizes = [1, 256], strides = [1, 1]} : vector<4x256xf32> to vector<1x256xf32>
    %126 = vector.broadcast %124 : vector<4x1xf32> to vector<4x256xf32>
    %127 = vector.broadcast %125 : vector<1x256xf32> to vector<4x256xf32>
    %128 = arith.mulf %126, %127 : vector<4x256xf32>
    %129 = arith.addf %123, %128 : vector<4x256xf32>
    %c0_26 = arith.constant 0 : index
    %c127 = arith.constant 127 : index
    %130 = vector.load %arg16[%c0_26, %c127] : memref<4x512xf32, #tpu.memory_space<vmem>>, vector<4x256xf32>
    %131 = vector.broadcast %8 : vector<1x256xf32> to vector<4x256xf32>
    %132 = arith.mulf %130, %131 : vector<4x256xf32>
    %c3 = arith.constant 3 : index
    %c0_27 = arith.constant 0 : index
    %c0_28 = arith.constant 0 : index
    %133 = vector.load %arg5[%c3, %c0_27, %c0_28] : memref<9x4x4xf32, #tpu.memory_space<vmem>>, vector<1x4x4xf32>
    %134 = vector.shape_cast %133 : vector<1x4x4xf32> to vector<4x4xf32>
    %135 = vector.extract_strided_slice %134 {offsets = [0, 0], sizes = [4, 1], strides = [1, 1]} : vector<4x4xf32> to vector<4x1xf32>
    %136 = vector.extract_strided_slice %132 {offsets = [0, 0], sizes = [1, 256], strides = [1, 1]} : vector<4x256xf32> to vector<1x256xf32>
    %137 = vector.broadcast %135 : vector<4x1xf32> to vector<4x256xf32>
    %138 = vector.broadcast %136 : vector<1x256xf32> to vector<4x256xf32>
    %139 = arith.mulf %137, %138 : vector<4x256xf32>
    %140 = arith.addf %129, %139 : vector<4x256xf32>
    %141 = vector.extract_strided_slice %134 {offsets = [0, 1], sizes = [4, 1], strides = [1, 1]} : vector<4x4xf32> to vector<4x1xf32>
    %142 = vector.extract_strided_slice %132 {offsets = [1, 0], sizes = [1, 256], strides = [1, 1]} : vector<4x256xf32> to vector<1x256xf32>
    %143 = vector.broadcast %141 : vector<4x1xf32> to vector<4x256xf32>
    %144 = vector.broadcast %142 : vector<1x256xf32> to vector<4x256xf32>
    %145 = arith.mulf %143, %144 : vector<4x256xf32>
    %146 = arith.addf %140, %145 : vector<4x256xf32>
    %147 = vector.extract_strided_slice %134 {offsets = [0, 2], sizes = [4, 1], strides = [1, 1]} : vector<4x4xf32> to vector<4x1xf32>
    %148 = vector.extract_strided_slice %132 {offsets = [2, 0], sizes = [1, 256], strides = [1, 1]} : vector<4x256xf32> to vector<1x256xf32>
    %149 = vector.broadcast %147 : vector<4x1xf32> to vector<4x256xf32>
    %150 = vector.broadcast %148 : vector<1x256xf32> to vector<4x256xf32>
    %151 = arith.mulf %149, %150 : vector<4x256xf32>
    %152 = arith.addf %146, %151 : vector<4x256xf32>
    %153 = vector.extract_strided_slice %134 {offsets = [0, 3], sizes = [4, 1], strides = [1, 1]} : vector<4x4xf32> to vector<4x1xf32>
    %154 = vector.extract_strided_slice %132 {offsets = [3, 0], sizes = [1, 256], strides = [1, 1]} : vector<4x256xf32> to vector<1x256xf32>
    %155 = vector.broadcast %153 : vector<4x1xf32> to vector<4x256xf32>
    %156 = vector.broadcast %154 : vector<1x256xf32> to vector<4x256xf32>
    %157 = arith.mulf %155, %156 : vector<4x256xf32>
    %158 = arith.addf %152, %157 : vector<4x256xf32>
    %c0_29 = arith.constant 0 : index
    %c128_30 = arith.constant 128 : index
    %159 = vector.load %arg16[%c0_29, %c128_30] : memref<4x512xf32, #tpu.memory_space<vmem>>, vector<4x256xf32>
    %c4 = arith.constant 4 : index
    %c0_31 = arith.constant 0 : index
    %c0_32 = arith.constant 0 : index
    %160 = vector.load %arg5[%c4, %c0_31, %c0_32] : memref<9x4x4xf32, #tpu.memory_space<vmem>>, vector<1x4x4xf32>
    %161 = vector.shape_cast %160 : vector<1x4x4xf32> to vector<4x4xf32>
    %162 = vector.extract_strided_slice %161 {offsets = [0, 0], sizes = [4, 1], strides = [1, 1]} : vector<4x4xf32> to vector<4x1xf32>
    %163 = vector.extract_strided_slice %159 {offsets = [0, 0], sizes = [1, 256], strides = [1, 1]} : vector<4x256xf32> to vector<1x256xf32>
    %164 = vector.broadcast %162 : vector<4x1xf32> to vector<4x256xf32>
    %165 = vector.broadcast %163 : vector<1x256xf32> to vector<4x256xf32>
    %166 = arith.mulf %164, %165 : vector<4x256xf32>
    %167 = arith.addf %158, %166 : vector<4x256xf32>
    %168 = vector.extract_strided_slice %161 {offsets = [0, 1], sizes = [4, 1], strides = [1, 1]} : vector<4x4xf32> to vector<4x1xf32>
    %169 = vector.extract_strided_slice %159 {offsets = [1, 0], sizes = [1, 256], strides = [1, 1]} : vector<4x256xf32> to vector<1x256xf32>
    %170 = vector.broadcast %168 : vector<4x1xf32> to vector<4x256xf32>
    %171 = vector.broadcast %169 : vector<1x256xf32> to vector<4x256xf32>
    %172 = arith.mulf %170, %171 : vector<4x256xf32>
    %173 = arith.addf %167, %172 : vector<4x256xf32>
    %174 = vector.extract_strided_slice %161 {offsets = [0, 2], sizes = [4, 1], strides = [1, 1]} : vector<4x4xf32> to vector<4x1xf32>
    %175 = vector.extract_strided_slice %159 {offsets = [2, 0], sizes = [1, 256], strides = [1, 1]} : vector<4x256xf32> to vector<1x256xf32>
    %176 = vector.broadcast %174 : vector<4x1xf32> to vector<4x256xf32>
    %177 = vector.broadcast %175 : vector<1x256xf32> to vector<4x256xf32>
    %178 = arith.mulf %176, %177 : vector<4x256xf32>
    %179 = arith.addf %173, %178 : vector<4x256xf32>
    %180 = vector.extract_strided_slice %161 {offsets = [0, 3], sizes = [4, 1], strides = [1, 1]} : vector<4x4xf32> to vector<4x1xf32>
    %181 = vector.extract_strided_slice %159 {offsets = [3, 0], sizes = [1, 256], strides = [1, 1]} : vector<4x256xf32> to vector<1x256xf32>
    %182 = vector.broadcast %180 : vector<4x1xf32> to vector<4x256xf32>
    %183 = vector.broadcast %181 : vector<1x256xf32> to vector<4x256xf32>
    %184 = arith.mulf %182, %183 : vector<4x256xf32>
    %185 = arith.addf %179, %184 : vector<4x256xf32>
    %c0_33 = arith.constant 0 : index
    %c129 = arith.constant 129 : index
    %186 = vector.load %arg16[%c0_33, %c129] : memref<4x512xf32, #tpu.memory_space<vmem>>, vector<4x256xf32>
    %187 = vector.broadcast %12 : vector<1x256xf32> to vector<4x256xf32>
    %188 = arith.mulf %186, %187 : vector<4x256xf32>
    %c5 = arith.constant 5 : index
    %c0_34 = arith.constant 0 : index
    %c0_35 = arith.constant 0 : index
    %189 = vector.load %arg5[%c5, %c0_34, %c0_35] : memref<9x4x4xf32, #tpu.memory_space<vmem>>, vector<1x4x4xf32>
    %190 = vector.shape_cast %189 : vector<1x4x4xf32> to vector<4x4xf32>
    %191 = vector.extract_strided_slice %190 {offsets = [0, 0], sizes = [4, 1], strides = [1, 1]} : vector<4x4xf32> to vector<4x1xf32>
    %192 = vector.extract_strided_slice %188 {offsets = [0, 0], sizes = [1, 256], strides = [1, 1]} : vector<4x256xf32> to vector<1x256xf32>
    %193 = vector.broadcast %191 : vector<4x1xf32> to vector<4x256xf32>
    %194 = vector.broadcast %192 : vector<1x256xf32> to vector<4x256xf32>
    %195 = arith.mulf %193, %194 : vector<4x256xf32>
    %196 = arith.addf %185, %195 : vector<4x256xf32>
    %197 = vector.extract_strided_slice %190 {offsets = [0, 1], sizes = [4, 1], strides = [1, 1]} : vector<4x4xf32> to vector<4x1xf32>
    %198 = vector.extract_strided_slice %188 {offsets = [1, 0], sizes = [1, 256], strides = [1, 1]} : vector<4x256xf32> to vector<1x256xf32>
    %199 = vector.broadcast %197 : vector<4x1xf32> to vector<4x256xf32>
    %200 = vector.broadcast %198 : vector<1x256xf32> to vector<4x256xf32>
    %201 = arith.mulf %199, %200 : vector<4x256xf32>
    %202 = arith.addf %196, %201 : vector<4x256xf32>
    %203 = vector.extract_strided_slice %190 {offsets = [0, 2], sizes = [4, 1], strides = [1, 1]} : vector<4x4xf32> to vector<4x1xf32>
    %204 = vector.extract_strided_slice %188 {offsets = [2, 0], sizes = [1, 256], strides = [1, 1]} : vector<4x256xf32> to vector<1x256xf32>
    %205 = vector.broadcast %203 : vector<4x1xf32> to vector<4x256xf32>
    %206 = vector.broadcast %204 : vector<1x256xf32> to vector<4x256xf32>
    %207 = arith.mulf %205, %206 : vector<4x256xf32>
    %208 = arith.addf %202, %207 : vector<4x256xf32>
    %209 = vector.extract_strided_slice %190 {offsets = [0, 3], sizes = [4, 1], strides = [1, 1]} : vector<4x4xf32> to vector<4x1xf32>
    %210 = vector.extract_strided_slice %188 {offsets = [3, 0], sizes = [1, 256], strides = [1, 1]} : vector<4x256xf32> to vector<1x256xf32>
    %211 = vector.broadcast %209 : vector<4x1xf32> to vector<4x256xf32>
    %212 = vector.broadcast %210 : vector<1x256xf32> to vector<4x256xf32>
    %213 = arith.mulf %211, %212 : vector<4x256xf32>
    %214 = arith.addf %208, %213 : vector<4x256xf32>
    %c0_36 = arith.constant 0 : index
    %c143 = arith.constant 143 : index
    %215 = vector.load %arg16[%c0_36, %c143] : memref<4x512xf32, #tpu.memory_space<vmem>>, vector<4x256xf32>
    %216 = vector.broadcast %8 : vector<1x256xf32> to vector<4x256xf32>
    %217 = arith.mulf %215, %216 : vector<4x256xf32>
    %c6 = arith.constant 6 : index
    %c0_37 = arith.constant 0 : index
    %c0_38 = arith.constant 0 : index
    %218 = vector.load %arg5[%c6, %c0_37, %c0_38] : memref<9x4x4xf32, #tpu.memory_space<vmem>>, vector<1x4x4xf32>
    %219 = vector.shape_cast %218 : vector<1x4x4xf32> to vector<4x4xf32>
    %220 = vector.extract_strided_slice %219 {offsets = [0, 0], sizes = [4, 1], strides = [1, 1]} : vector<4x4xf32> to vector<4x1xf32>
    %221 = vector.extract_strided_slice %217 {offsets = [0, 0], sizes = [1, 256], strides = [1, 1]} : vector<4x256xf32> to vector<1x256xf32>
    %222 = vector.broadcast %220 : vector<4x1xf32> to vector<4x256xf32>
    %223 = vector.broadcast %221 : vector<1x256xf32> to vector<4x256xf32>
    %224 = arith.mulf %222, %223 : vector<4x256xf32>
    %225 = arith.addf %214, %224 : vector<4x256xf32>
    %226 = vector.extract_strided_slice %219 {offsets = [0, 1], sizes = [4, 1], strides = [1, 1]} : vector<4x4xf32> to vector<4x1xf32>
    %227 = vector.extract_strided_slice %217 {offsets = [1, 0], sizes = [1, 256], strides = [1, 1]} : vector<4x256xf32> to vector<1x256xf32>
    %228 = vector.broadcast %226 : vector<4x1xf32> to vector<4x256xf32>
    %229 = vector.broadcast %227 : vector<1x256xf32> to vector<4x256xf32>
    %230 = arith.mulf %228, %229 : vector<4x256xf32>
    %231 = arith.addf %225, %230 : vector<4x256xf32>
    %232 = vector.extract_strided_slice %219 {offsets = [0, 2], sizes = [4, 1], strides = [1, 1]} : vector<4x4xf32> to vector<4x1xf32>
    %233 = vector.extract_strided_slice %217 {offsets = [2, 0], sizes = [1, 256], strides = [1, 1]} : vector<4x256xf32> to vector<1x256xf32>
    %234 = vector.broadcast %232 : vector<4x1xf32> to vector<4x256xf32>
    %235 = vector.broadcast %233 : vector<1x256xf32> to vector<4x256xf32>
    %236 = arith.mulf %234, %235 : vector<4x256xf32>
    %237 = arith.addf %231, %236 : vector<4x256xf32>
    %238 = vector.extract_strided_slice %219 {offsets = [0, 3], sizes = [4, 1], strides = [1, 1]} : vector<4x4xf32> to vector<4x1xf32>
    %239 = vector.extract_strided_slice %217 {offsets = [3, 0], sizes = [1, 256], strides = [1, 1]} : vector<4x256xf32> to vector<1x256xf32>
    %240 = vector.broadcast %238 : vector<4x1xf32> to vector<4x256xf32>
    %241 = vector.broadcast %239 : vector<1x256xf32> to vector<4x256xf32>
    %242 = arith.mulf %240, %241 : vector<4x256xf32>
    %243 = arith.addf %237, %242 : vector<4x256xf32>
    %c0_39 = arith.constant 0 : index
    %c144 = arith.constant 144 : index
    %244 = vector.load %arg16[%c0_39, %c144] : memref<4x512xf32, #tpu.memory_space<vmem>>, vector<4x256xf32>
    %c7 = arith.constant 7 : index
    %c0_40 = arith.constant 0 : index
    %c0_41 = arith.constant 0 : index
    %245 = vector.load %arg5[%c7, %c0_40, %c0_41] : memref<9x4x4xf32, #tpu.memory_space<vmem>>, vector<1x4x4xf32>
    %246 = vector.shape_cast %245 : vector<1x4x4xf32> to vector<4x4xf32>
    %247 = vector.extract_strided_slice %246 {offsets = [0, 0], sizes = [4, 1], strides = [1, 1]} : vector<4x4xf32> to vector<4x1xf32>
    %248 = vector.extract_strided_slice %244 {offsets = [0, 0], sizes = [1, 256], strides = [1, 1]} : vector<4x256xf32> to vector<1x256xf32>
    %249 = vector.broadcast %247 : vector<4x1xf32> to vector<4x256xf32>
    %250 = vector.broadcast %248 : vector<1x256xf32> to vector<4x256xf32>
    %251 = arith.mulf %249, %250 : vector<4x256xf32>
    %252 = arith.addf %243, %251 : vector<4x256xf32>
    %253 = vector.extract_strided_slice %246 {offsets = [0, 1], sizes = [4, 1], strides = [1, 1]} : vector<4x4xf32> to vector<4x1xf32>
    %254 = vector.extract_strided_slice %244 {offsets = [1, 0], sizes = [1, 256], strides = [1, 1]} : vector<4x256xf32> to vector<1x256xf32>
    %255 = vector.broadcast %253 : vector<4x1xf32> to vector<4x256xf32>
    %256 = vector.broadcast %254 : vector<1x256xf32> to vector<4x256xf32>
    %257 = arith.mulf %255, %256 : vector<4x256xf32>
    %258 = arith.addf %252, %257 : vector<4x256xf32>
    %259 = vector.extract_strided_slice %246 {offsets = [0, 2], sizes = [4, 1], strides = [1, 1]} : vector<4x4xf32> to vector<4x1xf32>
    %260 = vector.extract_strided_slice %244 {offsets = [2, 0], sizes = [1, 256], strides = [1, 1]} : vector<4x256xf32> to vector<1x256xf32>
    %261 = vector.broadcast %259 : vector<4x1xf32> to vector<4x256xf32>
    %262 = vector.broadcast %260 : vector<1x256xf32> to vector<4x256xf32>
    %263 = arith.mulf %261, %262 : vector<4x256xf32>
    %264 = arith.addf %258, %263 : vector<4x256xf32>
    %265 = vector.extract_strided_slice %246 {offsets = [0, 3], sizes = [4, 1], strides = [1, 1]} : vector<4x4xf32> to vector<4x1xf32>
    %266 = vector.extract_strided_slice %244 {offsets = [3, 0], sizes = [1, 256], strides = [1, 1]} : vector<4x256xf32> to vector<1x256xf32>
    %267 = vector.broadcast %265 : vector<4x1xf32> to vector<4x256xf32>
    %268 = vector.broadcast %266 : vector<1x256xf32> to vector<4x256xf32>
    %269 = arith.mulf %267, %268 : vector<4x256xf32>
    %270 = arith.addf %264, %269 : vector<4x256xf32>
    %c0_42 = arith.constant 0 : index
    %c145 = arith.constant 145 : index
    %271 = vector.load %arg16[%c0_42, %c145] : memref<4x512xf32, #tpu.memory_space<vmem>>, vector<4x256xf32>
    %272 = vector.broadcast %12 : vector<1x256xf32> to vector<4x256xf32>
    %273 = arith.mulf %271, %272 : vector<4x256xf32>
    %c8 = arith.constant 8 : index
    %c0_43 = arith.constant 0 : index
    %c0_44 = arith.constant 0 : index
    %274 = vector.load %arg5[%c8, %c0_43, %c0_44] : memref<9x4x4xf32, #tpu.memory_space<vmem>>, vector<1x4x4xf32>
    %275 = vector.shape_cast %274 : vector<1x4x4xf32> to vector<4x4xf32>
    %276 = vector.extract_strided_slice %275 {offsets = [0, 0], sizes = [4, 1], strides = [1, 1]} : vector<4x4xf32> to vector<4x1xf32>
    %277 = vector.extract_strided_slice %273 {offsets = [0, 0], sizes = [1, 256], strides = [1, 1]} : vector<4x256xf32> to vector<1x256xf32>
    %278 = vector.broadcast %276 : vector<4x1xf32> to vector<4x256xf32>
    %279 = vector.broadcast %277 : vector<1x256xf32> to vector<4x256xf32>
    %280 = arith.mulf %278, %279 : vector<4x256xf32>
    %281 = arith.addf %270, %280 : vector<4x256xf32>
    %282 = vector.extract_strided_slice %275 {offsets = [0, 1], sizes = [4, 1], strides = [1, 1]} : vector<4x4xf32> to vector<4x1xf32>
    %283 = vector.extract_strided_slice %273 {offsets = [1, 0], sizes = [1, 256], strides = [1, 1]} : vector<4x256xf32> to vector<1x256xf32>
    %284 = vector.broadcast %282 : vector<4x1xf32> to vector<4x256xf32>
    %285 = vector.broadcast %283 : vector<1x256xf32> to vector<4x256xf32>
    %286 = arith.mulf %284, %285 : vector<4x256xf32>
    %287 = arith.addf %281, %286 : vector<4x256xf32>
    %288 = vector.extract_strided_slice %275 {offsets = [0, 2], sizes = [4, 1], strides = [1, 1]} : vector<4x4xf32> to vector<4x1xf32>
    %289 = vector.extract_strided_slice %273 {offsets = [2, 0], sizes = [1, 256], strides = [1, 1]} : vector<4x256xf32> to vector<1x256xf32>
    %290 = vector.broadcast %288 : vector<4x1xf32> to vector<4x256xf32>
    %291 = vector.broadcast %289 : vector<1x256xf32> to vector<4x256xf32>
    %292 = arith.mulf %290, %291 : vector<4x256xf32>
    %293 = arith.addf %287, %292 : vector<4x256xf32>
    %294 = vector.extract_strided_slice %275 {offsets = [0, 3], sizes = [4, 1], strides = [1, 1]} : vector<4x4xf32> to vector<4x1xf32>
    %295 = vector.extract_strided_slice %273 {offsets = [3, 0], sizes = [1, 256], strides = [1, 1]} : vector<4x256xf32> to vector<1x256xf32>
    %296 = vector.broadcast %294 : vector<4x1xf32> to vector<4x256xf32>
    %297 = vector.broadcast %295 : vector<1x256xf32> to vector<4x256xf32>
    %298 = arith.mulf %296, %297 : vector<4x256xf32>
    %299 = arith.addf %293, %298 : vector<4x256xf32>
    %c0_45 = arith.constant 0 : index
    %c0_46 = arith.constant 0 : index
    %300 = vector.load %arg6[%c0_45, %c0_46] : memref<4x1xf32, #tpu.memory_space<vmem>>, vector<4x1xf32>
    %301 = vector.broadcast %300 : vector<4x1xf32> to vector<4x256xf32>
    %302 = arith.addf %299, %301 : vector<4x256xf32>
    %cst_47 = arith.constant 0.000000e+00 : f32
    %303 = vector.broadcast %cst_47 : f32 to vector<4x256xf32>
    %304 = arith.maximumf %302, %303 : vector<4x256xf32>
    %c0_48 = arith.constant 0 : index
    %c128_49 = arith.constant 128 : index
    %305 = vector.load %arg16[%c0_48, %c128_49] : memref<4x512xf32, #tpu.memory_space<vmem>>, vector<4x256xf32>
    tpu.vector_store %arg16[%c0_48, %c128_49], %304 {strides = array<i32>} : memref<4x512xf32, #tpu.memory_space<vmem>>, vector<4x256xf32>,
    %cst_50 = arith.constant 0.000000e+00 : f32
    %306 = vector.broadcast %cst_50 : f32 to vector<4x256xf32>
    %c0_51 = arith.constant 0 : index
    %c111_52 = arith.constant 111 : index
    %307 = vector.load %arg16[%c0_51, %c111_52] : memref<4x512xf32, #tpu.memory_space<vmem>>, vector<4x256xf32>
    %308 = vector.broadcast %8 : vector<1x256xf32> to vector<4x256xf32>
    %309 = arith.mulf %307, %308 : vector<4x256xf32>
    %c0_53 = arith.constant 0 : index
    %c0_54 = arith.constant 0 : index
    %c0_55 = arith.constant 0 : index
    %310 = vector.load %arg7[%c0_53, %c0_54, %c0_55] : memref<9x4x4xf32, #tpu.memory_space<vmem>>, vector<1x4x4xf32>
    %311 = vector.shape_cast %310 : vector<1x4x4xf32> to vector<4x4xf32>
    %312 = vector.extract_strided_slice %311 {offsets = [0, 0], sizes = [4, 1], strides = [1, 1]} : vector<4x4xf32> to vector<4x1xf32>
    %313 = vector.extract_strided_slice %309 {offsets = [0, 0], sizes = [1, 256], strides = [1, 1]} : vector<4x256xf32> to vector<1x256xf32>
    %314 = vector.broadcast %312 : vector<4x1xf32> to vector<4x256xf32>
    %315 = vector.broadcast %313 : vector<1x256xf32> to vector<4x256xf32>
    %316 = arith.mulf %314, %315 : vector<4x256xf32>
    %317 = arith.addf %306, %316 : vector<4x256xf32>
    %318 = vector.extract_strided_slice %311 {offsets = [0, 1], sizes = [4, 1], strides = [1, 1]} : vector<4x4xf32> to vector<4x1xf32>
    %319 = vector.extract_strided_slice %309 {offsets = [1, 0], sizes = [1, 256], strides = [1, 1]} : vector<4x256xf32> to vector<1x256xf32>
    %320 = vector.broadcast %318 : vector<4x1xf32> to vector<4x256xf32>
    %321 = vector.broadcast %319 : vector<1x256xf32> to vector<4x256xf32>
    %322 = arith.mulf %320, %321 : vector<4x256xf32>
    %323 = arith.addf %317, %322 : vector<4x256xf32>
    %324 = vector.extract_strided_slice %311 {offsets = [0, 2], sizes = [4, 1], strides = [1, 1]} : vector<4x4xf32> to vector<4x1xf32>
    %325 = vector.extract_strided_slice %309 {offsets = [2, 0], sizes = [1, 256], strides = [1, 1]} : vector<4x256xf32> to vector<1x256xf32>
    %326 = vector.broadcast %324 : vector<4x1xf32> to vector<4x256xf32>
    %327 = vector.broadcast %325 : vector<1x256xf32> to vector<4x256xf32>
    %328 = arith.mulf %326, %327 : vector<4x256xf32>
    %329 = arith.addf %323, %328 : vector<4x256xf32>
    %330 = vector.extract_strided_slice %311 {offsets = [0, 3], sizes = [4, 1], strides = [1, 1]} : vector<4x4xf32> to vector<4x1xf32>
    %331 = vector.extract_strided_slice %309 {offsets = [3, 0], sizes = [1, 256], strides = [1, 1]} : vector<4x256xf32> to vector<1x256xf32>
    %332 = vector.broadcast %330 : vector<4x1xf32> to vector<4x256xf32>
    %333 = vector.broadcast %331 : vector<1x256xf32> to vector<4x256xf32>
    %334 = arith.mulf %332, %333 : vector<4x256xf32>
    %335 = arith.addf %329, %334 : vector<4x256xf32>
    %c0_56 = arith.constant 0 : index
    %c112_57 = arith.constant 112 : index
    %336 = vector.load %arg16[%c0_56, %c112_57] : memref<4x512xf32, #tpu.memory_space<vmem>>, vector<4x256xf32>
    %c1_58 = arith.constant 1 : index
    %c0_59 = arith.constant 0 : index
    %c0_60 = arith.constant 0 : index
    %337 = vector.load %arg7[%c1_58, %c0_59, %c0_60] : memref<9x4x4xf32, #tpu.memory_space<vmem>>, vector<1x4x4xf32>
    %338 = vector.shape_cast %337 : vector<1x4x4xf32> to vector<4x4xf32>
    %339 = vector.extract_strided_slice %338 {offsets = [0, 0], sizes = [4, 1], strides = [1, 1]} : vector<4x4xf32> to vector<4x1xf32>
    %340 = vector.extract_strided_slice %336 {offsets = [0, 0], sizes = [1, 256], strides = [1, 1]} : vector<4x256xf32> to vector<1x256xf32>
    %341 = vector.broadcast %339 : vector<4x1xf32> to vector<4x256xf32>
    %342 = vector.broadcast %340 : vector<1x256xf32> to vector<4x256xf32>
    %343 = arith.mulf %341, %342 : vector<4x256xf32>
    %344 = arith.addf %335, %343 : vector<4x256xf32>
    %345 = vector.extract_strided_slice %338 {offsets = [0, 1], sizes = [4, 1], strides = [1, 1]} : vector<4x4xf32> to vector<4x1xf32>
    %346 = vector.extract_strided_slice %336 {offsets = [1, 0], sizes = [1, 256], strides = [1, 1]} : vector<4x256xf32> to vector<1x256xf32>
    %347 = vector.broadcast %345 : vector<4x1xf32> to vector<4x256xf32>
    %348 = vector.broadcast %346 : vector<1x256xf32> to vector<4x256xf32>
    %349 = arith.mulf %347, %348 : vector<4x256xf32>
    %350 = arith.addf %344, %349 : vector<4x256xf32>
    %351 = vector.extract_strided_slice %338 {offsets = [0, 2], sizes = [4, 1], strides = [1, 1]} : vector<4x4xf32> to vector<4x1xf32>
    %352 = vector.extract_strided_slice %336 {offsets = [2, 0], sizes = [1, 256], strides = [1, 1]} : vector<4x256xf32> to vector<1x256xf32>
    %353 = vector.broadcast %351 : vector<4x1xf32> to vector<4x256xf32>
    %354 = vector.broadcast %352 : vector<1x256xf32> to vector<4x256xf32>
    %355 = arith.mulf %353, %354 : vector<4x256xf32>
    %356 = arith.addf %350, %355 : vector<4x256xf32>
    %357 = vector.extract_strided_slice %338 {offsets = [0, 3], sizes = [4, 1], strides = [1, 1]} : vector<4x4xf32> to vector<4x1xf32>
    %358 = vector.extract_strided_slice %336 {offsets = [3, 0], sizes = [1, 256], strides = [1, 1]} : vector<4x256xf32> to vector<1x256xf32>
    %359 = vector.broadcast %357 : vector<4x1xf32> to vector<4x256xf32>
    %360 = vector.broadcast %358 : vector<1x256xf32> to vector<4x256xf32>
    %361 = arith.mulf %359, %360 : vector<4x256xf32>
    %362 = arith.addf %356, %361 : vector<4x256xf32>
    %c0_61 = arith.constant 0 : index
    %c113_62 = arith.constant 113 : index
    %363 = vector.load %arg16[%c0_61, %c113_62] : memref<4x512xf32, #tpu.memory_space<vmem>>, vector<4x256xf32>
    %364 = vector.broadcast %12 : vector<1x256xf32> to vector<4x256xf32>
    %365 = arith.mulf %363, %364 : vector<4x256xf32>
    %c2_63 = arith.constant 2 : index
    %c0_64 = arith.constant 0 : index
    %c0_65 = arith.constant 0 : index
    %366 = vector.load %arg7[%c2_63, %c0_64, %c0_65] : memref<9x4x4xf32, #tpu.memory_space<vmem>>, vector<1x4x4xf32>
    %367 = vector.shape_cast %366 : vector<1x4x4xf32> to vector<4x4xf32>
    %368 = vector.extract_strided_slice %367 {offsets = [0, 0], sizes = [4, 1], strides = [1, 1]} : vector<4x4xf32> to vector<4x1xf32>
    %369 = vector.extract_strided_slice %365 {offsets = [0, 0], sizes = [1, 256], strides = [1, 1]} : vector<4x256xf32> to vector<1x256xf32>
    %370 = vector.broadcast %368 : vector<4x1xf32> to vector<4x256xf32>
    %371 = vector.broadcast %369 : vector<1x256xf32> to vector<4x256xf32>
    %372 = arith.mulf %370, %371 : vector<4x256xf32>
    %373 = arith.addf %362, %372 : vector<4x256xf32>
    %374 = vector.extract_strided_slice %367 {offsets = [0, 1], sizes = [4, 1], strides = [1, 1]} : vector<4x4xf32> to vector<4x1xf32>
    %375 = vector.extract_strided_slice %365 {offsets = [1, 0], sizes = [1, 256], strides = [1, 1]} : vector<4x256xf32> to vector<1x256xf32>
    %376 = vector.broadcast %374 : vector<4x1xf32> to vector<4x256xf32>
    %377 = vector.broadcast %375 : vector<1x256xf32> to vector<4x256xf32>
    %378 = arith.mulf %376, %377 : vector<4x256xf32>
    %379 = arith.addf %373, %378 : vector<4x256xf32>
    %380 = vector.extract_strided_slice %367 {offsets = [0, 2], sizes = [4, 1], strides = [1, 1]} : vector<4x4xf32> to vector<4x1xf32>
    %381 = vector.extract_strided_slice %365 {offsets = [2, 0], sizes = [1, 256], strides = [1, 1]} : vector<4x256xf32> to vector<1x256xf32>
    %382 = vector.broadcast %380 : vector<4x1xf32> to vector<4x256xf32>
    %383 = vector.broadcast %381 : vector<1x256xf32> to vector<4x256xf32>
    %384 = arith.mulf %382, %383 : vector<4x256xf32>
    %385 = arith.addf %379, %384 : vector<4x256xf32>
    %386 = vector.extract_strided_slice %367 {offsets = [0, 3], sizes = [4, 1], strides = [1, 1]} : vector<4x4xf32> to vector<4x1xf32>
    %387 = vector.extract_strided_slice %365 {offsets = [3, 0], sizes = [1, 256], strides = [1, 1]} : vector<4x256xf32> to vector<1x256xf32>
    %388 = vector.broadcast %386 : vector<4x1xf32> to vector<4x256xf32>
    %389 = vector.broadcast %387 : vector<1x256xf32> to vector<4x256xf32>
    %390 = arith.mulf %388, %389 : vector<4x256xf32>
    %391 = arith.addf %385, %390 : vector<4x256xf32>
    %c0_66 = arith.constant 0 : index
    %c127_67 = arith.constant 127 : index
    %392 = vector.load %arg16[%c0_66, %c127_67] : memref<4x512xf32, #tpu.memory_space<vmem>>, vector<4x256xf32>
    %393 = vector.broadcast %8 : vector<1x256xf32> to vector<4x256xf32>
    %394 = arith.mulf %392, %393 : vector<4x256xf32>
    %c3_68 = arith.constant 3 : index
    %c0_69 = arith.constant 0 : index
    %c0_70 = arith.constant 0 : index
    %395 = vector.load %arg7[%c3_68, %c0_69, %c0_70] : memref<9x4x4xf32, #tpu.memory_space<vmem>>, vector<1x4x4xf32>
    %396 = vector.shape_cast %395 : vector<1x4x4xf32> to vector<4x4xf32>
    %397 = vector.extract_strided_slice %396 {offsets = [0, 0], sizes = [4, 1], strides = [1, 1]} : vector<4x4xf32> to vector<4x1xf32>
    %398 = vector.extract_strided_slice %394 {offsets = [0, 0], sizes = [1, 256], strides = [1, 1]} : vector<4x256xf32> to vector<1x256xf32>
    %399 = vector.broadcast %397 : vector<4x1xf32> to vector<4x256xf32>
    %400 = vector.broadcast %398 : vector<1x256xf32> to vector<4x256xf32>
    %401 = arith.mulf %399, %400 : vector<4x256xf32>
    %402 = arith.addf %391, %401 : vector<4x256xf32>
    %403 = vector.extract_strided_slice %396 {offsets = [0, 1], sizes = [4, 1], strides = [1, 1]} : vector<4x4xf32> to vector<4x1xf32>
    %404 = vector.extract_strided_slice %394 {offsets = [1, 0], sizes = [1, 256], strides = [1, 1]} : vector<4x256xf32> to vector<1x256xf32>
    %405 = vector.broadcast %403 : vector<4x1xf32> to vector<4x256xf32>
    %406 = vector.broadcast %404 : vector<1x256xf32> to vector<4x256xf32>
    %407 = arith.mulf %405, %406 : vector<4x256xf32>
    %408 = arith.addf %402, %407 : vector<4x256xf32>
    %409 = vector.extract_strided_slice %396 {offsets = [0, 2], sizes = [4, 1], strides = [1, 1]} : vector<4x4xf32> to vector<4x1xf32>
    %410 = vector.extract_strided_slice %394 {offsets = [2, 0], sizes = [1, 256], strides = [1, 1]} : vector<4x256xf32> to vector<1x256xf32>
    %411 = vector.broadcast %409 : vector<4x1xf32> to vector<4x256xf32>
    %412 = vector.broadcast %410 : vector<1x256xf32> to vector<4x256xf32>
    %413 = arith.mulf %411, %412 : vector<4x256xf32>
    %414 = arith.addf %408, %413 : vector<4x256xf32>
    %415 = vector.extract_strided_slice %396 {offsets = [0, 3], sizes = [4, 1], strides = [1, 1]} : vector<4x4xf32> to vector<4x1xf32>
    %416 = vector.extract_strided_slice %394 {offsets = [3, 0], sizes = [1, 256], strides = [1, 1]} : vector<4x256xf32> to vector<1x256xf32>
    %417 = vector.broadcast %415 : vector<4x1xf32> to vector<4x256xf32>
    %418 = vector.broadcast %416 : vector<1x256xf32> to vector<4x256xf32>
    %419 = arith.mulf %417, %418 : vector<4x256xf32>
    %420 = arith.addf %414, %419 : vector<4x256xf32>
    %c0_71 = arith.constant 0 : index
    %c128_72 = arith.constant 128 : index
    %421 = vector.load %arg16[%c0_71, %c128_72] : memref<4x512xf32, #tpu.memory_space<vmem>>, vector<4x256xf32>
    %c4_73 = arith.constant 4 : index
    %c0_74 = arith.constant 0 : index
    %c0_75 = arith.constant 0 : index
    %422 = vector.load %arg7[%c4_73, %c0_74, %c0_75] : memref<9x4x4xf32, #tpu.memory_space<vmem>>, vector<1x4x4xf32>
    %423 = vector.shape_cast %422 : vector<1x4x4xf32> to vector<4x4xf32>
    %424 = vector.extract_strided_slice %423 {offsets = [0, 0], sizes = [4, 1], strides = [1, 1]} : vector<4x4xf32> to vector<4x1xf32>
    %425 = vector.extract_strided_slice %421 {offsets = [0, 0], sizes = [1, 256], strides = [1, 1]} : vector<4x256xf32> to vector<1x256xf32>
    %426 = vector.broadcast %424 : vector<4x1xf32> to vector<4x256xf32>
    %427 = vector.broadcast %425 : vector<1x256xf32> to vector<4x256xf32>
    %428 = arith.mulf %426, %427 : vector<4x256xf32>
    %429 = arith.addf %420, %428 : vector<4x256xf32>
    %430 = vector.extract_strided_slice %423 {offsets = [0, 1], sizes = [4, 1], strides = [1, 1]} : vector<4x4xf32> to vector<4x1xf32>
    %431 = vector.extract_strided_slice %421 {offsets = [1, 0], sizes = [1, 256], strides = [1, 1]} : vector<4x256xf32> to vector<1x256xf32>
    %432 = vector.broadcast %430 : vector<4x1xf32> to vector<4x256xf32>
    %433 = vector.broadcast %431 : vector<1x256xf32> to vector<4x256xf32>
    %434 = arith.mulf %432, %433 : vector<4x256xf32>
    %435 = arith.addf %429, %434 : vector<4x256xf32>
    %436 = vector.extract_strided_slice %423 {offsets = [0, 2], sizes = [4, 1], strides = [1, 1]} : vector<4x4xf32> to vector<4x1xf32>
    %437 = vector.extract_strided_slice %421 {offsets = [2, 0], sizes = [1, 256], strides = [1, 1]} : vector<4x256xf32> to vector<1x256xf32>
    %438 = vector.broadcast %436 : vector<4x1xf32> to vector<4x256xf32>
    %439 = vector.broadcast %437 : vector<1x256xf32> to vector<4x256xf32>
    %440 = arith.mulf %438, %439 : vector<4x256xf32>
    %441 = arith.addf %435, %440 : vector<4x256xf32>
    %442 = vector.extract_strided_slice %423 {offsets = [0, 3], sizes = [4, 1], strides = [1, 1]} : vector<4x4xf32> to vector<4x1xf32>
    %443 = vector.extract_strided_slice %421 {offsets = [3, 0], sizes = [1, 256], strides = [1, 1]} : vector<4x256xf32> to vector<1x256xf32>
    %444 = vector.broadcast %442 : vector<4x1xf32> to vector<4x256xf32>
    %445 = vector.broadcast %443 : vector<1x256xf32> to vector<4x256xf32>
    %446 = arith.mulf %444, %445 : vector<4x256xf32>
    %447 = arith.addf %441, %446 : vector<4x256xf32>
    %c0_76 = arith.constant 0 : index
    %c129_77 = arith.constant 129 : index
    %448 = vector.load %arg16[%c0_76, %c129_77] : memref<4x512xf32, #tpu.memory_space<vmem>>, vector<4x256xf32>
    %449 = vector.broadcast %12 : vector<1x256xf32> to vector<4x256xf32>
    %450 = arith.mulf %448, %449 : vector<4x256xf32>
    %c5_78 = arith.constant 5 : index
    %c0_79 = arith.constant 0 : index
    %c0_80 = arith.constant 0 : index
    %451 = vector.load %arg7[%c5_78, %c0_79, %c0_80] : memref<9x4x4xf32, #tpu.memory_space<vmem>>, vector<1x4x4xf32>
    %452 = vector.shape_cast %451 : vector<1x4x4xf32> to vector<4x4xf32>
    %453 = vector.extract_strided_slice %452 {offsets = [0, 0], sizes = [4, 1], strides = [1, 1]} : vector<4x4xf32> to vector<4x1xf32>
    %454 = vector.extract_strided_slice %450 {offsets = [0, 0], sizes = [1, 256], strides = [1, 1]} : vector<4x256xf32> to vector<1x256xf32>
    %455 = vector.broadcast %453 : vector<4x1xf32> to vector<4x256xf32>
    %456 = vector.broadcast %454 : vector<1x256xf32> to vector<4x256xf32>
    %457 = arith.mulf %455, %456 : vector<4x256xf32>
    %458 = arith.addf %447, %457 : vector<4x256xf32>
    %459 = vector.extract_strided_slice %452 {offsets = [0, 1], sizes = [4, 1], strides = [1, 1]} : vector<4x4xf32> to vector<4x1xf32>
    %460 = vector.extract_strided_slice %450 {offsets = [1, 0], sizes = [1, 256], strides = [1, 1]} : vector<4x256xf32> to vector<1x256xf32>
    %461 = vector.broadcast %459 : vector<4x1xf32> to vector<4x256xf32>
    %462 = vector.broadcast %460 : vector<1x256xf32> to vector<4x256xf32>
    %463 = arith.mulf %461, %462 : vector<4x256xf32>
    %464 = arith.addf %458, %463 : vector<4x256xf32>
    %465 = vector.extract_strided_slice %452 {offsets = [0, 2], sizes = [4, 1], strides = [1, 1]} : vector<4x4xf32> to vector<4x1xf32>
    %466 = vector.extract_strided_slice %450 {offsets = [2, 0], sizes = [1, 256], strides = [1, 1]} : vector<4x256xf32> to vector<1x256xf32>
    %467 = vector.broadcast %465 : vector<4x1xf32> to vector<4x256xf32>
    %468 = vector.broadcast %466 : vector<1x256xf32> to vector<4x256xf32>
    %469 = arith.mulf %467, %468 : vector<4x256xf32>
    %470 = arith.addf %464, %469 : vector<4x256xf32>
    %471 = vector.extract_strided_slice %452 {offsets = [0, 3], sizes = [4, 1], strides = [1, 1]} : vector<4x4xf32> to vector<4x1xf32>
    %472 = vector.extract_strided_slice %450 {offsets = [3, 0], sizes = [1, 256], strides = [1, 1]} : vector<4x256xf32> to vector<1x256xf32>
    %473 = vector.broadcast %471 : vector<4x1xf32> to vector<4x256xf32>
    %474 = vector.broadcast %472 : vector<1x256xf32> to vector<4x256xf32>
    %475 = arith.mulf %473, %474 : vector<4x256xf32>
    %476 = arith.addf %470, %475 : vector<4x256xf32>
    %c0_81 = arith.constant 0 : index
    %c143_82 = arith.constant 143 : index
    %477 = vector.load %arg16[%c0_81, %c143_82] : memref<4x512xf32, #tpu.memory_space<vmem>>, vector<4x256xf32>
    %478 = vector.broadcast %8 : vector<1x256xf32> to vector<4x256xf32>
    %479 = arith.mulf %477, %478 : vector<4x256xf32>
    %c6_83 = arith.constant 6 : index
    %c0_84 = arith.constant 0 : index
    %c0_85 = arith.constant 0 : index
    %480 = vector.load %arg7[%c6_83, %c0_84, %c0_85] : memref<9x4x4xf32, #tpu.memory_space<vmem>>, vector<1x4x4xf32>
    %481 = vector.shape_cast %480 : vector<1x4x4xf32> to vector<4x4xf32>
    %482 = vector.extract_strided_slice %481 {offsets = [0, 0], sizes = [4, 1], strides = [1, 1]} : vector<4x4xf32> to vector<4x1xf32>
    %483 = vector.extract_strided_slice %479 {offsets = [0, 0], sizes = [1, 256], strides = [1, 1]} : vector<4x256xf32> to vector<1x256xf32>
    %484 = vector.broadcast %482 : vector<4x1xf32> to vector<4x256xf32>
    %485 = vector.broadcast %483 : vector<1x256xf32> to vector<4x256xf32>
    %486 = arith.mulf %484, %485 : vector<4x256xf32>
    %487 = arith.addf %476, %486 : vector<4x256xf32>
    %488 = vector.extract_strided_slice %481 {offsets = [0, 1], sizes = [4, 1], strides = [1, 1]} : vector<4x4xf32> to vector<4x1xf32>
    %489 = vector.extract_strided_slice %479 {offsets = [1, 0], sizes = [1, 256], strides = [1, 1]} : vector<4x256xf32> to vector<1x256xf32>
    %490 = vector.broadcast %488 : vector<4x1xf32> to vector<4x256xf32>
    %491 = vector.broadcast %489 : vector<1x256xf32> to vector<4x256xf32>
    %492 = arith.mulf %490, %491 : vector<4x256xf32>
    %493 = arith.addf %487, %492 : vector<4x256xf32>
    %494 = vector.extract_strided_slice %481 {offsets = [0, 2], sizes = [4, 1], strides = [1, 1]} : vector<4x4xf32> to vector<4x1xf32>
    %495 = vector.extract_strided_slice %479 {offsets = [2, 0], sizes = [1, 256], strides = [1, 1]} : vector<4x256xf32> to vector<1x256xf32>
    %496 = vector.broadcast %494 : vector<4x1xf32> to vector<4x256xf32>
    %497 = vector.broadcast %495 : vector<1x256xf32> to vector<4x256xf32>
    %498 = arith.mulf %496, %497 : vector<4x256xf32>
    %499 = arith.addf %493, %498 : vector<4x256xf32>
    %500 = vector.extract_strided_slice %481 {offsets = [0, 3], sizes = [4, 1], strides = [1, 1]} : vector<4x4xf32> to vector<4x1xf32>
    %501 = vector.extract_strided_slice %479 {offsets = [3, 0], sizes = [1, 256], strides = [1, 1]} : vector<4x256xf32> to vector<1x256xf32>
    %502 = vector.broadcast %500 : vector<4x1xf32> to vector<4x256xf32>
    %503 = vector.broadcast %501 : vector<1x256xf32> to vector<4x256xf32>
    %504 = arith.mulf %502, %503 : vector<4x256xf32>
    %505 = arith.addf %499, %504 : vector<4x256xf32>
    %c0_86 = arith.constant 0 : index
    %c144_87 = arith.constant 144 : index
    %506 = vector.load %arg16[%c0_86, %c144_87] : memref<4x512xf32, #tpu.memory_space<vmem>>, vector<4x256xf32>
    %c7_88 = arith.constant 7 : index
    %c0_89 = arith.constant 0 : index
    %c0_90 = arith.constant 0 : index
    %507 = vector.load %arg7[%c7_88, %c0_89, %c0_90] : memref<9x4x4xf32, #tpu.memory_space<vmem>>, vector<1x4x4xf32>
    %508 = vector.shape_cast %507 : vector<1x4x4xf32> to vector<4x4xf32>
    %509 = vector.extract_strided_slice %508 {offsets = [0, 0], sizes = [4, 1], strides = [1, 1]} : vector<4x4xf32> to vector<4x1xf32>
    %510 = vector.extract_strided_slice %506 {offsets = [0, 0], sizes = [1, 256], strides = [1, 1]} : vector<4x256xf32> to vector<1x256xf32>
    %511 = vector.broadcast %509 : vector<4x1xf32> to vector<4x256xf32>
    %512 = vector.broadcast %510 : vector<1x256xf32> to vector<4x256xf32>
    %513 = arith.mulf %511, %512 : vector<4x256xf32>
    %514 = arith.addf %505, %513 : vector<4x256xf32>
    %515 = vector.extract_strided_slice %508 {offsets = [0, 1], sizes = [4, 1], strides = [1, 1]} : vector<4x4xf32> to vector<4x1xf32>
    %516 = vector.extract_strided_slice %506 {offsets = [1, 0], sizes = [1, 256], strides = [1, 1]} : vector<4x256xf32> to vector<1x256xf32>
    %517 = vector.broadcast %515 : vector<4x1xf32> to vector<4x256xf32>
    %518 = vector.broadcast %516 : vector<1x256xf32> to vector<4x256xf32>
    %519 = arith.mulf %517, %518 : vector<4x256xf32>
    %520 = arith.addf %514, %519 : vector<4x256xf32>
    %521 = vector.extract_strided_slice %508 {offsets = [0, 2], sizes = [4, 1], strides = [1, 1]} : vector<4x4xf32> to vector<4x1xf32>
    %522 = vector.extract_strided_slice %506 {offsets = [2, 0], sizes = [1, 256], strides = [1, 1]} : vector<4x256xf32> to vector<1x256xf32>
    %523 = vector.broadcast %521 : vector<4x1xf32> to vector<4x256xf32>
    %524 = vector.broadcast %522 : vector<1x256xf32> to vector<4x256xf32>
    %525 = arith.mulf %523, %524 : vector<4x256xf32>
    %526 = arith.addf %520, %525 : vector<4x256xf32>
    %527 = vector.extract_strided_slice %508 {offsets = [0, 3], sizes = [4, 1], strides = [1, 1]} : vector<4x4xf32> to vector<4x1xf32>
    %528 = vector.extract_strided_slice %506 {offsets = [3, 0], sizes = [1, 256], strides = [1, 1]} : vector<4x256xf32> to vector<1x256xf32>
    %529 = vector.broadcast %527 : vector<4x1xf32> to vector<4x256xf32>
    %530 = vector.broadcast %528 : vector<1x256xf32> to vector<4x256xf32>
    %531 = arith.mulf %529, %530 : vector<4x256xf32>
    %532 = arith.addf %526, %531 : vector<4x256xf32>
    %c0_91 = arith.constant 0 : index
    %c145_92 = arith.constant 145 : index
    %533 = vector.load %arg16[%c0_91, %c145_92] : memref<4x512xf32, #tpu.memory_space<vmem>>, vector<4x256xf32>
    %534 = vector.broadcast %12 : vector<1x256xf32> to vector<4x256xf32>
    %535 = arith.mulf %533, %534 : vector<4x256xf32>
    %c8_93 = arith.constant 8 : index
    %c0_94 = arith.constant 0 : index
    %c0_95 = arith.constant 0 : index
    %536 = vector.load %arg7[%c8_93, %c0_94, %c0_95] : memref<9x4x4xf32, #tpu.memory_space<vmem>>, vector<1x4x4xf32>
    %537 = vector.shape_cast %536 : vector<1x4x4xf32> to vector<4x4xf32>
    %538 = vector.extract_strided_slice %537 {offsets = [0, 0], sizes = [4, 1], strides = [1, 1]} : vector<4x4xf32> to vector<4x1xf32>
    %539 = vector.extract_strided_slice %535 {offsets = [0, 0], sizes = [1, 256], strides = [1, 1]} : vector<4x256xf32> to vector<1x256xf32>
    %540 = vector.broadcast %538 : vector<4x1xf32> to vector<4x256xf32>
    %541 = vector.broadcast %539 : vector<1x256xf32> to vector<4x256xf32>
    %542 = arith.mulf %540, %541 : vector<4x256xf32>
    %543 = arith.addf %532, %542 : vector<4x256xf32>
    %544 = vector.extract_strided_slice %537 {offsets = [0, 1], sizes = [4, 1], strides = [1, 1]} : vector<4x4xf32> to vector<4x1xf32>
    %545 = vector.extract_strided_slice %535 {offsets = [1, 0], sizes = [1, 256], strides = [1, 1]} : vector<4x256xf32> to vector<1x256xf32>
    %546 = vector.broadcast %544 : vector<4x1xf32> to vector<4x256xf32>
    %547 = vector.broadcast %545 : vector<1x256xf32> to vector<4x256xf32>
    %548 = arith.mulf %546, %547 : vector<4x256xf32>
    %549 = arith.addf %543, %548 : vector<4x256xf32>
    %550 = vector.extract_strided_slice %537 {offsets = [0, 2], sizes = [4, 1], strides = [1, 1]} : vector<4x4xf32> to vector<4x1xf32>
    %551 = vector.extract_strided_slice %535 {offsets = [2, 0], sizes = [1, 256], strides = [1, 1]} : vector<4x256xf32> to vector<1x256xf32>
    %552 = vector.broadcast %550 : vector<4x1xf32> to vector<4x256xf32>
    %553 = vector.broadcast %551 : vector<1x256xf32> to vector<4x256xf32>
    %554 = arith.mulf %552, %553 : vector<4x256xf32>
    %555 = arith.addf %549, %554 : vector<4x256xf32>
    %556 = vector.extract_strided_slice %537 {offsets = [0, 3], sizes = [4, 1], strides = [1, 1]} : vector<4x4xf32> to vector<4x1xf32>
    %557 = vector.extract_strided_slice %535 {offsets = [3, 0], sizes = [1, 256], strides = [1, 1]} : vector<4x256xf32> to vector<1x256xf32>
    %558 = vector.broadcast %556 : vector<4x1xf32> to vector<4x256xf32>
    %559 = vector.broadcast %557 : vector<1x256xf32> to vector<4x256xf32>
    %560 = arith.mulf %558, %559 : vector<4x256xf32>
    %561 = arith.addf %555, %560 : vector<4x256xf32>
    %c0_96 = arith.constant 0 : index
    %c0_97 = arith.constant 0 : index
    %562 = vector.load %arg8[%c0_96, %c0_97] : memref<4x1xf32, #tpu.memory_space<vmem>>, vector<4x1xf32>
    %563 = vector.broadcast %562 : vector<4x1xf32> to vector<4x256xf32>
    %564 = arith.addf %561, %563 : vector<4x256xf32>
    %565 = vector.shape_cast %564 : vector<4x256xf32> to vector<1x4x256xf32>
    %cst_98 = arith.constant dense<0.000000e+00> : vector<1xf32>
    %566 = vector.multi_reduction <add>, %565, %cst_98 [1, 2] : vector<1x4x256xf32> to vector<1xf32>
    %567 = vector.shape_cast %566 : vector<1xf32> to vector<1x1x1xf32>
    %568 = vector.extract %567[0, 0, 0] : f32 from vector<1x1x1xf32>
    %569 = vector.broadcast %568 : f32 to vector<1x1xf32>
    %cst_99 = arith.constant 1.024000e+03 : f32
    %570 = vector.broadcast %cst_99 : f32 to vector<1x1xf32>
    %571 = arith.divf %569, %570 : vector<1x1xf32>
    %572 = vector.broadcast %571 : vector<1x1xf32> to vector<4x256xf32>
    %573 = arith.subf %564, %572 : vector<4x256xf32>
    %574 = arith.mulf %573, %573 : vector<4x256xf32>
    %575 = vector.shape_cast %574 : vector<4x256xf32> to vector<1x4x256xf32>
    %cst_100 = arith.constant dense<0.000000e+00> : vector<1xf32>
    %576 = vector.multi_reduction <add>, %575, %cst_100 [1, 2] : vector<1x4x256xf32> to vector<1xf32>
    %577 = vector.shape_cast %576 : vector<1xf32> to vector<1x1x1xf32>
    %578 = vector.extract %577[0, 0, 0] : f32 from vector<1x1x1xf32>
    %579 = vector.broadcast %578 : f32 to vector<1x1xf32>
    %cst_101 = arith.constant 1.024000e+03 : f32
    %580 = vector.broadcast %cst_101 : f32 to vector<1x1xf32>
    %581 = arith.divf %579, %580 : vector<1x1xf32>
    %582 = vector.broadcast %571 : vector<1x1xf32> to vector<4x256xf32>
    %583 = arith.subf %564, %582 : vector<4x256xf32>
    %cst_102 = arith.constant 9.99999974E-6 : f32
    %584 = vector.broadcast %cst_102 : f32 to vector<1x1xf32>
    %585 = arith.addf %581, %584 : vector<1x1xf32>
    %586 = math.rsqrt %585 : vector<1x1xf32>
    %587 = vector.broadcast %586 : vector<1x1xf32> to vector<4x256xf32>
    %588 = arith.mulf %583, %587 : vector<4x256xf32>
    %c0_103 = arith.constant 0 : index
    %c0_104 = arith.constant 0 : index
    %589 = vector.load %arg9[%c0_103, %c0_104] : memref<4x256xf32, #tpu.memory_space<vmem>>, vector<4x256xf32>
    %590 = arith.mulf %588, %589 : vector<4x256xf32>
    %c0_105 = arith.constant 0 : index
    %c0_106 = arith.constant 0 : index
    %591 = vector.load %arg10[%c0_105, %c0_106] : memref<4x256xf32, #tpu.memory_space<vmem>>, vector<4x256xf32>
    %592 = arith.addf %590, %591 : vector<4x256xf32>
    %c0_107 = arith.constant 0 : index
    %c0_108 = arith.constant 0 : index
    %c0_109 = arith.constant 0 : index
    %593 = vector.load %arg2[%c0_107, %c0_108, %c0_109] : memref<1x1x32xf32, #tpu.memory_space<vmem>>, vector<1x1x32xf32>
    %594 = vector.shape_cast %593 : vector<1x1x32xf32> to vector<1x32xf32>
    %c0_110 = arith.constant 0 : index
    %c0_111 = arith.constant 0 : index
    %595 = vector.load %arg11[%c0_110, %c0_111] : memref<4x32xf32, #tpu.memory_space<vmem>>, vector<4x32xf32>
    %596 = vector.broadcast %594 : vector<1x32xf32> to vector<4x32xf32>
    %597 = arith.mulf %595, %596 : vector<4x32xf32>
    %cst_112 = arith.constant dense<0.000000e+00> : vector<4xf32>
    %598 = vector.multi_reduction <add>, %597, %cst_112 [1] : vector<4x32xf32> to vector<4xf32>
    %599 = vector.shape_cast %598 : vector<4xf32> to vector<4x1xf32>
    %c0_113 = arith.constant 0 : index
    %c0_114 = arith.constant 0 : index
    %600 = vector.load %arg12[%c0_113, %c0_114] : memref<4x1xf32, #tpu.memory_space<vmem>>, vector<4x1xf32>
    %601 = arith.addf %599, %600 : vector<4x1xf32>
    %c0_115 = arith.constant 0 : index
    %c0_116 = arith.constant 0 : index
    %602 = vector.load %arg13[%c0_115, %c0_116] : memref<4x32xf32, #tpu.memory_space<vmem>>, vector<4x32xf32>
    %603 = vector.broadcast %594 : vector<1x32xf32> to vector<4x32xf32>
    %604 = arith.mulf %602, %603 : vector<4x32xf32>
    %cst_117 = arith.constant dense<0.000000e+00> : vector<4xf32>
    %605 = vector.multi_reduction <add>, %604, %cst_117 [1] : vector<4x32xf32> to vector<4xf32>
    %606 = vector.shape_cast %605 : vector<4xf32> to vector<4x1xf32>
    %c0_118 = arith.constant 0 : index
    %c0_119 = arith.constant 0 : index
    %607 = vector.load %arg14[%c0_118, %c0_119] : memref<4x1xf32, #tpu.memory_space<vmem>>, vector<4x1xf32>
    %608 = arith.addf %606, %607 : vector<4x1xf32>
    %609 = vector.broadcast %601 : vector<4x1xf32> to vector<4x256xf32>
    %610 = arith.mulf %609, %592 : vector<4x256xf32>
    %611 = vector.broadcast %608 : vector<4x1xf32> to vector<4x256xf32>
    %612 = arith.addf %610, %611 : vector<4x256xf32>
    %cst_120 = arith.constant 0.000000e+00 : f32
    %613 = vector.broadcast %cst_120 : f32 to vector<4x256xf32>
    %614 = arith.maximumf %612, %613 : vector<4x256xf32>
    %615 = arith.addf %614, %1 : vector<4x256xf32>
    %c0_121 = arith.constant 0 : index
    %c0_122 = arith.constant 0 : index
    %c0_123 = arith.constant 0 : index
    %616 = vector.load %arg15[%c0_121, %c0_122, %c0_123] : memref<1x4x256xf32, #tpu.memory_space<vmem>>, vector<1x4x256xf32>
    %617 = vector.shape_cast %616 : vector<1x4x256xf32> to vector<4x256xf32>
    %618 = vector.shape_cast %615 : vector<4x256xf32> to vector<1x4x256xf32>
    tpu.vector_store %arg15[%c0_121, %c0_122, %c0_123], %618 {strides = array<i32>} : memref<1x4x256xf32, #tpu.memory_space<vmem>>, vector<1x4x256xf32>,
    return
  }
  func.func @transform_0(%arg0: i32) -> (i32, i32, i32) {
    %c0_i32 = arith.constant 0 : i32
    %c0_i32_0 = arith.constant 0 : i32
    %c0_i32_1 = arith.constant 0 : i32
    return %arg0, %c0_i32, %c0_i32_0 : i32, i32, i32
  }
  func.func @transform_1(%arg0: i32) -> (i32, i32, i32) {
    %c0_i32 = arith.constant 0 : i32
    %c0_i32_0 = arith.constant 0 : i32
    %c0_i32_1 = arith.constant 0 : i32
    return %arg0, %c0_i32, %c0_i32_0 : i32, i32, i32
  }
  func.func @transform_2(%arg0: i32) -> (i32, i32) {
    %c0_i32 = arith.constant 0 : i32
    %c0_i32_0 = arith.constant 0 : i32
    %c0_i32_1 = arith.constant 0 : i32
    return %c0_i32, %c0_i32_0 : i32, i32
  }
  func.func @transform_3(%arg0: i32) -> (i32, i32) {
    %c0_i32 = arith.constant 0 : i32
    %c0_i32_0 = arith.constant 0 : i32
    %c0_i32_1 = arith.constant 0 : i32
    return %c0_i32, %c0_i32_0 : i32, i32
  }
  func.func @transform_4(%arg0: i32) -> (i32, i32, i32) {
    %c0_i32 = arith.constant 0 : i32
    %c0_i32_0 = arith.constant 0 : i32
    %c0_i32_1 = arith.constant 0 : i32
    %c0_i32_2 = arith.constant 0 : i32
    return %c0_i32, %c0_i32_0, %c0_i32_1 : i32, i32, i32
  }
  func.func @transform_5(%arg0: i32) -> (i32, i32) {
    %c0_i32 = arith.constant 0 : i32
    %c0_i32_0 = arith.constant 0 : i32
    %c0_i32_1 = arith.constant 0 : i32
    return %c0_i32, %c0_i32_0 : i32, i32
  }
  func.func @transform_6(%arg0: i32) -> (i32, i32, i32) {
    %c0_i32 = arith.constant 0 : i32
    %c0_i32_0 = arith.constant 0 : i32
    %c0_i32_1 = arith.constant 0 : i32
    %c0_i32_2 = arith.constant 0 : i32
    return %c0_i32, %c0_i32_0, %c0_i32_1 : i32, i32, i32
  }
  func.func @transform_7(%arg0: i32) -> (i32, i32) {
    %c0_i32 = arith.constant 0 : i32
    %c0_i32_0 = arith.constant 0 : i32
    %c0_i32_1 = arith.constant 0 : i32
    return %c0_i32, %c0_i32_0 : i32, i32
  }
  func.func @transform_8(%arg0: i32) -> (i32, i32) {
    %c0_i32 = arith.constant 0 : i32
    %c0_i32_0 = arith.constant 0 : i32
    %c0_i32_1 = arith.constant 0 : i32
    return %c0_i32, %c0_i32_0 : i32, i32
  }
  func.func @transform_9(%arg0: i32) -> (i32, i32) {
    %c0_i32 = arith.constant 0 : i32
    %c0_i32_0 = arith.constant 0 : i32
    %c0_i32_1 = arith.constant 0 : i32
    return %c0_i32, %c0_i32_0 : i32, i32
  }
  func.func @transform_10(%arg0: i32) -> (i32, i32) {
    %c0_i32 = arith.constant 0 : i32
    %c0_i32_0 = arith.constant 0 : i32
    %c0_i32_1 = arith.constant 0 : i32
    return %c0_i32, %c0_i32_0 : i32, i32
  }
  func.func @transform_11(%arg0: i32) -> (i32, i32) {
    %c0_i32 = arith.constant 0 : i32
    %c0_i32_0 = arith.constant 0 : i32
    %c0_i32_1 = arith.constant 0 : i32
    return %c0_i32, %c0_i32_0 : i32, i32
  }
  func.func @transform_12(%arg0: i32) -> (i32, i32) {
    %c0_i32 = arith.constant 0 : i32
    %c0_i32_0 = arith.constant 0 : i32
    %c0_i32_1 = arith.constant 0 : i32
    return %c0_i32, %c0_i32_0 : i32, i32
  }
  func.func @transform_13(%arg0: i32) -> (i32, i32) {
    %c0_i32 = arith.constant 0 : i32
    %c0_i32_0 = arith.constant 0 : i32
    %c0_i32_1 = arith.constant 0 : i32
    return %c0_i32, %c0_i32_0 : i32, i32
  }
  func.func @transform_14(%arg0: i32) -> (i32, i32, i32) {
    %c0_i32 = arith.constant 0 : i32
    %c0_i32_0 = arith.constant 0 : i32
    %c0_i32_1 = arith.constant 0 : i32
    return %arg0, %c0_i32, %c0_i32_0 : i32, i32, i32
  }
}

</mosaic_0001>

<llo_original>
// kernel: tpu_custom_call.1
$region0: #{tpu_custom_call.1}
  #allocation0 [shape = 'u32[]', space=smem, size = 0x4, offset = 0x4, fixed_abs, tag = 'smem constant byte address 0x4 - core index']
  #allocation1 [shape = 'u32[144,128]{1,0:T(1,128)}', space=vmem, size = 0x12000, scoped, tag = 'internal scratch']
  #allocation2 [shape = 'f32[4,512]{1,0:T(4,128)}', space=vmem, size = 0x2000, scoped, tag = 'scratch operand']
  %s0 = inlined_call_operand.vmem [shape: f32[2,4,256], index: 0, kind: input, shape index: {}]
  %s1 = inlined_call_operand.vmem [shape: f32[2,1,32], index: 1, kind: input, shape index: {}]
  %s2 = inlined_call_operand.vmem [shape: f32[4,256], index: 2, kind: input, shape index: {}]
  %s3 = inlined_call_operand.vmem [shape: f32[4,256], index: 3, kind: input, shape index: {}]
  %s4 = inlined_call_operand.vmem [shape: f32[9,4,4], index: 4, kind: input, shape index: {}]
  %s5 = inlined_call_operand.vmem [shape: f32[4,1], index: 5, kind: input, shape index: {}]
  %s6 = inlined_call_operand.vmem [shape: f32[9,4,4], index: 6, kind: input, shape index: {}]
  %s7 = inlined_call_operand.vmem [shape: f32[4,1], index: 7, kind: input, shape index: {}]
  %s8 = inlined_call_operand.vmem [shape: f32[4,256], index: 8, kind: input, shape index: {}]
  %s9 = inlined_call_operand.vmem [shape: f32[4,256], index: 9, kind: input, shape index: {}]
  %s10 = inlined_call_operand.vmem [shape: f32[4,32], index: 10, kind: input, shape index: {}]
  %s11 = inlined_call_operand.vmem [shape: f32[4,1], index: 11, kind: input, shape index: {}]
  %s12 = inlined_call_operand.vmem [shape: f32[4,32], index: 12, kind: input, shape index: {}]
  %s13 = inlined_call_operand.vmem [shape: f32[4,1], index: 13, kind: input, shape index: {}]
  %s14 = inlined_call_operand.hbm [shape: f32[2,4,256], index: 14, kind: output, shape index: {}]
  %s15 = sld [smem:[#allocation0]]
  $region89: #{tpu_custom_call.1} parent=0
    _
  %s17 = ssub.s32 1, %s15
  %s18 = scalar_select 0, %s17, %s15
  $region1: #{tpu_custom_call.1} parent=0
    #allocation3 [shape = 'u8[8192]{0}', space=vmem, size = 0x2000, scoped, tag = 'output window, operand 0']
    #allocation4 [shape = 's32[2]{0}', space=sflag, size = 0x8, scoped, tag = 'scoped memory for tpu_custom_call.1']
    %19 = vsyncpa [#allocation4], 0
    %s20 = scalar_lea.sflag [#allocation4], 1
    %21 = vsyncpa %s20, 0
    loop: start=0, step=1, limit=4
    $region2: #{tpu_custom_call.1} parent=1 // loop_pre_header
      _
    $region3: #{tpu_custom_call.1} parent=1 // loop_header
      %s23 = sphi 0, %s27
      %p24 = scmp.ge.s32.totalorder %s23, 4
      %s33 = sphi 0, %s35
      %s36 = sphi 0, %s33
      %s37 = sphi 0, %s36
      %s53 = sphi 0, %s37
      %s59 = sphi 0, %s61
      %s62 = sphi 0, %s59
      %s63 = sphi 0, %s62
      %s79 = sphi 0, %s63
      %s83 = sphi 0, %s83
      %s85 = sphi 0, %s83
      %s86 = sphi 0, %s85
      %s100 = sphi 0, %s86
      %s104 = sphi 0, %s104
      %s106 = sphi 0, %s104
      %s107 = sphi 0, %s106
      %s121 = sphi 0, %s107
      %s125 = sphi 0, %s125
      %s127 = sphi 0, %s125
      %s128 = sphi 0, %s127
      %s142 = sphi 0, %s128
      %s146 = sphi 0, %s146
      %s148 = sphi 0, %s146
      %s149 = sphi 0, %s148
      %s163 = sphi 0, %s149
      %s167 = sphi 0, %s167
      %s169 = sphi 0, %s167
      %s170 = sphi 0, %s169
      %s184 = sphi 0, %s170
      %s188 = sphi 0, %s188
      %s190 = sphi 0, %s188
      %s191 = sphi 0, %s190
      %s205 = sphi 0, %s191
      %s209 = sphi 0, %s209
      %s211 = sphi 0, %s209
      %s212 = sphi 0, %s211
      %s226 = sphi 0, %s212
      %s230 = sphi 0, %s230
      %s232 = sphi 0, %s230
      %s233 = sphi 0, %s232
      %s247 = sphi 0, %s233
      %s251 = sphi 0, %s251
      %s253 = sphi 0, %s251
      %s254 = sphi 0, %s253
      %s268 = sphi 0, %s254
      %s272 = sphi 0, %s272
      %s274 = sphi 0, %s272
      %s275 = sphi 0, %s274
      %s289 = sphi 0, %s275
      %s293 = sphi 0, %s293
      %s295 = sphi 0, %s293
      %s296 = sphi 0, %s295
      %s310 = sphi 0, %s296
      %s314 = sphi 0, %s314
      %s316 = sphi 0, %s314
      %s317 = sphi 0, %s316
      %s331 = sphi 0, %s317
      %s337 = sphi 0, %s339
      %s340 = sphi 0, %s337
      %s341 = sphi 0, %s340
      %s357 = sphi 0, %s341
    $region4: #{tpu_custom_call.1} parent=1 // loop_header_branch
      %26 = sbr.rel (%p24) target = $region8
    $region5: #{tpu_custom_call.1} parent=1 // loop_body
      %s28 = ssub.s32 %s23, 1
      %s29 = ssub.s32 %s23, 2
      %s30 = sadd.s32 %s23, 1
      %s31 = ssub.s32 %s23, %s30
      %p32 = scmp.eq.s32.totalorder %s31, 0
      %s34 = sadd.s32 %s33, 1
      %s35 = scalar_select %p32, %s33, %s34
      %p38 = pneg %p32
      %p39 = scmp.eq.s32.totalorder %s23, 1
      %p40 = por %p38, %p39
      %p41 = scmp.ne.s32.totalorder %s33, %s36
      %p42 = scmp.eq.s32.totalorder %s23, 0
      %p43 = por %p41, %p42
      %p44 = scmp.ne.s32.totalorder %s33, %s36
      %p45 = scmp.eq.s32.totalorder %s28, 1
      %p46 = por %p44, %p45
      %p47 = scmp.ne.s32.totalorder %s36, %s37
      %p48 = scmp.eq.s32.totalorder %s28, 0
      %p49 = por %p47, %p48
      %p50 = scmp.ne.s32.totalorder %s36, %s37
      %p51 = scmp.eq.s32.totalorder %s29, 1
      %p52 = por %p50, %p51
      %p54 = scmp.ne.s32.totalorder %s37, %s53
      %p55 = scmp.eq.s32.totalorder %s29, 0
      %p56 = por %p54, %p55
      %s57 = ssub.s32 %s23, %s30
      %p58 = scmp.eq.s32.totalorder %s57, 0
      %s60 = sadd.s32 %s59, 1
      %s61 = scalar_select %p58, %s59, %s60
      %p64 = pneg %p58
      %p65 = scmp.eq.s32.totalorder %s23, 1
      %p66 = por %p64, %p65
      %p67 = scmp.ne.s32.totalorder %s59, %s62
      %p68 = scmp.eq.s32.totalorder %s23, 0
      %p69 = por %p67, %p68
      %p70 = scmp.ne.s32.totalorder %s59, %s62
      %p71 = scmp.eq.s32.totalorder %s28, 1
      %p72 = por %p70, %p71
      %p73 = scmp.ne.s32.totalorder %s62, %s63
      %p74 = scmp.eq.s32.totalorder %s28, 0
      %p75 = por %p73, %p74
      %p76 = scmp.ne.s32.totalorder %s62, %s63
      %p77 = scmp.eq.s32.totalorder %s29, 1
      %p78 = por %p76, %p77
      %p80 = scmp.ne.s32.totalorder %s63, %s79
      %p81 = scmp.eq.s32.totalorder %s29, 0
      %p82 = por %p80, %p81
      %s84 = sadd.s32 %s83, 1
      %p87 = scmp.eq.s32.totalorder %s23, 1
      %p88 = scmp.ne.s32.totalorder %s83, %s85
      %p89 = scmp.eq.s32.totalorder %s23, 0
      %p90 = por %p88, %p89
      %p91 = scmp.ne.s32.totalorder %s83, %s85
      %p92 = scmp.eq.s32.totalorder %s28, 1
      %p93 = por %p91, %p92
      %p94 = scmp.ne.s32.totalorder %s85, %s86
      %p95 = scmp.eq.s32.totalorder %s28, 0
      %p96 = por %p94, %p95
      %p97 = scmp.ne.s32.totalorder %s85, %s86
      %p98 = scmp.eq.s32.totalorder %s29, 1
      %p99 = por %p97, %p98
      %p101 = scmp.ne.s32.totalorder %s86, %s100
      %p102 = scmp.eq.s32.totalorder %s29, 0
      %p103 = por %p101, %p102
      %s105 = sadd.s32 %s104, 1
      %p108 = scmp.eq.s32.totalorder %s23, 1
      %p109 = scmp.ne.s32.totalorder %s104, %s106
      %p110 = scmp.eq.s32.totalorder %s23, 0
      %p111 = por %p109, %p110
      %p112 = scmp.ne.s32.totalorder %s104, %s106
      %p113 = scmp.eq.s32.totalorder %s28, 1
      %p114 = por %p112, %p113
      %p115 = scmp.ne.s32.totalorder %s106, %s107
      %p116 = scmp.eq.s32.totalorder %s28, 0
      %p117 = por %p115, %p116
      %p118 = scmp.ne.s32.totalorder %s106, %s107
      %p119 = scmp.eq.s32.totalorder %s29, 1
      %p120 = por %p118, %p119
      %p122 = scmp.ne.s32.totalorder %s107, %s121
      %p123 = scmp.eq.s32.totalorder %s29, 0
      %p124 = por %p122, %p123
      %s126 = sadd.s32 %s125, 1
      %p129 = scmp.eq.s32.totalorder %s23, 1
      %p130 = scmp.ne.s32.totalorder %s125, %s127
      %p131 = scmp.eq.s32.totalorder %s23, 0
      %p132 = por %p130, %p131
      %p133 = scmp.ne.s32.totalorder %s125, %s127
      %p134 = scmp.eq.s32.totalorder %s28, 1
      %p135 = por %p133, %p134
      %p136 = scmp.ne.s32.totalorder %s127, %s128
      %p137 = scmp.eq.s32.totalorder %s28, 0
      %p138 = por %p136, %p137
      %p139 = scmp.ne.s32.totalorder %s127, %s128
      %p140 = scmp.eq.s32.totalorder %s29, 1
      %p141 = por %p139, %p140
      %p143 = scmp.ne.s32.totalorder %s128, %s142
      %p144 = scmp.eq.s32.totalorder %s29, 0
      %p145 = por %p143, %p144
      %s147 = sadd.s32 %s146, 1
      %p150 = scmp.eq.s32.totalorder %s23, 1
      %p151 = scmp.ne.s32.totalorder %s146, %s148
      %p152 = scmp.eq.s32.totalorder %s23, 0
      %p153 = por %p151, %p152
      %p154 = scmp.ne.s32.totalorder %s146, %s148
      %p155 = scmp.eq.s32.totalorder %s28, 1
      %p156 = por %p154, %p155
      %p157 = scmp.ne.s32.totalorder %s148, %s149
      %p158 = scmp.eq.s32.totalorder %s28, 0
      %p159 = por %p157, %p158
      %p160 = scmp.ne.s32.totalorder %s148, %s149
      %p161 = scmp.eq.s32.totalorder %s29, 1
      %p162 = por %p160, %p161
      %p164 = scmp.ne.s32.totalorder %s149, %s163
      %p165 = scmp.eq.s32.totalorder %s29, 0
      %p166 = por %p164, %p165
      %s168 = sadd.s32 %s167, 1
      %p171 = scmp.eq.s32.totalorder %s23, 1
      %p172 = scmp.ne.s32.totalorder %s167, %s169
      %p173 = scmp.eq.s32.totalorder %s23, 0
      %p174 = por %p172, %p173
      %p175 = scmp.ne.s32.totalorder %s167, %s169
      %p176 = scmp.eq.s32.totalorder %s28, 1
      %p177 = por %p175, %p176
      %p178 = scmp.ne.s32.totalorder %s169, %s170
      %p179 = scmp.eq.s32.totalorder %s28, 0
      %p180 = por %p178, %p179
      %p181 = scmp.ne.s32.totalorder %s169, %s170
      %p182 = scmp.eq.s32.totalorder %s29, 1
      %p183 = por %p181, %p182
      %p185 = scmp.ne.s32.totalorder %s170, %s184
      %p186 = scmp.eq.s32.totalorder %s29, 0
      %p187 = por %p185, %p186
      %s189 = sadd.s32 %s188, 1
      %p192 = scmp.eq.s32.totalorder %s23, 1
      %p193 = scmp.ne.s32.totalorder %s188, %s190
      %p194 = scmp.eq.s32.totalorder %s23, 0
      %p195 = por %p193, %p194
      %p196 = scmp.ne.s32.totalorder %s188, %s190
      %p197 = scmp.eq.s32.totalorder %s28, 1
      %p198 = por %p196, %p197
      %p199 = scmp.ne.s32.totalorder %s190, %s191
      %p200 = scmp.eq.s32.totalorder %s28, 0
      %p201 = por %p199, %p200
      %p202 = scmp.ne.s32.totalorder %s190, %s191
      %p203 = scmp.eq.s32.totalorder %s29, 1
      %p204 = por %p202, %p203
      %p206 = scmp.ne.s32.totalorder %s191, %s205
      %p207 = scmp.eq.s32.totalorder %s29, 0
      %p208 = por %p206, %p207
      %s210 = sadd.s32 %s209, 1
      %p213 = scmp.eq.s32.totalorder %s23, 1
      %p214 = scmp.ne.s32.totalorder %s209, %s211
      %p215 = scmp.eq.s32.totalorder %s23, 0
      %p216 = por %p214, %p215
      %p217 = scmp.ne.s32.totalorder %s209, %s211
      %p218 = scmp.eq.s32.totalorder %s28, 1
      %p219 = por %p217, %p218
      %p220 = scmp.ne.s32.totalorder %s211, %s212
      %p221 = scmp.eq.s32.totalorder %s28, 0
      %p222 = por %p220, %p221
      %p223 = scmp.ne.s32.totalorder %s211, %s212
      %p224 = scmp.eq.s32.totalorder %s29, 1
      %p225 = por %p223, %p224
      %p227 = scmp.ne.s32.totalorder %s212, %s226
      %p228 = scmp.eq.s32.totalorder %s29, 0
      %p229 = por %p227, %p228
      %s231 = sadd.s32 %s230, 1
      %p234 = scmp.eq.s32.totalorder %s23, 1
      %p235 = scmp.ne.s32.totalorder %s230, %s232
      %p236 = scmp.eq.s32.totalorder %s23, 0
      %p237 = por %p235, %p236
      %p238 = scmp.ne.s32.totalorder %s230, %s232
      %p239 = scmp.eq.s32.totalorder %s28, 1
      %p240 = por %p238, %p239
      %p241 = scmp.ne.s32.totalorder %s232, %s233
      %p242 = scmp.eq.s32.totalorder %s28, 0
      %p243 = por %p241, %p242
      %p244 = scmp.ne.s32.totalorder %s232, %s233
      %p245 = scmp.eq.s32.totalorder %s29, 1
      %p246 = por %p244, %p245
      %p248 = scmp.ne.s32.totalorder %s233, %s247
      %p249 = scmp.eq.s32.totalorder %s29, 0
      %p250 = por %p248, %p249
      %s252 = sadd.s32 %s251, 1
      %p255 = scmp.eq.s32.totalorder %s23, 1
      %p256 = scmp.ne.s32.totalorder %s251, %s253
      %p257 = scmp.eq.s32.totalorder %s23, 0
      %p258 = por %p256, %p257
      %p259 = scmp.ne.s32.totalorder %s251, %s253
      %p260 = scmp.eq.s32.totalorder %s28, 1
      %p261 = por %p259, %p260
      %p262 = scmp.ne.s32.totalorder %s253, %s254
      %p263 = scmp.eq.s32.totalorder %s28, 0
      %p264 = por %p262, %p263
      %p265 = scmp.ne.s32.totalorder %s253, %s254
      %p266 = scmp.eq.s32.totalorder %s29, 1
      %p267 = por %p265, %p266
      %p269 = scmp.ne.s32.totalorder %s254, %s268
      %p270 = scmp.eq.s32.totalorder %s29, 0
      %p271 = por %p269, %p270
      %s273 = sadd.s32 %s272, 1
      %p276 = scmp.eq.s32.totalorder %s23, 1
      %p277 = scmp.ne.s32.totalorder %s272, %s274
      %p278 = scmp.eq.s32.totalorder %s23, 0
      %p279 = por %p277, %p278
      %p280 = scmp.ne.s32.totalorder %s272, %s274
      %p281 = scmp.eq.s32.totalorder %s28, 1
      %p282 = por %p280, %p281
      %p283 = scmp.ne.s32.totalorder %s274, %s275
      %p284 = scmp.eq.s32.totalorder %s28, 0
      %p285 = por %p283, %p284
      %p286 = scmp.ne.s32.totalorder %s274, %s275
      %p287 = scmp.eq.s32.totalorder %s29, 1
      %p288 = por %p286, %p287
      %p290 = scmp.ne.s32.totalorder %s275, %s289
      %p291 = scmp.eq.s32.totalorder %s29, 0
      %p292 = por %p290, %p291
      %s294 = sadd.s32 %s293, 1
      %p297 = scmp.eq.s32.totalorder %s23, 1
      %p298 = scmp.ne.s32.totalorder %s293, %s295
      %p299 = scmp.eq.s32.totalorder %s23, 0
      %p300 = por %p298, %p299
      %p301 = scmp.ne.s32.totalorder %s293, %s295
      %p302 = scmp.eq.s32.totalorder %s28, 1
      %p303 = por %p301, %p302
      %p304 = scmp.ne.s32.totalorder %s295, %s296
      %p305 = scmp.eq.s32.totalorder %s28, 0
      %p306 = por %p304, %p305
      %p307 = scmp.ne.s32.totalorder %s295, %s296
      %p308 = scmp.eq.s32.totalorder %s29, 1
      %p309 = por %p307, %p308
      %p311 = scmp.ne.s32.totalorder %s296, %s310
      %p312 = scmp.eq.s32.totalorder %s29, 0
      %p313 = por %p311, %p312
      %s315 = sadd.s32 %s314, 1
      %p318 = scmp.eq.s32.totalorder %s23, 1
      %p319 = scmp.ne.s32.totalorder %s314, %s316
      %p320 = scmp.eq.s32.totalorder %s23, 0
      %p321 = por %p319, %p320
      %p322 = scmp.ne.s32.totalorder %s314, %s316
      %p323 = scmp.eq.s32.totalorder %s28, 1
      %p324 = por %p322, %p323
      %p325 = scmp.ne.s32.totalorder %s316, %s317
      %p326 = scmp.eq.s32.totalorder %s28, 0
      %p327 = por %p325, %p326
      %p328 = scmp.ne.s32.totalorder %s316, %s317
      %p329 = scmp.eq.s32.totalorder %s29, 1
      %p330 = por %p328, %p329
      %p332 = scmp.ne.s32.totalorder %s317, %s331
      %p333 = scmp.eq.s32.totalorder %s29, 0
      %p334 = por %p332, %p333
      %s335 = ssub.s32 %s23, %s30
      %p336 = scmp.eq.s32.totalorder %s335, 0
      %s338 = sadd.s32 %s337, 1
      %s339 = scalar_select %p336, %s337, %s338
      %p342 = pneg %p336
      %p343 = scmp.eq.s32.totalorder %s23, 1
      %p344 = por %p342, %p343
      %p345 = scmp.ne.s32.totalorder %s337, %s340
      %p346 = scmp.eq.s32.totalorder %s23, 0
      %p347 = por %p345, %p346
      %p348 = scmp.ne.s32.totalorder %s337, %s340
      %p349 = scmp.eq.s32.totalorder %s28, 1
      %p350 = por %p348, %p349
      %p351 = scmp.ne.s32.totalorder %s340, %s341
      %p352 = scmp.eq.s32.totalorder %s28, 0
      %p353 = por %p351, %p352
      %p354 = scmp.ne.s32.totalorder %s340, %s341
      %p355 = scmp.eq.s32.totalorder %s29, 1
      %p356 = por %p354, %p355
      %p358 = scmp.ne.s32.totalorder %s341, %s357
      %p359 = scmp.eq.s32.totalorder %s29, 0
      %p360 = por %p358, %p359
      %p361 = scmp.le.s32.totalorder 1, %s23
      %p362 = scmp.lt.s32.totalorder %s23, 3
      %p363 = pnand %p361, %p362
      %p364 = pneg %p363
      // Predicated region
      $region9: #{tpu_custom_call.1} parent=5 // pred_check
        _
      $region10: #{tpu_custom_call.1} parent=5 // pred_check_branch
        %366 = sbr.rel (%p363) target = $region12
      $region11: #{tpu_custom_call.1} parent=5 // pred_region
        %s367 = ssub.s32 %s23, 1
        // Predicated region
        $region13: #{tpu_custom_call.1} parent=11 // pred_check
          %p368 = pneg %p96
        $region14: #{tpu_custom_call.1} parent=11 // pred_check_branch
          %370 = sbr.rel (%p368) target = $region16
        $region15: #{tpu_custom_call.1} parent=11 // pred_region
          _
        $region16: #{tpu_custom_call.1} parent=11 // pred_fallthru
          _
        // Predicated region
        $region17: #{tpu_custom_call.1} parent=11 // pred_check
          %p371 = pneg %p117
        $region18: #{tpu_custom_call.1} parent=11 // pred_check_branch
          %373 = sbr.rel (%p371) target = $region20
        $region19: #{tpu_custom_call.1} parent=11 // pred_region
          _
        $region20: #{tpu_custom_call.1} parent=11 // pred_fallthru
          _
        // Predicated region
        $region21: #{tpu_custom_call.1} parent=11 // pred_check
          %p374 = pneg %p138
        $region22: #{tpu_custom_call.1} parent=11 // pred_check_branch
          %376 = sbr.rel (%p374) target = $region24
        $region23: #{tpu_custom_call.1} parent=11 // pred_region
          _
        $region24: #{tpu_custom_call.1} parent=11 // pred_fallthru
          _
        // Predicated region
        $region25: #{tpu_custom_call.1} parent=11 // pred_check
          %p377 = pneg %p159
        $region26: #{tpu_custom_call.1} parent=11 // pred_check_branch
          %379 = sbr.rel (%p377) target = $region28
        $region27: #{tpu_custom_call.1} parent=11 // pred_region
          _
        $region28: #{tpu_custom_call.1} parent=11 // pred_fallthru
          _
        // Predicated region
        $region29: #{tpu_custom_call.1} parent=11 // pred_check
          %p380 = pneg %p180
        $region30: #{tpu_custom_call.1} parent=11 // pred_check_branch
          %382 = sbr.rel (%p380) target = $region32
        $region31: #{tpu_custom_call.1} parent=11 // pred_region
          _
        $region32: #{tpu_custom_call.1} parent=11 // pred_fallthru
          _
        // Predicated region
        $region33: #{tpu_custom_call.1} parent=11 // pred_check
          %p383 = pneg %p201
        $region34: #{tpu_custom_call.1} parent=11 // pred_check_branch
          %385 = sbr.rel (%p383) target = $region36
        $region35: #{tpu_custom_call.1} parent=11 // pred_region
          _
        $region36: #{tpu_custom_call.1} parent=11 // pred_fallthru
          _
        // Predicated region
        $region37: #{tpu_custom_call.1} parent=11 // pred_check
          %p386 = pneg %p222
        $region38: #{tpu_custom_call.1} parent=11 // pred_check_branch
          %388 = sbr.rel (%p386) target = $region40
        $region39: #{tpu_custom_call.1} parent=11 // pred_region
          _
        $region40: #{tpu_custom_call.1} parent=11 // pred_fallthru
          _
        // Predicated region
        $region41: #{tpu_custom_call.1} parent=11 // pred_check
          %p389 = pneg %p243
        $region42: #{tpu_custom_call.1} parent=11 // pred_check_branch
          %391 = sbr.rel (%p389) target = $region44
        $region43: #{tpu_custom_call.1} parent=11 // pred_region
          _
        $region44: #{tpu_custom_call.1} parent=11 // pred_fallthru
          _
        // Predicated region
        $region45: #{tpu_custom_call.1} parent=11 // pred_check
          %p392 = pneg %p264
        $region46: #{tpu_custom_call.1} parent=11 // pred_check_branch
          %394 = sbr.rel (%p392) target = $region48
        $region47: #{tpu_custom_call.1} parent=11 // pred_region
          _
        $region48: #{tpu_custom_call.1} parent=11 // pred_fallthru
          _
        // Predicated region
        $region49: #{tpu_custom_call.1} parent=11 // pred_check
          %p395 = pneg %p285
        $region50: #{tpu_custom_call.1} parent=11 // pred_check_branch
          %397 = sbr.rel (%p395) target = $region52
        $region51: #{tpu_custom_call.1} parent=11 // pred_region
          _
        $region52: #{tpu_custom_call.1} parent=11 // pred_fallthru
          _
        // Predicated region
        $region53: #{tpu_custom_call.1} parent=11 // pred_check
          %p398 = pneg %p306
        $region54: #{tpu_custom_call.1} parent=11 // pred_check_branch
          %400 = sbr.rel (%p398) target = $region56
        $region55: #{tpu_custom_call.1} parent=11 // pred_region
          _
        $region56: #{tpu_custom_call.1} parent=11 // pred_fallthru
          _
        // Predicated region
        $region57: #{tpu_custom_call.1} parent=11 // pred_check
          %p401 = pneg %p327
        $region58: #{tpu_custom_call.1} parent=11 // pred_check_branch
          %403 = sbr.rel (%p401) target = $region60
        $region59: #{tpu_custom_call.1} parent=11 // pred_region
          _
        $region60: #{tpu_custom_call.1} parent=11 // pred_fallthru
          _
      $region12: #{tpu_custom_call.1} parent=5 // pred_fallthru
        _
      %p404 = scmp.lt.s32.totalorder %s23, 2
      // Predicated region
      $region61: #{tpu_custom_call.1} parent=5 // pred_check
        %p405 = pneg %p404
      $region62: #{tpu_custom_call.1} parent=5 // pred_check_branch
        %407 = sbr.rel (%p405) target = $region64
      $region63: #{tpu_custom_call.1} parent=5 // pred_region
        // Predicated region
        $region65: #{tpu_custom_call.1} parent=63 // pred_check
          %p408 = pneg %p43
        $region66: #{tpu_custom_call.1} parent=63 // pred_check_branch
          %410 = sbr.rel (%p408) target = $region68
        $region67: #{tpu_custom_call.1} parent=63 // pred_region
          %p411 = scmp.lt.s32.totalorder %s23, 1
          %s412 = scalar_select %p411, %s23, 1
          %s413 = smul.addr %s412, 2
          %s414 = smul.addr %s413, 4
          %s415 = scalar_lea.vmem %s0, %s414
        $region68: #{tpu_custom_call.1} parent=63 // pred_fallthru
          _
        // Predicated region
        $region69: #{tpu_custom_call.1} parent=63 // pred_check
          %p416 = pneg %p69
        $region70: #{tpu_custom_call.1} parent=63 // pred_check_branch
          %418 = sbr.rel (%p416) target = $region72
        $region71: #{tpu_custom_call.1} parent=63 // pred_region
          %p419 = scmp.lt.s32.totalorder %s23, 1
          %s420 = scalar_select %p419, %s23, 1
          %s421 = scalar_lea.vmem %s1, %s420
        $region72: #{tpu_custom_call.1} parent=63 // pred_fallthru
          _
      $region64: #{tpu_custom_call.1} parent=5 // pred_fallthru
        _
      %p422 = scmp.le.s32.totalorder 1, %s23
      %p423 = scmp.lt.s32.totalorder %s23, 3
      %p424 = pnand %p422, %p423
      %p425 = pneg %p424
      // Predicated region
      $region73: #{tpu_custom_call.1} parent=5 // pred_check
        _
      $region74: #{tpu_custom_call.1} parent=5 // pred_check_branch
        %427 = sbr.rel (%p424) target = $region76
      $region75: #{tpu_custom_call.1} parent=5 // pred_region
        %s428 = ssub.s32 %s23, 1
        %p429 = scmp.lt.s32.totalorder %s28, 1
        %s430 = scalar_select %p429, %s28, 1
        %s431 = smul.addr %s430, 2
        %s432 = smul.addr %s431, 4
        %s433 = scalar_lea.vmem %s0, %s432
        %p434 = pneg %p49
        %p435 = pneg %p46
        %p436 = scmp.lt.s32.totalorder %s28, 1
        %s437 = scalar_select %p436, %s28, 1
        %s438 = scalar_lea.vmem %s1, %s437
        %p439 = pneg %p75
        %p440 = pneg %p72
        %p441 = pneg %p96
        %p442 = pneg %p93
        %p443 = pneg %p117
        %p444 = pneg %p114
        %p445 = pneg %p138
        %p446 = pneg %p135
        %p447 = pneg %p159
        %p448 = pneg %p156
        %p449 = pneg %p180
        %p450 = pneg %p177
        %p451 = pneg %p201
        %p452 = pneg %p198
        %p453 = pneg %p222
        %p454 = pneg %p219
        %p455 = pneg %p243
        %p456 = pneg %p240
        %p457 = pneg %p264
        %p458 = pneg %p261
        %p459 = pneg %p285
        %p460 = pneg %p282
        %p461 = pneg %p306
        %p462 = pneg %p303
        %p463 = pneg %p327
        %p464 = pneg %p324
        %p465 = pneg %p353
        %p466 = pneg %p350
        %s467 = sand.u32 %s340, 1
        %s468 = scalar_lea.sflag [#allocation4], %s467
        %s469 = sand.u32 %s340, 1
        %s470 = smul.addr %s469, 8
        %s471 = scalar_lea.vmem [#allocation3], %s470
        %p472 = scmp.lt.s32.totalorder %s28, 1
        %s473 = scalar_select %p472, %s28, 1
        %s474 = smul.addr %s473, 2
        %s475 = smul.addr %s474, 4
        %s476 = scalar_lea.vmem %s0, %s475
        %p477 = scmp.lt.s32.totalorder %s28, 1
        %s478 = scalar_select %p477, %s28, 1
        %s479 = scalar_lea.vmem %s1, %s478
        %v480 = vld [vmem:[%s476] sm:$0xff]
        %v481 = vlaneseq
        %v482 = vand.u32 %v481, 127
        %v483 = vadd.s32 %v482, 128
        %v484 = vand.u32 %v482, 15
        %v485 = vand.u32 %v483, 15
        %vm486 = vcmp.ne.s32.totalorder %v484, 0
        %vm487 = vcmp.ne.s32.totalorder %v485, 0
        %v488 = vsel %vm486, 1, 0
        %v489 = vsel %vm487, 1, 0
        %v490 = vcvt.s32.f32 %v488
        %v491 = vcvt.s32.f32 %v489
        %vm492 = vcmp.ne.s32.totalorder %v484, 15
        %vm493 = vcmp.ne.s32.totalorder %v485, 15
        %v494 = vsel %vm492, 1, 0
        %v495 = vsel %vm493, 1, 0
        %v496 = vcvt.s32.f32 %v494
        %v497 = vcvt.s32.f32 %v495
        %498 = vst [vmem:[#allocation2] sm:$0xff] 0.0
        %499 = vst [vmem:[#allocation2 + $0x8] sm:$0xff] 0.0
        %v501 = vcombine.high %v480, %v480
        %vm503 = vcmask 1043456
        %v504 = vsel %vm503, %v480, 0.0
        %v505 = vsel %vm503, %v501, 0.0
        %v506 = vadd.f32 %v504, %v505
        %507 = vadd.xlane.f32.xlu0 %v506
        %v508 = vpop.xlane.xlu0 %507
        %v509 = vrot.slane %v508, 4
        %v510 = vadd.f32 %v508, %v509
        %v511 = vrot.slane %v510, 2
        %v512 = vadd.f32 %v510, %v511
        %v513 = vrot.slane %v512, 1
        %v514 = vadd.f32 %v512, %v513
        %s515 = vtos %v514
        %v516 = vstv %s515
        %v517 = vrcp.pop 1024.0
        %v518 = vmul.f32 %v516, %v517
        %v519 = vsub.f32 %v480, %v518
        %v520 = vmul.f32 %v519, %v519
        %v522 = vcombine.high %v520, %v520
        %v524 = vsel %vm503, %v520, 0.0
        %v525 = vsel %vm503, %v522, 0.0
        %v526 = vadd.f32 %v524, %v525
        %527 = vadd.xlane.f32.xlu0 %v526
        %v528 = vpop.xlane.xlu0 %527
        %v529 = vrot.slane %v528, 4
        %v530 = vadd.f32 %v528, %v529
        %v531 = vrot.slane %v530, 2
        %v532 = vadd.f32 %v530, %v531
        %v533 = vrot.slane %v532, 1
        %v534 = vadd.f32 %v532, %v533
        %s535 = vtos %v534
        %v536 = vstv %s535
        %v537 = vmul.f32 %v536, %v517
        %v538 = vadd.f32 %v537, 1e-05
        %v539 = vrsqrt.pop %v538
        %v540 = vmul.f32 %v519, %v539
        %v541 = vld [vmem:[%s2] sm:$0xff]
        %v542 = vmul.f32 %v540, %v541
        %v543 = vld [vmem:[%s3] sm:$0xff]
        %v544 = vadd.f32 %v542, %v543
        %545 = vst [vmem:[#allocation2 + $0x4] sm:$0xff] %v544
        %v546 = vld [vmem:[#allocation2] sm:$0xff]
        %v547 = vld [vmem:[#allocation2 + $0x8] sm:$0xf]
        %v550 = vcombine.low %v490, %v491
        %551 = vrot.lane.b32.xlu0 %v550, 111
        %v552 = vpop.permute.xlu0 %551
        %v553 = vrot.slane %v552, 4
        %vm554 = vcmask 908288
        %v555 = vsel %vm554, %v553, %v552
        %v558 = vmul.f32 %v546, %v555
        %v559 = vmul.f32 %v547, %v553
        %v560 = vld [vmem:[%s4] sm:$0xf]
        %562 = vset.pattern.permute.xlu0 0
        %563 = vperm.xlu0 %562, %v560
        %v564 = vpop.permute.xlu0 %563
        %v568 = vlaneseq
        %v569 = vshrl.u32 %v568, 7
        %v570 = vsub.s32 0, %v569
        %v571 = vrot.slane %v558, %v570
        %v572 = vlaneseq
        %v573 = vshrl.u32 %v572, 7
        %v574 = vsub.s32 4, %v573
        %v575 = vrot.slane %v558, %v574
        %v576 = vlaneseq
        %v577 = vshrl.u32 %v576, 7
        %v578 = vsub.s32 0, %v577
        %v579 = vrot.slane %v559, %v578
        %v583 = vlaneseq
        %v584 = vshrl.u32 %v583, 7
        %v585 = vsub.s32 0, %v584
        %v586 = vrot.slane %v571, %v585
        %v587 = vlaneseq
        %v588 = vshrl.u32 %v587, 7
        %v589 = vsub.s32 0, %v588
        %v590 = vrot.slane %v575, %v589
        %v591 = vlaneseq
        %v592 = vshrl.u32 %v591, 7
        %v593 = vsub.s32 0, %v592
        %v594 = vrot.slane %v579, %v593
        %v595 = vmul.f32 %v564, %v586
        %v596 = vmul.f32 %v564, %v590
        %v597 = vmul.f32 %v564, %v594
        %v598 = vadd.f32 %v595, 0.0
        %v599 = vadd.f32 %v596, 0.0
        %v600 = vadd.f32 %v597, 0.0
        %601 = vset.pattern.permute.xlu0 1
        %602 = vperm.xlu0 %601, %v560
        %v603 = vpop.permute.xlu0 %602
        %v605 = vlaneseq
        %v606 = vshrl.u32 %v605, 7
        %v607 = vsub.s32 1, %v606
        %v608 = vrot.slane %v558, %v607
        %v609 = vlaneseq
        %v610 = vshrl.u32 %v609, 7
        %v611 = vsub.s32 5, %v610
        %v612 = vrot.slane %v558, %v611
        %v613 = vlaneseq
        %v614 = vshrl.u32 %v613, 7
        %v615 = vsub.s32 1, %v614
        %v616 = vrot.slane %v559, %v615
        %v620 = vlaneseq
        %v621 = vshrl.u32 %v620, 7
        %v622 = vsub.s32 1, %v621
        %v623 = vrot.slane %v608, %v622
        %v624 = vlaneseq
        %v625 = vshrl.u32 %v624, 7
        %v626 = vsub.s32 1, %v625
        %v627 = vrot.slane %v612, %v626
        %v628 = vlaneseq
        %v629 = vshrl.u32 %v628, 7
        %v630 = vsub.s32 1, %v629
        %v631 = vrot.slane %v616, %v630
        %v632 = vmul.f32 %v603, %v623
        %v633 = vmul.f32 %v603, %v627
        %v634 = vmul.f32 %v603, %v631
        %v635 = vadd.f32 %v598, %v632
        %v636 = vadd.f32 %v599, %v633
        %v637 = vadd.f32 %v600, %v634
        %638 = vset.pattern.permute.xlu0 2
        %639 = vperm.xlu0 %638, %v560
        %v640 = vpop.permute.xlu0 %639
        %v642 = vlaneseq
        %v643 = vshrl.u32 %v642, 7
        %v644 = vsub.s32 2, %v643
        %v645 = vrot.slane %v558, %v644
        %v646 = vlaneseq
        %v647 = vshrl.u32 %v646, 7
        %v648 = vsub.s32 6, %v647
        %v649 = vrot.slane %v558, %v648
        %v650 = vlaneseq
        %v651 = vshrl.u32 %v650, 7
        %v652 = vsub.s32 2, %v651
        %v653 = vrot.slane %v559, %v652
        %v657 = vlaneseq
        %v658 = vshrl.u32 %v657, 7
        %v659 = vsub.s32 2, %v658
        %v660 = vrot.slane %v645, %v659
        %v661 = vlaneseq
        %v662 = vshrl.u32 %v661, 7
        %v663 = vsub.s32 2, %v662
        %v664 = vrot.slane %v649, %v663
        %v665 = vlaneseq
        %v666 = vshrl.u32 %v665, 7
        %v667 = vsub.s32 2, %v666
        %v668 = vrot.slane %v653, %v667
        %v669 = vmul.f32 %v640, %v660
        %v670 = vmul.f32 %v640, %v664
        %v671 = vmul.f32 %v640, %v668
        %v672 = vadd.f32 %v635, %v669
        %v673 = vadd.f32 %v636, %v670
        %v674 = vadd.f32 %v637, %v671
        %675 = vset.pattern.permute.xlu0 3
        %676 = vperm.xlu0 %675, %v560
        %v677 = vpop.permute.xlu0 %676
        %v679 = vlaneseq
        %v680 = vshrl.u32 %v679, 7
        %v681 = vsub.s32 3, %v680
        %v682 = vrot.slane %v558, %v681
        %v683 = vlaneseq
        %v684 = vshrl.u32 %v683, 7
        %v685 = vsub.s32 7, %v684
        %v686 = vrot.slane %v558, %v685
        %v687 = vlaneseq
        %v688 = vshrl.u32 %v687, 7
        %v689 = vsub.s32 3, %v688
        %v690 = vrot.slane %v559, %v689
        %v694 = vlaneseq
        %v695 = vshrl.u32 %v694, 7
        %v696 = vsub.s32 3, %v695
        %v697 = vrot.slane %v682, %v696
        %v698 = vlaneseq
        %v699 = vshrl.u32 %v698, 7
        %v700 = vsub.s32 3, %v699
        %v701 = vrot.slane %v686, %v700
        %v702 = vlaneseq
        %v703 = vshrl.u32 %v702, 7
        %v704 = vsub.s32 3, %v703
        %v705 = vrot.slane %v690, %v704
        %v706 = vmul.f32 %v677, %v697
        %v707 = vmul.f32 %v677, %v701
        %v708 = vmul.f32 %v677, %v705
        %v709 = vadd.f32 %v672, %v706
        %v710 = vadd.f32 %v673, %v707
        %v711 = vadd.f32 %v674, %v708
        %v712 = vld [vmem:[#allocation2] sm:$0xff]
        %v713 = vld [vmem:[#allocation2 + $0x8] sm:$0xf]
        %s714 = scalar_lea.vmem %s4, 4
        %v715 = vld [vmem:[%s714] sm:$0xf]
        %717 = vset.pattern.permute.xlu0 0
        %718 = vperm.xlu0 %717, %v715
        %v719 = vpop.permute.xlu0 %718
        %v723 = vlaneseq
        %v724 = vshrl.u32 %v723, 7
        %v725 = vsub.s32 0, %v724
        %v726 = vrot.slane %v712, %v725
        %v727 = vlaneseq
        %v728 = vshrl.u32 %v727, 7
        %v729 = vsub.s32 4, %v728
        %v730 = vrot.slane %v712, %v729
        %v731 = vlaneseq
        %v732 = vshrl.u32 %v731, 7
        %v733 = vsub.s32 0, %v732
        %v734 = vrot.slane %v713, %v733
        %v738 = vlaneseq
        %v739 = vshrl.u32 %v738, 7
        %v740 = vsub.s32 0, %v739
        %v741 = vrot.slane %v726, %v740
        %v742 = vlaneseq
        %v743 = vshrl.u32 %v742, 7
        %v744 = vsub.s32 0, %v743
        %v745 = vrot.slane %v730, %v744
        %v746 = vlaneseq
        %v747 = vshrl.u32 %v746, 7
        %v748 = vsub.s32 0, %v747
        %v749 = vrot.slane %v734, %v748
        %v750 = vmul.f32 %v719, %v741
        %v751 = vmul.f32 %v719, %v745
        %v752 = vmul.f32 %v719, %v749
        %756 = vrot.lane.b32.xlu0 %v750, 127
        %v757 = vpop.permute.xlu0 %756
        %758 = vrot.lane.b32.xlu0 %v751, 127
        %v759 = vpop.permute.xlu0 %758
        %760 = vrot.lane.b32.xlu0 %v752, 127
        %v761 = vpop.permute.xlu0 %760
        %vm762 = vcmask 1039360
        %v763 = vsel %vm762, %v757, %v759
        %v764 = vsel %vm762, %v759, %v761
        %v768 = vadd.f32 %v709, %v763
        %v769 = vadd.f32 %v710, %v764
        %v770 = vadd.f32 %v711, %v761
        %771 = vset.pattern.permute.xlu0 1
        %772 = vperm.xlu0 %771, %v715
        %v773 = vpop.permute.xlu0 %772
        %v775 = vlaneseq
        %v776 = vshrl.u32 %v775, 7
        %v777 = vsub.s32 1, %v776
        %v778 = vrot.slane %v712, %v777
        %v779 = vlaneseq
        %v780 = vshrl.u32 %v779, 7
        %v781 = vsub.s32 5, %v780
        %v782 = vrot.slane %v712, %v781
        %v783 = vlaneseq
        %v784 = vshrl.u32 %v783, 7
        %v785 = vsub.s32 1, %v784
        %v786 = vrot.slane %v713, %v785
        %v790 = vlaneseq
        %v791 = vshrl.u32 %v790, 7
        %v792 = vsub.s32 1, %v791
        %v793 = vrot.slane %v778, %v792
        %v794 = vlaneseq
        %v795 = vshrl.u32 %v794, 7
        %v796 = vsub.s32 1, %v795
        %v797 = vrot.slane %v782, %v796
        %v798 = vlaneseq
        %v799 = vshrl.u32 %v798, 7
        %v800 = vsub.s32 1, %v799
        %v801 = vrot.slane %v786, %v800
        %v802 = vmul.f32 %v773, %v793
        %v803 = vmul.f32 %v773, %v797
        %v804 = vmul.f32 %v773, %v801
        %808 = vrot.lane.b32.xlu0 %v802, 127
        %v809 = vpop.permute.xlu0 %808
        %810 = vrot.lane.b32.xlu0 %v803, 127
        %v811 = vpop.permute.xlu0 %810
        %812 = vrot.lane.b32.xlu0 %v804, 127
        %v813 = vpop.permute.xlu0 %812
        %v814 = vsel %vm762, %v809, %v811
        %v815 = vsel %vm762, %v811, %v813
        %v819 = vadd.f32 %v768, %v814
        %v820 = vadd.f32 %v769, %v815
        %v821 = vadd.f32 %v770, %v813
        %822 = vset.pattern.permute.xlu0 2
        %823 = vperm.xlu0 %822, %v715
        %v824 = vpop.permute.xlu0 %823
        %v826 = vlaneseq
        %v827 = vshrl.u32 %v826, 7
        %v828 = vsub.s32 2, %v827
        %v829 = vrot.slane %v712, %v828
        %v830 = vlaneseq
        %v831 = vshrl.u32 %v830, 7
        %v832 = vsub.s32 6, %v831
        %v833 = vrot.slane %v712, %v832
        %v834 = vlaneseq
        %v835 = vshrl.u32 %v834, 7
        %v836 = vsub.s32 2, %v835
        %v837 = vrot.slane %v713, %v836
        %v841 = vlaneseq
        %v842 = vshrl.u32 %v841, 7
        %v843 = vsub.s32 2, %v842
        %v844 = vrot.slane %v829, %v843
        %v845 = vlaneseq
        %v846 = vshrl.u32 %v845, 7
        %v847 = vsub.s32 2, %v846
        %v848 = vrot.slane %v833, %v847
        %v849 = vlaneseq
        %v850 = vshrl.u32 %v849, 7
        %v851 = vsub.s32 2, %v850
        %v852 = vrot.slane %v837, %v851
        %v853 = vmul.f32 %v824, %v844
        %v854 = vmul.f32 %v824, %v848
        %v855 = vmul.f32 %v824, %v852
        %859 = vrot.lane.b32.xlu0 %v853, 127
        %v860 = vpop.permute.xlu0 %859
        %861 = vrot.lane.b32.xlu0 %v854, 127
        %v862 = vpop.permute.xlu0 %861
        %863 = vrot.lane.b32.xlu0 %v855, 127
        %v864 = vpop.permute.xlu0 %863
        %v865 = vsel %vm762, %v860, %v862
        %v866 = vsel %vm762, %v862, %v864
        %v870 = vadd.f32 %v819, %v865
        %v871 = vadd.f32 %v820, %v866
        %v872 = vadd.f32 %v821, %v864
        %873 = vset.pattern.permute.xlu0 3
        %874 = vperm.xlu0 %873, %v715
        %v875 = vpop.permute.xlu0 %874
        %v877 = vlaneseq
        %v878 = vshrl.u32 %v877, 7
        %v879 = vsub.s32 3, %v878
        %v880 = vrot.slane %v712, %v879
        %v881 = vlaneseq
        %v882 = vshrl.u32 %v881, 7
        %v883 = vsub.s32 7, %v882
        %v884 = vrot.slane %v712, %v883
        %v885 = vlaneseq
        %v886 = vshrl.u32 %v885, 7
        %v887 = vsub.s32 3, %v886
        %v888 = vrot.slane %v713, %v887
        %v892 = vlaneseq
        %v893 = vshrl.u32 %v892, 7
        %v894 = vsub.s32 3, %v893
        %v895 = vrot.slane %v880, %v894
        %v896 = vlaneseq
        %v897 = vshrl.u32 %v896, 7
        %v898 = vsub.s32 3, %v897
        %v899 = vrot.slane %v884, %v898
        %v900 = vlaneseq
        %v901 = vshrl.u32 %v900, 7
        %v902 = vsub.s32 3, %v901
        %v903 = vrot.slane %v888, %v902
        %v904 = vmul.f32 %v875, %v895
        %v905 = vmul.f32 %v875, %v899
        %v906 = vmul.f32 %v875, %v903
        %910 = vrot.lane.b32.xlu0 %v904, 127
        %v911 = vpop.permute.xlu0 %910
        %912 = vrot.lane.b32.xlu0 %v905, 127
        %v913 = vpop.permute.xlu0 %912
        %914 = vrot.lane.b32.xlu0 %v906, 127
        %v915 = vpop.permute.xlu0 %914
        %v916 = vsel %vm762, %v911, %v913
        %v917 = vsel %vm762, %v913, %v915
        %v921 = vadd.f32 %v870, %v916
        %v922 = vadd.f32 %v871, %v917
        %v923 = vadd.f32 %v872, %v915
        %v926 = vcombine.low %v496, %v497
        %927 = vrot.lane.b32.xlu0 %v926, 113
        %v928 = vpop.permute.xlu0 %927
        %v929 = vrot.slane %v928, 4
        %vm930 = vcmask 924672
        %v931 = vsel %vm930, %v929, %v928
        %v934 = vmul.f32 %v712, %v931
        %v935 = vmul.f32 %v713, %v929
        %s936 = scalar_lea.vmem %s4, 8
        %v937 = vld [vmem:[%s936] sm:$0xf]
        %939 = vset.pattern.permute.xlu0 0
        %940 = vperm.xlu0 %939, %v937
        %v941 = vpop.permute.xlu0 %940
        %v945 = vlaneseq
        %v946 = vshrl.u32 %v945, 7
        %v947 = vsub.s32 0, %v946
        %v948 = vrot.slane %v934, %v947
        %v949 = vlaneseq
        %v950 = vshrl.u32 %v949, 7
        %v951 = vsub.s32 4, %v950
        %v952 = vrot.slane %v934, %v951
        %v953 = vlaneseq
        %v954 = vshrl.u32 %v953, 7
        %v955 = vsub.s32 0, %v954
        %v956 = vrot.slane %v935, %v955
        %v960 = vlaneseq
        %v961 = vshrl.u32 %v960, 7
        %v962 = vsub.s32 0, %v961
        %v963 = vrot.slane %v948, %v962
        %v964 = vlaneseq
        %v965 = vshrl.u32 %v964, 7
        %v966 = vsub.s32 0, %v965
        %v967 = vrot.slane %v952, %v966
        %v968 = vlaneseq
        %v969 = vshrl.u32 %v968, 7
        %v970 = vsub.s32 0, %v969
        %v971 = vrot.slane %v956, %v970
        %v972 = vmul.f32 %v941, %v963
        %v973 = vmul.f32 %v941, %v967
        %v974 = vmul.f32 %v941, %v971
        %978 = vrot.lane.b32.xlu0 %v972, 126
        %v979 = vpop.permute.xlu0 %978
        %980 = vrot.lane.b32.xlu0 %v973, 126
        %v981 = vpop.permute.xlu0 %980
        %982 = vrot.lane.b32.xlu0 %v974, 126
        %v983 = vpop.permute.xlu0 %982
        %vm984 = vcmask 1031168
        %v985 = vsel %vm984, %v979, %v981
        %v986 = vsel %vm984, %v981, %v983
        %v990 = vadd.f32 %v921, %v985
        %v991 = vadd.f32 %v922, %v986
        %v992 = vadd.f32 %v923, %v983
        %993 = vset.pattern.permute.xlu0 1
        %994 = vperm.xlu0 %993, %v937
        %v995 = vpop.permute.xlu0 %994
        %v997 = vlaneseq
        %v998 = vshrl.u32 %v997, 7
        %v999 = vsub.s32 1, %v998
        %v1000 = vrot.slane %v934, %v999
        %v1001 = vlaneseq
        %v1002 = vshrl.u32 %v1001, 7
        %v1003 = vsub.s32 5, %v1002
        %v1004 = vrot.slane %v934, %v1003
        %v1005 = vlaneseq
        %v1006 = vshrl.u32 %v1005, 7
        %v1007 = vsub.s32 1, %v1006
        %v1008 = vrot.slane %v935, %v1007
        %v1012 = vlaneseq
        %v1013 = vshrl.u32 %v1012, 7
        %v1014 = vsub.s32 1, %v1013
        %v1015 = vrot.slane %v1000, %v1014
        %v1016 = vlaneseq
        %v1017 = vshrl.u32 %v1016, 7
        %v1018 = vsub.s32 1, %v1017
        %v1019 = vrot.slane %v1004, %v1018
        %v1020 = vlaneseq
        %v1021 = vshrl.u32 %v1020, 7
        %v1022 = vsub.s32 1, %v1021
        %v1023 = vrot.slane %v1008, %v1022
        %v1024 = vmul.f32 %v995, %v1015
        %v1025 = vmul.f32 %v995, %v1019
        %v1026 = vmul.f32 %v995, %v1023
        %1030 = vrot.lane.b32.xlu0 %v1024, 126
        %v1031 = vpop.permute.xlu0 %1030
        %1032 = vrot.lane.b32.xlu0 %v1025, 126
        %v1033 = vpop.permute.xlu0 %1032
        %1034 = vrot.lane.b32.xlu0 %v1026, 126
        %v1035 = vpop.permute.xlu0 %1034
        %v1036 = vsel %vm984, %v1031, %v1033
        %v1037 = vsel %vm984, %v1033, %v1035
        %v1041 = vadd.f32 %v990, %v1036
        %v1042 = vadd.f32 %v991, %v1037
        %v1043 = vadd.f32 %v992, %v1035
        %1044 = vset.pattern.permute.xlu0 2
        %1045 = vperm.xlu0 %1044, %v937
        %v1046 = vpop.permute.xlu0 %1045
        %v1048 = vlaneseq
        %v1049 = vshrl.u32 %v1048, 7
        %v1050 = vsub.s32 2, %v1049
        %v1051 = vrot.slane %v934, %v1050
        %v1052 = vlaneseq
        %v1053 = vshrl.u32 %v1052, 7
        %v1054 = vsub.s32 6, %v1053
        %v1055 = vrot.slane %v934, %v1054
        %v1056 = vlaneseq
        %v1057 = vshrl.u32 %v1056, 7
        %v1058 = vsub.s32 2, %v1057
        %v1059 = vrot.slane %v935, %v1058
        %v1063 = vlaneseq
        %v1064 = vshrl.u32 %v1063, 7
        %v1065 = vsub.s32 2, %v1064
        %v1066 = vrot.slane %v1051, %v1065
        %v1067 = vlaneseq
        %v1068 = vshrl.u32 %v1067, 7
        %v1069 = vsub.s32 2, %v1068
        %v1070 = vrot.slane %v1055, %v1069
        %v1071 = vlaneseq
        %v1072 = vshrl.u32 %v1071, 7
        %v1073 = vsub.s32 2, %v1072
        %v1074 = vrot.slane %v1059, %v1073
        %v1075 = vmul.f32 %v1046, %v1066
        %v1076 = vmul.f32 %v1046, %v1070
        %v1077 = vmul.f32 %v1046, %v1074
        %1081 = vrot.lane.b32.xlu0 %v1075, 126
        %v1082 = vpop.permute.xlu0 %1081
        %1083 = vrot.lane.b32.xlu0 %v1076, 126
        %v1084 = vpop.permute.xlu0 %1083
        %1085 = vrot.lane.b32.xlu0 %v1077, 126
        %v1086 = vpop.permute.xlu0 %1085
        %v1087 = vsel %vm984, %v1082, %v1084
        %v1088 = vsel %vm984, %v1084, %v1086
        %v1092 = vadd.f32 %v1041, %v1087
        %v1093 = vadd.f32 %v1042, %v1088
        %v1094 = vadd.f32 %v1043, %v1086
        %1095 = vset.pattern.permute.xlu0 3
        %1096 = vperm.xlu0 %1095, %v937
        %v1097 = vpop.permute.xlu0 %1096
        %v1099 = vlaneseq
        %v1100 = vshrl.u32 %v1099, 7
        %v1101 = vsub.s32 3, %v1100
        %v1102 = vrot.slane %v934, %v1101
        %v1103 = vlaneseq
        %v1104 = vshrl.u32 %v1103, 7
        %v1105 = vsub.s32 7, %v1104
        %v1106 = vrot.slane %v934, %v1105
        %v1107 = vlaneseq
        %v1108 = vshrl.u32 %v1107, 7
        %v1109 = vsub.s32 3, %v1108
        %v1110 = vrot.slane %v935, %v1109
        %v1114 = vlaneseq
        %v1115 = vshrl.u32 %v1114, 7
        %v1116 = vsub.s32 3, %v1115
        %v1117 = vrot.slane %v1102, %v1116
        %v1118 = vlaneseq
        %v1119 = vshrl.u32 %v1118, 7
        %v1120 = vsub.s32 3, %v1119
        %v1121 = vrot.slane %v1106, %v1120
        %v1122 = vlaneseq
        %v1123 = vshrl.u32 %v1122, 7
        %v1124 = vsub.s32 3, %v1123
        %v1125 = vrot.slane %v1110, %v1124
        %v1126 = vmul.f32 %v1097, %v1117
        %v1127 = vmul.f32 %v1097, %v1121
        %v1128 = vmul.f32 %v1097, %v1125
        %1132 = vrot.lane.b32.xlu0 %v1126, 126
        %v1133 = vpop.permute.xlu0 %1132
        %1134 = vrot.lane.b32.xlu0 %v1127, 126
        %v1135 = vpop.permute.xlu0 %1134
        %1136 = vrot.lane.b32.xlu0 %v1128, 126
        %v1137 = vpop.permute.xlu0 %1136
        %v1138 = vsel %vm984, %v1133, %v1135
        %v1139 = vsel %vm984, %v1135, %v1137
        %v1143 = vadd.f32 %v1092, %v1138
        %v1144 = vadd.f32 %v1093, %v1139
        %v1145 = vadd.f32 %v1094, %v1137
        %v1146 = vld [vmem:[#allocation2] sm:$0xff]
        %v1147 = vld [vmem:[#allocation2 + $0x8] sm:$0xf]
        %1148 = vrot.lane.b32.xlu0 %v550, 127
        %v1149 = vpop.permute.xlu0 %1148
        %v1150 = vrot.slane %v1149, 4
        %v1151 = vsel %vm762, %v1150, %v1149
        %v1154 = vmul.f32 %v1146, %v1151
        %v1155 = vmul.f32 %v1147, %v1150
        %s1156 = scalar_lea.vmem %s4, 12
        %v1157 = vld [vmem:[%s1156] sm:$0xf]
        %1159 = vset.pattern.permute.xlu0 0
        %1160 = vperm.xlu0 %1159, %v1157
        %v1161 = vpop.permute.xlu0 %1160
        %v1165 = vlaneseq
        %v1166 = vshrl.u32 %v1165, 7
        %v1167 = vsub.s32 0, %v1166
        %v1168 = vrot.slane %v1154, %v1167
        %v1169 = vlaneseq
        %v1170 = vshrl.u32 %v1169, 7
        %v1171 = vsub.s32 4, %v1170
        %v1172 = vrot.slane %v1154, %v1171
        %v1173 = vlaneseq
        %v1174 = vshrl.u32 %v1173, 7
        %v1175 = vsub.s32 0, %v1174
        %v1176 = vrot.slane %v1155, %v1175
        %v1180 = vlaneseq
        %v1181 = vshrl.u32 %v1180, 7
        %v1182 = vsub.s32 0, %v1181
        %v1183 = vrot.slane %v1168, %v1182
        %v1184 = vlaneseq
        %v1185 = vshrl.u32 %v1184, 7
        %v1186 = vsub.s32 0, %v1185
        %v1187 = vrot.slane %v1172, %v1186
        %v1188 = vlaneseq
        %v1189 = vshrl.u32 %v1188, 7
        %v1190 = vsub.s32 0, %v1189
        %v1191 = vrot.slane %v1176, %v1190
        %v1192 = vmul.f32 %v1161, %v1183
        %v1193 = vmul.f32 %v1161, %v1187
        %v1194 = vmul.f32 %v1161, %v1191
        %1198 = vrot.lane.b32.xlu0 %v1192, 112
        %v1199 = vpop.permute.xlu0 %1198
        %1200 = vrot.lane.b32.xlu0 %v1193, 112
        %v1201 = vpop.permute.xlu0 %1200
        %1202 = vrot.lane.b32.xlu0 %v1194, 112
        %v1203 = vpop.permute.xlu0 %1202
        %vm1204 = vcmask 916480
        %v1205 = vsel %vm1204, %v1199, %v1201
        %v1206 = vsel %vm1204, %v1201, %v1203
        %v1210 = vadd.f32 %v1143, %v1205
        %v1211 = vadd.f32 %v1144, %v1206
        %v1212 = vadd.f32 %v1145, %v1203
        %1213 = vset.pattern.permute.xlu0 1
        %1214 = vperm.xlu0 %1213, %v1157
        %v1215 = vpop.permute.xlu0 %1214
        %v1217 = vlaneseq
        %v1218 = vshrl.u32 %v1217, 7
        %v1219 = vsub.s32 1, %v1218
        %v1220 = vrot.slane %v1154, %v1219
        %v1221 = vlaneseq
        %v1222 = vshrl.u32 %v1221, 7
        %v1223 = vsub.s32 5, %v1222
        %v1224 = vrot.slane %v1154, %v1223
        %v1225 = vlaneseq
        %v1226 = vshrl.u32 %v1225, 7
        %v1227 = vsub.s32 1, %v1226
        %v1228 = vrot.slane %v1155, %v1227
        %v1232 = vlaneseq
        %v1233 = vshrl.u32 %v1232, 7
        %v1234 = vsub.s32 1, %v1233
        %v1235 = vrot.slane %v1220, %v1234
        %v1236 = vlaneseq
        %v1237 = vshrl.u32 %v1236, 7
        %v1238 = vsub.s32 1, %v1237
        %v1239 = vrot.slane %v1224, %v1238
        %v1240 = vlaneseq
        %v1241 = vshrl.u32 %v1240, 7
        %v1242 = vsub.s32 1, %v1241
        %v1243 = vrot.slane %v1228, %v1242
        %v1244 = vmul.f32 %v1215, %v1235
        %v1245 = vmul.f32 %v1215, %v1239
        %v1246 = vmul.f32 %v1215, %v1243
        %1250 = vrot.lane.b32.xlu0 %v1244, 112
        %v1251 = vpop.permute.xlu0 %1250
        %1252 = vrot.lane.b32.xlu0 %v1245, 112
        %v1253 = vpop.permute.xlu0 %1252
        %1254 = vrot.lane.b32.xlu0 %v1246, 112
        %v1255 = vpop.permute.xlu0 %1254
        %v1256 = vsel %vm1204, %v1251, %v1253
        %v1257 = vsel %vm1204, %v1253, %v1255
        %v1261 = vadd.f32 %v1210, %v1256
        %v1262 = vadd.f32 %v1211, %v1257
        %v1263 = vadd.f32 %v1212, %v1255
        %1264 = vset.pattern.permute.xlu0 2
        %1265 = vperm.xlu0 %1264, %v1157
        %v1266 = vpop.permute.xlu0 %1265
        %v1268 = vlaneseq
        %v1269 = vshrl.u32 %v1268, 7
        %v1270 = vsub.s32 2, %v1269
        %v1271 = vrot.slane %v1154, %v1270
        %v1272 = vlaneseq
        %v1273 = vshrl.u32 %v1272, 7
        %v1274 = vsub.s32 6, %v1273
        %v1275 = vrot.slane %v1154, %v1274
        %v1276 = vlaneseq
        %v1277 = vshrl.u32 %v1276, 7
        %v1278 = vsub.s32 2, %v1277
        %v1279 = vrot.slane %v1155, %v1278
        %v1283 = vlaneseq
        %v1284 = vshrl.u32 %v1283, 7
        %v1285 = vsub.s32 2, %v1284
        %v1286 = vrot.slane %v1271, %v1285
        %v1287 = vlaneseq
        %v1288 = vshrl.u32 %v1287, 7
        %v1289 = vsub.s32 2, %v1288
        %v1290 = vrot.slane %v1275, %v1289
        %v1291 = vlaneseq
        %v1292 = vshrl.u32 %v1291, 7
        %v1293 = vsub.s32 2, %v1292
        %v1294 = vrot.slane %v1279, %v1293
        %v1295 = vmul.f32 %v1266, %v1286
        %v1296 = vmul.f32 %v1266, %v1290
        %v1297 = vmul.f32 %v1266, %v1294
        %1301 = vrot.lane.b32.xlu0 %v1295, 112
        %v1302 = vpop.permute.xlu0 %1301
        %1303 = vrot.lane.b32.xlu0 %v1296, 112
        %v1304 = vpop.permute.xlu0 %1303
        %1305 = vrot.lane.b32.xlu0 %v1297, 112
        %v1306 = vpop.permute.xlu0 %1305
        %v1307 = vsel %vm1204, %v1302, %v1304
        %v1308 = vsel %vm1204, %v1304, %v1306
        %v1312 = vadd.f32 %v1261, %v1307
        %v1313 = vadd.f32 %v1262, %v1308
        %v1314 = vadd.f32 %v1263, %v1306
        %1315 = vset.pattern.permute.xlu0 3
        %1316 = vperm.xlu0 %1315, %v1157
        %v1317 = vpop.permute.xlu0 %1316
        %v1319 = vlaneseq
        %v1320 = vshrl.u32 %v1319, 7
        %v1321 = vsub.s32 3, %v1320
        %v1322 = vrot.slane %v1154, %v1321
        %v1323 = vlaneseq
        %v1324 = vshrl.u32 %v1323, 7
        %v1325 = vsub.s32 7, %v1324
        %v1326 = vrot.slane %v1154, %v1325
        %v1327 = vlaneseq
        %v1328 = vshrl.u32 %v1327, 7
        %v1329 = vsub.s32 3, %v1328
        %v1330 = vrot.slane %v1155, %v1329
        %v1334 = vlaneseq
        %v1335 = vshrl.u32 %v1334, 7
        %v1336 = vsub.s32 3, %v1335
        %v1337 = vrot.slane %v1322, %v1336
        %v1338 = vlaneseq
        %v1339 = vshrl.u32 %v1338, 7
        %v1340 = vsub.s32 3, %v1339
        %v1341 = vrot.slane %v1326, %v1340
        %v1342 = vlaneseq
        %v1343 = vshrl.u32 %v1342, 7
        %v1344 = vsub.s32 3, %v1343
        %v1345 = vrot.slane %v1330, %v1344
        %v1346 = vmul.f32 %v1317, %v1337
        %v1347 = vmul.f32 %v1317, %v1341
        %v1348 = vmul.f32 %v1317, %v1345
        %1352 = vrot.lane.b32.xlu0 %v1346, 112
        %v1353 = vpop.permute.xlu0 %1352
        %1354 = vrot.lane.b32.xlu0 %v1347, 112
        %v1355 = vpop.permute.xlu0 %1354
        %1356 = vrot.lane.b32.xlu0 %v1348, 112
        %v1357 = vpop.permute.xlu0 %1356
        %v1358 = vsel %vm1204, %v1353, %v1355
        %v1359 = vsel %vm1204, %v1355, %v1357
        %v1363 = vadd.f32 %v1312, %v1358
        %v1364 = vadd.f32 %v1313, %v1359
        %v1365 = vadd.f32 %v1314, %v1357
        %v1366 = vld [vmem:[#allocation2 + $0x4] sm:$0xff]
        %s1367 = scalar_lea.vmem %s4, 16
        %v1368 = vld [vmem:[%s1367] sm:$0xf]
        %1370 = vset.pattern.permute.xlu0 0
        %1371 = vperm.xlu0 %1370, %v1368
        %v1372 = vpop.permute.xlu0 %1371
        %v1375 = vlaneseq
        %v1376 = vshrl.u32 %v1375, 7
        %v1377 = vsub.s32 0, %v1376
        %v1378 = vrot.slane %v1366, %v1377
        %v1379 = vlaneseq
        %v1380 = vshrl.u32 %v1379, 7
        %v1381 = vsub.s32 4, %v1380
        %v1382 = vrot.slane %v1366, %v1381
        %v1385 = vlaneseq
        %v1386 = vshrl.u32 %v1385, 7
        %v1387 = vsub.s32 0, %v1386
        %v1388 = vrot.slane %v1378, %v1387
        %v1389 = vlaneseq
        %v1390 = vshrl.u32 %v1389, 7
        %v1391 = vsub.s32 0, %v1390
        %v1392 = vrot.slane %v1382, %v1391
        %v1393 = vmul.f32 %v1372, %v1388
        %v1394 = vmul.f32 %v1372, %v1392
        %1397 = vrot.lane.b32.xlu0 %v1393, 111
        %v1398 = vpop.permute.xlu0 %1397
        %1399 = vrot.lane.b32.xlu0 %v1394, 111
        %v1400 = vpop.permute.xlu0 %1399
        %v1401 = vsel %vm554, %v1398, %v1400
        %v1405 = vadd.f32 %v1363, %v1398
        %v1406 = vadd.f32 %v1364, %v1401
        %v1407 = vadd.f32 %v1365, %v1400
        %1408 = vset.pattern.permute.xlu0 1
        %1409 = vperm.xlu0 %1408, %v1368
        %v1410 = vpop.permute.xlu0 %1409
        %v1412 = vlaneseq
        %v1413 = vshrl.u32 %v1412, 7
        %v1414 = vsub.s32 1, %v1413
        %v1415 = vrot.slane %v1366, %v1414
        %v1416 = vlaneseq
        %v1417 = vshrl.u32 %v1416, 7
        %v1418 = vsub.s32 5, %v1417
        %v1419 = vrot.slane %v1366, %v1418
        %v1422 = vlaneseq
        %v1423 = vshrl.u32 %v1422, 7
        %v1424 = vsub.s32 1, %v1423
        %v1425 = vrot.slane %v1415, %v1424
        %v1426 = vlaneseq
        %v1427 = vshrl.u32 %v1426, 7
        %v1428 = vsub.s32 1, %v1427
        %v1429 = vrot.slane %v1419, %v1428
        %v1430 = vmul.f32 %v1410, %v1425
        %v1431 = vmul.f32 %v1410, %v1429
        %1434 = vrot.lane.b32.xlu0 %v1430, 111
        %v1435 = vpop.permute.xlu0 %1434
        %1436 = vrot.lane.b32.xlu0 %v1431, 111
        %v1437 = vpop.permute.xlu0 %1436
        %v1438 = vsel %vm554, %v1435, %v1437
        %v1442 = vadd.f32 %v1405, %v1435
        %v1443 = vadd.f32 %v1406, %v1438
        %v1444 = vadd.f32 %v1407, %v1437
        %1445 = vset.pattern.permute.xlu0 2
        %1446 = vperm.xlu0 %1445, %v1368
        %v1447 = vpop.permute.xlu0 %1446
        %v1449 = vlaneseq
        %v1450 = vshrl.u32 %v1449, 7
        %v1451 = vsub.s32 2, %v1450
        %v1452 = vrot.slane %v1366, %v1451
        %v1453 = vlaneseq
        %v1454 = vshrl.u32 %v1453, 7
        %v1455 = vsub.s32 6, %v1454
        %v1456 = vrot.slane %v1366, %v1455
        %v1459 = vlaneseq
        %v1460 = vshrl.u32 %v1459, 7
        %v1461 = vsub.s32 2, %v1460
        %v1462 = vrot.slane %v1452, %v1461
        %v1463 = vlaneseq
        %v1464 = vshrl.u32 %v1463, 7
        %v1465 = vsub.s32 2, %v1464
        %v1466 = vrot.slane %v1456, %v1465
        %v1467 = vmul.f32 %v1447, %v1462
        %v1468 = vmul.f32 %v1447, %v1466
        %1471 = vrot.lane.b32.xlu0 %v1467, 111
        %v1472 = vpop.permute.xlu0 %1471
        %1473 = vrot.lane.b32.xlu0 %v1468, 111
        %v1474 = vpop.permute.xlu0 %1473
        %v1475 = vsel %vm554, %v1472, %v1474
        %v1479 = vadd.f32 %v1442, %v1472
        %v1480 = vadd.f32 %v1443, %v1475
        %v1481 = vadd.f32 %v1444, %v1474
        %1482 = vset.pattern.permute.xlu0 3
        %1483 = vperm.xlu0 %1482, %v1368
        %v1484 = vpop.permute.xlu0 %1483
        %v1486 = vlaneseq
        %v1487 = vshrl.u32 %v1486, 7
        %v1488 = vsub.s32 3, %v1487
        %v1489 = vrot.slane %v1366, %v1488
        %v1490 = vlaneseq
        %v1491 = vshrl.u32 %v1490, 7
        %v1492 = vsub.s32 7, %v1491
        %v1493 = vrot.slane %v1366, %v1492
        %v1496 = vlaneseq
        %v1497 = vshrl.u32 %v1496, 7
        %v1498 = vsub.s32 3, %v1497
        %v1499 = vrot.slane %v1489, %v1498
        %v1500 = vlaneseq
        %v1501 = vshrl.u32 %v1500, 7
        %v1502 = vsub.s32 3, %v1501
        %v1503 = vrot.slane %v1493, %v1502
        %v1504 = vmul.f32 %v1484, %v1499
        %v1505 = vmul.f32 %v1484, %v1503
        %1508 = vrot.lane.b32.xlu0 %v1504, 111
        %v1509 = vpop.permute.xlu0 %1508
        %1510 = vrot.lane.b32.xlu0 %v1505, 111
        %v1511 = vpop.permute.xlu0 %1510
        %v1512 = vsel %vm554, %v1509, %v1511
        %v1516 = vadd.f32 %v1479, %v1509
        %v1517 = vadd.f32 %v1480, %v1512
        %v1518 = vadd.f32 %v1481, %v1511
        %v1519 = vld [vmem:[#allocation2 + $0x4] sm:$0xff]
        %v1520 = vld [vmem:[#allocation2 + $0xc] sm:$0xf]
        %1521 = vrot.lane.b32.xlu0 %v926, 1
        %v1522 = vpop.permute.xlu0 %1521
        %v1523 = vrot.slane %v1522, 4
        %vm1524 = vcmask 7168
        %v1525 = vsel %vm1524, %v1523, %v1522
        %v1528 = vmul.f32 %v1519, %v1525
        %v1529 = vmul.f32 %v1520, %v1523
        %s1530 = scalar_lea.vmem %s4, 20
        %v1531 = vld [vmem:[%s1530] sm:$0xf]
        %1533 = vset.pattern.permute.xlu0 0
        %1534 = vperm.xlu0 %1533, %v1531
        %v1535 = vpop.permute.xlu0 %1534
        %v1539 = vlaneseq
        %v1540 = vshrl.u32 %v1539, 7
        %v1541 = vsub.s32 0, %v1540
        %v1542 = vrot.slane %v1528, %v1541
        %v1543 = vlaneseq
        %v1544 = vshrl.u32 %v1543, 7
        %v1545 = vsub.s32 4, %v1544
        %v1546 = vrot.slane %v1528, %v1545
        %v1547 = vlaneseq
        %v1548 = vshrl.u32 %v1547, 7
        %v1549 = vsub.s32 0, %v1548
        %v1550 = vrot.slane %v1529, %v1549
        %v1554 = vlaneseq
        %v1555 = vshrl.u32 %v1554, 7
        %v1556 = vsub.s32 0, %v1555
        %v1557 = vrot.slane %v1542, %v1556
        %v1558 = vlaneseq
        %v1559 = vshrl.u32 %v1558, 7
        %v1560 = vsub.s32 0, %v1559
        %v1561 = vrot.slane %v1546, %v1560
        %v1562 = vlaneseq
        %v1563 = vshrl.u32 %v1562, 7
        %v1564 = vsub.s32 0, %v1563
        %v1565 = vrot.slane %v1550, %v1564
        %v1566 = vmul.f32 %v1535, %v1557
        %v1567 = vmul.f32 %v1535, %v1561
        %v1568 = vmul.f32 %v1535, %v1565
        %1572 = vrot.lane.b32.xlu0 %v1566, 110
        %v1573 = vpop.permute.xlu0 %1572
        %1574 = vrot.lane.b32.xlu0 %v1567, 110
        %v1575 = vpop.permute.xlu0 %1574
        %1576 = vrot.lane.b32.xlu0 %v1568, 110
        %v1577 = vpop.permute.xlu0 %1576
        %vm1578 = vcmask 900096
        %v1579 = vsel %vm1578, %v1573, %v1575
        %v1580 = vsel %vm1578, %v1575, %v1577
        %v1584 = vadd.f32 %v1516, %v1573
        %v1585 = vadd.f32 %v1517, %v1579
        %v1586 = vadd.f32 %v1518, %v1580
        %1587 = vset.pattern.permute.xlu0 1
        %1588 = vperm.xlu0 %1587, %v1531
        %v1589 = vpop.permute.xlu0 %1588
        %v1591 = vlaneseq
        %v1592 = vshrl.u32 %v1591, 7
        %v1593 = vsub.s32 1, %v1592
        %v1594 = vrot.slane %v1528, %v1593
        %v1595 = vlaneseq
        %v1596 = vshrl.u32 %v1595, 7
        %v1597 = vsub.s32 5, %v1596
        %v1598 = vrot.slane %v1528, %v1597
        %v1599 = vlaneseq
        %v1600 = vshrl.u32 %v1599, 7
        %v1601 = vsub.s32 1, %v1600
        %v1602 = vrot.slane %v1529, %v1601
        %v1606 = vlaneseq
        %v1607 = vshrl.u32 %v1606, 7
        %v1608 = vsub.s32 1, %v1607
        %v1609 = vrot.slane %v1594, %v1608
        %v1610 = vlaneseq
        %v1611 = vshrl.u32 %v1610, 7
        %v1612 = vsub.s32 1, %v1611
        %v1613 = vrot.slane %v1598, %v1612
        %v1614 = vlaneseq
        %v1615 = vshrl.u32 %v1614, 7
        %v1616 = vsub.s32 1, %v1615
        %v1617 = vrot.slane %v1602, %v1616
        %v1618 = vmul.f32 %v1589, %v1609
        %v1619 = vmul.f32 %v1589, %v1613
        %v1620 = vmul.f32 %v1589, %v1617
        %1624 = vrot.lane.b32.xlu0 %v1618, 110
        %v1625 = vpop.permute.xlu0 %1624
        %1626 = vrot.lane.b32.xlu0 %v1619, 110
        %v1627 = vpop.permute.xlu0 %1626
        %1628 = vrot.lane.b32.xlu0 %v1620, 110
        %v1629 = vpop.permute.xlu0 %1628
        %v1630 = vsel %vm1578, %v1625, %v1627
        %v1631 = vsel %vm1578, %v1627, %v1629
        %v1635 = vadd.f32 %v1584, %v1625
        %v1636 = vadd.f32 %v1585, %v1630
        %v1637 = vadd.f32 %v1586, %v1631
        %1638 = vset.pattern.permute.xlu0 2
        %1639 = vperm.xlu0 %1638, %v1531
        %v1640 = vpop.permute.xlu0 %1639
        %v1642 = vlaneseq
        %v1643 = vshrl.u32 %v1642, 7
        %v1644 = vsub.s32 2, %v1643
        %v1645 = vrot.slane %v1528, %v1644
        %v1646 = vlaneseq
        %v1647 = vshrl.u32 %v1646, 7
        %v1648 = vsub.s32 6, %v1647
        %v1649 = vrot.slane %v1528, %v1648
        %v1650 = vlaneseq
        %v1651 = vshrl.u32 %v1650, 7
        %v1652 = vsub.s32 2, %v1651
        %v1653 = vrot.slane %v1529, %v1652
        %v1657 = vlaneseq
        %v1658 = vshrl.u32 %v1657, 7
        %v1659 = vsub.s32 2, %v1658
        %v1660 = vrot.slane %v1645, %v1659
        %v1661 = vlaneseq
        %v1662 = vshrl.u32 %v1661, 7
        %v1663 = vsub.s32 2, %v1662
        %v1664 = vrot.slane %v1649, %v1663
        %v1665 = vlaneseq
        %v1666 = vshrl.u32 %v1665, 7
        %v1667 = vsub.s32 2, %v1666
        %v1668 = vrot.slane %v1653, %v1667
        %v1669 = vmul.f32 %v1640, %v1660
        %v1670 = vmul.f32 %v1640, %v1664
        %v1671 = vmul.f32 %v1640, %v1668
        %1675 = vrot.lane.b32.xlu0 %v1669, 110
        %v1676 = vpop.permute.xlu0 %1675
        %1677 = vrot.lane.b32.xlu0 %v1670, 110
        %v1678 = vpop.permute.xlu0 %1677
        %1679 = vrot.lane.b32.xlu0 %v1671, 110
        %v1680 = vpop.permute.xlu0 %1679
        %v1681 = vsel %vm1578, %v1676, %v1678
        %v1682 = vsel %vm1578, %v1678, %v1680
        %v1686 = vadd.f32 %v1635, %v1676
        %v1687 = vadd.f32 %v1636, %v1681
        %v1688 = vadd.f32 %v1637, %v1682
        %1689 = vset.pattern.permute.xlu0 3
        %1690 = vperm.xlu0 %1689, %v1531
        %v1691 = vpop.permute.xlu0 %1690
        %v1693 = vlaneseq
        %v1694 = vshrl.u32 %v1693, 7
        %v1695 = vsub.s32 3, %v1694
        %v1696 = vrot.slane %v1528, %v1695
        %v1697 = vlaneseq
        %v1698 = vshrl.u32 %v1697, 7
        %v1699 = vsub.s32 7, %v1698
        %v1700 = vrot.slane %v1528, %v1699
        %v1701 = vlaneseq
        %v1702 = vshrl.u32 %v1701, 7
        %v1703 = vsub.s32 3, %v1702
        %v1704 = vrot.slane %v1529, %v1703
        %v1708 = vlaneseq
        %v1709 = vshrl.u32 %v1708, 7
        %v1710 = vsub.s32 3, %v1709
        %v1711 = vrot.slane %v1696, %v1710
        %v1712 = vlaneseq
        %v1713 = vshrl.u32 %v1712, 7
        %v1714 = vsub.s32 3, %v1713
        %v1715 = vrot.slane %v1700, %v1714
        %v1716 = vlaneseq
        %v1717 = vshrl.u32 %v1716, 7
        %v1718 = vsub.s32 3, %v1717
        %v1719 = vrot.slane %v1704, %v1718
        %v1720 = vmul.f32 %v1691, %v1711
        %v1721 = vmul.f32 %v1691, %v1715
        %v1722 = vmul.f32 %v1691, %v1719
        %1726 = vrot.lane.b32.xlu0 %v1720, 110
        %v1727 = vpop.permute.xlu0 %1726
        %1728 = vrot.lane.b32.xlu0 %v1721, 110
        %v1729 = vpop.permute.xlu0 %1728
        %1730 = vrot.lane.b32.xlu0 %v1722, 110
        %v1731 = vpop.permute.xlu0 %1730
        %v1732 = vsel %vm1578, %v1727, %v1729
        %v1733 = vsel %vm1578, %v1729, %v1731
        %v1737 = vadd.f32 %v1686, %v1727
        %v1738 = vadd.f32 %v1687, %v1732
        %v1739 = vadd.f32 %v1688, %v1733
        %v1740 = vld [vmem:[#allocation2 + $0x4] sm:$0xff]
        %v1741 = vld [vmem:[#allocation2 + $0xc] sm:$0xf]
        %1742 = vrot.lane.b32.xlu0 %v550, 15
        %v1743 = vpop.permute.xlu0 %1742
        %v1744 = vrot.slane %v1743, 4
        %vm1745 = vcmask 121856
        %v1746 = vsel %vm1745, %v1744, %v1743
        %v1749 = vmul.f32 %v1740, %v1746
        %v1750 = vmul.f32 %v1741, %v1744
        %s1751 = scalar_lea.vmem %s4, 24
        %v1752 = vld [vmem:[%s1751] sm:$0xf]
        %1754 = vset.pattern.permute.xlu0 0
        %1755 = vperm.xlu0 %1754, %v1752
        %v1756 = vpop.permute.xlu0 %1755
        %v1760 = vlaneseq
        %v1761 = vshrl.u32 %v1760, 7
        %v1762 = vsub.s32 0, %v1761
        %v1763 = vrot.slane %v1749, %v1762
        %v1764 = vlaneseq
        %v1765 = vshrl.u32 %v1764, 7
        %v1766 = vsub.s32 4, %v1765
        %v1767 = vrot.slane %v1749, %v1766
        %v1768 = vlaneseq
        %v1769 = vshrl.u32 %v1768, 7
        %v1770 = vsub.s32 0, %v1769
        %v1771 = vrot.slane %v1750, %v1770
        %v1775 = vlaneseq
        %v1776 = vshrl.u32 %v1775, 7
        %v1777 = vsub.s32 0, %v1776
        %v1778 = vrot.slane %v1763, %v1777
        %v1779 = vlaneseq
        %v1780 = vshrl.u32 %v1779, 7
        %v1781 = vsub.s32 0, %v1780
        %v1782 = vrot.slane %v1767, %v1781
        %v1783 = vlaneseq
        %v1784 = vshrl.u32 %v1783, 7
        %v1785 = vsub.s32 0, %v1784
        %v1786 = vrot.slane %v1771, %v1785
        %v1787 = vmul.f32 %v1756, %v1778
        %v1788 = vmul.f32 %v1756, %v1782
        %v1789 = vmul.f32 %v1756, %v1786
        %1793 = vrot.lane.b32.xlu0 %v1787, 96
        %v1794 = vpop.permute.xlu0 %1793
        %1795 = vrot.lane.b32.xlu0 %v1788, 96
        %v1796 = vpop.permute.xlu0 %1795
        %1797 = vrot.lane.b32.xlu0 %v1789, 96
        %v1798 = vpop.permute.xlu0 %1797
        %vm1799 = vcmask 785408
        %v1800 = vsel %vm1799, %v1794, %v1796
        %v1801 = vsel %vm1799, %v1796, %v1798
        %v1805 = vadd.f32 %v1737, %v1794
        %v1806 = vadd.f32 %v1738, %v1800
        %v1807 = vadd.f32 %v1739, %v1801
        %1808 = vset.pattern.permute.xlu0 1
        %1809 = vperm.xlu0 %1808, %v1752
        %v1810 = vpop.permute.xlu0 %1809
        %v1812 = vlaneseq
        %v1813 = vshrl.u32 %v1812, 7
        %v1814 = vsub.s32 1, %v1813
        %v1815 = vrot.slane %v1749, %v1814
        %v1816 = vlaneseq
        %v1817 = vshrl.u32 %v1816, 7
        %v1818 = vsub.s32 5, %v1817
        %v1819 = vrot.slane %v1749, %v1818
        %v1820 = vlaneseq
        %v1821 = vshrl.u32 %v1820, 7
        %v1822 = vsub.s32 1, %v1821
        %v1823 = vrot.slane %v1750, %v1822
        %v1827 = vlaneseq
        %v1828 = vshrl.u32 %v1827, 7
        %v1829 = vsub.s32 1, %v1828
        %v1830 = vrot.slane %v1815, %v1829
        %v1831 = vlaneseq
        %v1832 = vshrl.u32 %v1831, 7
        %v1833 = vsub.s32 1, %v1832
        %v1834 = vrot.slane %v1819, %v1833
        %v1835 = vlaneseq
        %v1836 = vshrl.u32 %v1835, 7
        %v1837 = vsub.s32 1, %v1836
        %v1838 = vrot.slane %v1823, %v1837
        %v1839 = vmul.f32 %v1810, %v1830
        %v1840 = vmul.f32 %v1810, %v1834
        %v1841 = vmul.f32 %v1810, %v1838
        %1845 = vrot.lane.b32.xlu0 %v1839, 96
        %v1846 = vpop.permute.xlu0 %1845
        %1847 = vrot.lane.b32.xlu0 %v1840, 96
        %v1848 = vpop.permute.xlu0 %1847
        %1849 = vrot.lane.b32.xlu0 %v1841, 96
        %v1850 = vpop.permute.xlu0 %1849
        %v1851 = vsel %vm1799, %v1846, %v1848
        %v1852 = vsel %vm1799, %v1848, %v1850
        %v1856 = vadd.f32 %v1805, %v1846
        %v1857 = vadd.f32 %v1806, %v1851
        %v1858 = vadd.f32 %v1807, %v1852
        %1859 = vset.pattern.permute.xlu0 2
        %1860 = vperm.xlu0 %1859, %v1752
        %v1861 = vpop.permute.xlu0 %1860
        %v1863 = vlaneseq
        %v1864 = vshrl.u32 %v1863, 7
        %v1865 = vsub.s32 2, %v1864
        %v1866 = vrot.slane %v1749, %v1865
        %v1867 = vlaneseq
        %v1868 = vshrl.u32 %v1867, 7
        %v1869 = vsub.s32 6, %v1868
        %v1870 = vrot.slane %v1749, %v1869
        %v1871 = vlaneseq
        %v1872 = vshrl.u32 %v1871, 7
        %v1873 = vsub.s32 2, %v1872
        %v1874 = vrot.slane %v1750, %v1873
        %v1878 = vlaneseq
        %v1879 = vshrl.u32 %v1878, 7
        %v1880 = vsub.s32 2, %v1879
        %v1881 = vrot.slane %v1866, %v1880
        %v1882 = vlaneseq
        %v1883 = vshrl.u32 %v1882, 7
        %v1884 = vsub.s32 2, %v1883
        %v1885 = vrot.slane %v1870, %v1884
        %v1886 = vlaneseq
        %v1887 = vshrl.u32 %v1886, 7
        %v1888 = vsub.s32 2, %v1887
        %v1889 = vrot.slane %v1874, %v1888
        %v1890 = vmul.f32 %v1861, %v1881
        %v1891 = vmul.f32 %v1861, %v1885
        %v1892 = vmul.f32 %v1861, %v1889
        %1896 = vrot.lane.b32.xlu0 %v1890, 96
        %v1897 = vpop.permute.xlu0 %1896
        %1898 = vrot.lane.b32.xlu0 %v1891, 96
        %v1899 = vpop.permute.xlu0 %1898
        %1900 = vrot.lane.b32.xlu0 %v1892, 96
        %v1901 = vpop.permute.xlu0 %1900
        %v1902 = vsel %vm1799, %v1897, %v1899
        %v1903 = vsel %vm1799, %v1899, %v1901
        %v1907 = vadd.f32 %v1856, %v1897
        %v1908 = vadd.f32 %v1857, %v1902
        %v1909 = vadd.f32 %v1858, %v1903
        %1910 = vset.pattern.permute.xlu0 3
        %1911 = vperm.xlu0 %1910, %v1752
        %v1912 = vpop.permute.xlu0 %1911
        %v1914 = vlaneseq
        %v1915 = vshrl.u32 %v1914, 7
        %v1916 = vsub.s32 3, %v1915
        %v1917 = vrot.slane %v1749, %v1916
        %v1918 = vlaneseq
        %v1919 = vshrl.u32 %v1918, 7
        %v1920 = vsub.s32 7, %v1919
        %v1921 = vrot.slane %v1749, %v1920
        %v1922 = vlaneseq
        %v1923 = vshrl.u32 %v1922, 7
        %v1924 = vsub.s32 3, %v1923
        %v1925 = vrot.slane %v1750, %v1924
        %v1929 = vlaneseq
        %v1930 = vshrl.u32 %v1929, 7
        %v1931 = vsub.s32 3, %v1930
        %v1932 = vrot.slane %v1917, %v1931
        %v1933 = vlaneseq
        %v1934 = vshrl.u32 %v1933, 7
        %v1935 = vsub.s32 3, %v1934
        %v1936 = vrot.slane %v1921, %v1935
        %v1937 = vlaneseq
        %v1938 = vshrl.u32 %v1937, 7
        %v1939 = vsub.s32 3, %v1938
        %v1940 = vrot.slane %v1925, %v1939
        %v1941 = vmul.f32 %v1912, %v1932
        %v1942 = vmul.f32 %v1912, %v1936
        %v1943 = vmul.f32 %v1912, %v1940
        %1947 = vrot.lane.b32.xlu0 %v1941, 96
        %v1948 = vpop.permute.xlu0 %1947
        %1949 = vrot.lane.b32.xlu0 %v1942, 96
        %v1950 = vpop.permute.xlu0 %1949
        %1951 = vrot.lane.b32.xlu0 %v1943, 96
        %v1952 = vpop.permute.xlu0 %1951
        %v1953 = vsel %vm1799, %v1948, %v1950
        %v1954 = vsel %vm1799, %v1950, %v1952
        %v1958 = vadd.f32 %v1907, %v1948
        %v1959 = vadd.f32 %v1908, %v1953
        %v1960 = vadd.f32 %v1909, %v1954
        %v1961 = vld [vmem:[#allocation2 + $0x4] sm:$0xff]
        %v1962 = vld [vmem:[#allocation2 + $0xc] sm:$0xf]
        %s1963 = scalar_lea.vmem %s4, 28
        %v1964 = vld [vmem:[%s1963] sm:$0xf]
        %1966 = vset.pattern.permute.xlu0 0
        %1967 = vperm.xlu0 %1966, %v1964
        %v1968 = vpop.permute.xlu0 %1967
        %v1972 = vlaneseq
        %v1973 = vshrl.u32 %v1972, 7
        %v1974 = vsub.s32 0, %v1973
        %v1975 = vrot.slane %v1961, %v1974
        %v1976 = vlaneseq
        %v1977 = vshrl.u32 %v1976, 7
        %v1978 = vsub.s32 4, %v1977
        %v1979 = vrot.slane %v1961, %v1978
        %v1980 = vlaneseq
        %v1981 = vshrl.u32 %v1980, 7
        %v1982 = vsub.s32 0, %v1981
        %v1983 = vrot.slane %v1962, %v1982
        %v1987 = vlaneseq
        %v1988 = vshrl.u32 %v1987, 7
        %v1989 = vsub.s32 0, %v1988
        %v1990 = vrot.slane %v1975, %v1989
        %v1991 = vlaneseq
        %v1992 = vshrl.u32 %v1991, 7
        %v1993 = vsub.s32 0, %v1992
        %v1994 = vrot.slane %v1979, %v1993
        %v1995 = vlaneseq
        %v1996 = vshrl.u32 %v1995, 7
        %v1997 = vsub.s32 0, %v1996
        %v1998 = vrot.slane %v1983, %v1997
        %v1999 = vmul.f32 %v1968, %v1990
        %v2000 = vmul.f32 %v1968, %v1994
        %v2001 = vmul.f32 %v1968, %v1998
        %2005 = vrot.lane.b32.xlu0 %v1999, 95
        %v2006 = vpop.permute.xlu0 %2005
        %2007 = vrot.lane.b32.xlu0 %v2000, 95
        %v2008 = vpop.permute.xlu0 %2007
        %2009 = vrot.lane.b32.xlu0 %v2001, 95
        %v2010 = vpop.permute.xlu0 %2009
        %vm2011 = vcmask 777216
        %v2012 = vsel %vm2011, %v2006, %v2008
        %v2013 = vsel %vm2011, %v2008, %v2010
        %v2017 = vadd.f32 %v1958, %v2006
        %v2018 = vadd.f32 %v1959, %v2012
        %v2019 = vadd.f32 %v1960, %v2013
        %2020 = vset.pattern.permute.xlu0 1
        %2021 = vperm.xlu0 %2020, %v1964
        %v2022 = vpop.permute.xlu0 %2021
        %v2024 = vlaneseq
        %v2025 = vshrl.u32 %v2024, 7
        %v2026 = vsub.s32 1, %v2025
        %v2027 = vrot.slane %v1961, %v2026
        %v2028 = vlaneseq
        %v2029 = vshrl.u32 %v2028, 7
        %v2030 = vsub.s32 5, %v2029
        %v2031 = vrot.slane %v1961, %v2030
        %v2032 = vlaneseq
        %v2033 = vshrl.u32 %v2032, 7
        %v2034 = vsub.s32 1, %v2033
        %v2035 = vrot.slane %v1962, %v2034
        %v2039 = vlaneseq
        %v2040 = vshrl.u32 %v2039, 7
        %v2041 = vsub.s32 1, %v2040
        %v2042 = vrot.slane %v2027, %v2041
        %v2043 = vlaneseq
        %v2044 = vshrl.u32 %v2043, 7
        %v2045 = vsub.s32 1, %v2044
        %v2046 = vrot.slane %v2031, %v2045
        %v2047 = vlaneseq
        %v2048 = vshrl.u32 %v2047, 7
        %v2049 = vsub.s32 1, %v2048
        %v2050 = vrot.slane %v2035, %v2049
        %v2051 = vmul.f32 %v2022, %v2042
        %v2052 = vmul.f32 %v2022, %v2046
        %v2053 = vmul.f32 %v2022, %v2050
        %2057 = vrot.lane.b32.xlu0 %v2051, 95
        %v2058 = vpop.permute.xlu0 %2057
        %2059 = vrot.lane.b32.xlu0 %v2052, 95
        %v2060 = vpop.permute.xlu0 %2059
        %2061 = vrot.lane.b32.xlu0 %v2053, 95
        %v2062 = vpop.permute.xlu0 %2061
        %v2063 = vsel %vm2011, %v2058, %v2060
        %v2064 = vsel %vm2011, %v2060, %v2062
        %v2068 = vadd.f32 %v2017, %v2058
        %v2069 = vadd.f32 %v2018, %v2063
        %v2070 = vadd.f32 %v2019, %v2064
        %2071 = vset.pattern.permute.xlu0 2
        %2072 = vperm.xlu0 %2071, %v1964
        %v2073 = vpop.permute.xlu0 %2072
        %v2075 = vlaneseq
        %v2076 = vshrl.u32 %v2075, 7
        %v2077 = vsub.s32 2, %v2076
        %v2078 = vrot.slane %v1961, %v2077
        %v2079 = vlaneseq
        %v2080 = vshrl.u32 %v2079, 7
        %v2081 = vsub.s32 6, %v2080
        %v2082 = vrot.slane %v1961, %v2081
        %v2083 = vlaneseq
        %v2084 = vshrl.u32 %v2083, 7
        %v2085 = vsub.s32 2, %v2084
        %v2086 = vrot.slane %v1962, %v2085
        %v2090 = vlaneseq
        %v2091 = vshrl.u32 %v2090, 7
        %v2092 = vsub.s32 2, %v2091
        %v2093 = vrot.slane %v2078, %v2092
        %v2094 = vlaneseq
        %v2095 = vshrl.u32 %v2094, 7
        %v2096 = vsub.s32 2, %v2095
        %v2097 = vrot.slane %v2082, %v2096
        %v2098 = vlaneseq
        %v2099 = vshrl.u32 %v2098, 7
        %v2100 = vsub.s32 2, %v2099
        %v2101 = vrot.slane %v2086, %v2100
        %v2102 = vmul.f32 %v2073, %v2093
        %v2103 = vmul.f32 %v2073, %v2097
        %v2104 = vmul.f32 %v2073, %v2101
        %2108 = vrot.lane.b32.xlu0 %v2102, 95
        %v2109 = vpop.permute.xlu0 %2108
        %2110 = vrot.lane.b32.xlu0 %v2103, 95
        %v2111 = vpop.permute.xlu0 %2110
        %2112 = vrot.lane.b32.xlu0 %v2104, 95
        %v2113 = vpop.permute.xlu0 %2112
        %v2114 = vsel %vm2011, %v2109, %v2111
        %v2115 = vsel %vm2011, %v2111, %v2113
        %v2119 = vadd.f32 %v2068, %v2109
        %v2120 = vadd.f32 %v2069, %v2114
        %v2121 = vadd.f32 %v2070, %v2115
        %2122 = vset.pattern.permute.xlu0 3
        %2123 = vperm.xlu0 %2122, %v1964
        %v2124 = vpop.permute.xlu0 %2123
        %v2126 = vlaneseq
        %v2127 = vshrl.u32 %v2126, 7
        %v2128 = vsub.s32 3, %v2127
        %v2129 = vrot.slane %v1961, %v2128
        %v2130 = vlaneseq
        %v2131 = vshrl.u32 %v2130, 7
        %v2132 = vsub.s32 7, %v2131
        %v2133 = vrot.slane %v1961, %v2132
        %v2134 = vlaneseq
        %v2135 = vshrl.u32 %v2134, 7
        %v2136 = vsub.s32 3, %v2135
        %v2137 = vrot.slane %v1962, %v2136
        %v2141 = vlaneseq
        %v2142 = vshrl.u32 %v2141, 7
        %v2143 = vsub.s32 3, %v2142
        %v2144 = vrot.slane %v2129, %v2143
        %v2145 = vlaneseq
        %v2146 = vshrl.u32 %v2145, 7
        %v2147 = vsub.s32 3, %v2146
        %v2148 = vrot.slane %v2133, %v2147
        %v2149 = vlaneseq
        %v2150 = vshrl.u32 %v2149, 7
        %v2151 = vsub.s32 3, %v2150
        %v2152 = vrot.slane %v2137, %v2151
        %v2153 = vmul.f32 %v2124, %v2144
        %v2154 = vmul.f32 %v2124, %v2148
        %v2155 = vmul.f32 %v2124, %v2152
        %2159 = vrot.lane.b32.xlu0 %v2153, 95
        %v2160 = vpop.permute.xlu0 %2159
        %2161 = vrot.lane.b32.xlu0 %v2154, 95
        %v2162 = vpop.permute.xlu0 %2161
        %2163 = vrot.lane.b32.xlu0 %v2155, 95
        %v2164 = vpop.permute.xlu0 %2163
        %v2165 = vsel %vm2011, %v2160, %v2162
        %v2166 = vsel %vm2011, %v2162, %v2164
        %v2170 = vadd.f32 %v2119, %v2160
        %v2171 = vadd.f32 %v2120, %v2165
        %v2172 = vadd.f32 %v2121, %v2166
        %2173 = vrot.lane.b32.xlu0 %v926, 17
        %v2174 = vpop.permute.xlu0 %2173
        %v2175 = vrot.slane %v2174, 4
        %vm2176 = vcmask 138240
        %v2177 = vsel %vm2176, %v2175, %v2174
        %v2180 = vmul.f32 %v1961, %v2177
        %v2181 = vmul.f32 %v1962, %v2175
        %s2182 = scalar_lea.vmem %s4, 32
        %v2183 = vld [vmem:[%s2182] sm:$0xf]
        %2185 = vset.pattern.permute.xlu0 0
        %2186 = vperm.xlu0 %2185, %v2183
        %v2187 = vpop.permute.xlu0 %2186
        %v2191 = vlaneseq
        %v2192 = vshrl.u32 %v2191, 7
        %v2193 = vsub.s32 0, %v2192
        %v2194 = vrot.slane %v2180, %v2193
        %v2195 = vlaneseq
        %v2196 = vshrl.u32 %v2195, 7
        %v2197 = vsub.s32 4, %v2196
        %v2198 = vrot.slane %v2180, %v2197
        %v2199 = vlaneseq
        %v2200 = vshrl.u32 %v2199, 7
        %v2201 = vsub.s32 0, %v2200
        %v2202 = vrot.slane %v2181, %v2201
        %v2206 = vlaneseq
        %v2207 = vshrl.u32 %v2206, 7
        %v2208 = vsub.s32 0, %v2207
        %v2209 = vrot.slane %v2194, %v2208
        %v2210 = vlaneseq
        %v2211 = vshrl.u32 %v2210, 7
        %v2212 = vsub.s32 0, %v2211
        %v2213 = vrot.slane %v2198, %v2212
        %v2214 = vlaneseq
        %v2215 = vshrl.u32 %v2214, 7
        %v2216 = vsub.s32 0, %v2215
        %v2217 = vrot.slane %v2202, %v2216
        %v2218 = vmul.f32 %v2187, %v2209
        %v2219 = vmul.f32 %v2187, %v2213
        %v2220 = vmul.f32 %v2187, %v2217
        %2224 = vrot.lane.b32.xlu0 %v2218, 94
        %v2225 = vpop.permute.xlu0 %2224
        %2226 = vrot.lane.b32.xlu0 %v2219, 94
        %v2227 = vpop.permute.xlu0 %2226
        %2228 = vrot.lane.b32.xlu0 %v2220, 94
        %v2229 = vpop.permute.xlu0 %2228
        %vm2230 = vcmask 769024
        %v2231 = vsel %vm2230, %v2225, %v2227
        %v2232 = vsel %vm2230, %v2227, %v2229
        %v2236 = vadd.f32 %v2170, %v2225
        %v2237 = vadd.f32 %v2171, %v2231
        %v2238 = vadd.f32 %v2172, %v2232
        %2239 = vset.pattern.permute.xlu0 1
        %2240 = vperm.xlu0 %2239, %v2183
        %v2241 = vpop.permute.xlu0 %2240
        %v2243 = vlaneseq
        %v2244 = vshrl.u32 %v2243, 7
        %v2245 = vsub.s32 1, %v2244
        %v2246 = vrot.slane %v2180, %v2245
        %v2247 = vlaneseq
        %v2248 = vshrl.u32 %v2247, 7
        %v2249 = vsub.s32 5, %v2248
        %v2250 = vrot.slane %v2180, %v2249
        %v2251 = vlaneseq
        %v2252 = vshrl.u32 %v2251, 7
        %v2253 = vsub.s32 1, %v2252
        %v2254 = vrot.slane %v2181, %v2253
        %v2258 = vlaneseq
        %v2259 = vshrl.u32 %v2258, 7
        %v2260 = vsub.s32 1, %v2259
        %v2261 = vrot.slane %v2246, %v2260
        %v2262 = vlaneseq
        %v2263 = vshrl.u32 %v2262, 7
        %v2264 = vsub.s32 1, %v2263
        %v2265 = vrot.slane %v2250, %v2264
        %v2266 = vlaneseq
        %v2267 = vshrl.u32 %v2266, 7
        %v2268 = vsub.s32 1, %v2267
        %v2269 = vrot.slane %v2254, %v2268
        %v2270 = vmul.f32 %v2241, %v2261
        %v2271 = vmul.f32 %v2241, %v2265
        %v2272 = vmul.f32 %v2241, %v2269
        %2276 = vrot.lane.b32.xlu0 %v2270, 94
        %v2277 = vpop.permute.xlu0 %2276
        %2278 = vrot.lane.b32.xlu0 %v2271, 94
        %v2279 = vpop.permute.xlu0 %2278
        %2280 = vrot.lane.b32.xlu0 %v2272, 94
        %v2281 = vpop.permute.xlu0 %2280
        %v2282 = vsel %vm2230, %v2277, %v2279
        %v2283 = vsel %vm2230, %v2279, %v2281
        %v2287 = vadd.f32 %v2236, %v2277
        %v2288 = vadd.f32 %v2237, %v2282
        %v2289 = vadd.f32 %v2238, %v2283
        %2290 = vset.pattern.permute.xlu0 2
        %2291 = vperm.xlu0 %2290, %v2183
        %v2292 = vpop.permute.xlu0 %2291
        %v2294 = vlaneseq
        %v2295 = vshrl.u32 %v2294, 7
        %v2296 = vsub.s32 2, %v2295
        %v2297 = vrot.slane %v2180, %v2296
        %v2298 = vlaneseq
        %v2299 = vshrl.u32 %v2298, 7
        %v2300 = vsub.s32 6, %v2299
        %v2301 = vrot.slane %v2180, %v2300
        %v2302 = vlaneseq
        %v2303 = vshrl.u32 %v2302, 7
        %v2304 = vsub.s32 2, %v2303
        %v2305 = vrot.slane %v2181, %v2304
        %v2309 = vlaneseq
        %v2310 = vshrl.u32 %v2309, 7
        %v2311 = vsub.s32 2, %v2310
        %v2312 = vrot.slane %v2297, %v2311
        %v2313 = vlaneseq
        %v2314 = vshrl.u32 %v2313, 7
        %v2315 = vsub.s32 2, %v2314
        %v2316 = vrot.slane %v2301, %v2315
        %v2317 = vlaneseq
        %v2318 = vshrl.u32 %v2317, 7
        %v2319 = vsub.s32 2, %v2318
        %v2320 = vrot.slane %v2305, %v2319
        %v2321 = vmul.f32 %v2292, %v2312
        %v2322 = vmul.f32 %v2292, %v2316
        %v2323 = vmul.f32 %v2292, %v2320
        %2327 = vrot.lane.b32.xlu0 %v2321, 94
        %v2328 = vpop.permute.xlu0 %2327
        %2329 = vrot.lane.b32.xlu0 %v2322, 94
        %v2330 = vpop.permute.xlu0 %2329
        %2331 = vrot.lane.b32.xlu0 %v2323, 94
        %v2332 = vpop.permute.xlu0 %2331
        %v2333 = vsel %vm2230, %v2328, %v2330
        %v2334 = vsel %vm2230, %v2330, %v2332
        %v2338 = vadd.f32 %v2287, %v2328
        %v2339 = vadd.f32 %v2288, %v2333
        %v2340 = vadd.f32 %v2289, %v2334
        %2341 = vset.pattern.permute.xlu0 3
        %2342 = vperm.xlu0 %2341, %v2183
        %v2343 = vpop.permute.xlu0 %2342
        %v2345 = vlaneseq
        %v2346 = vshrl.u32 %v2345, 7
        %v2347 = vsub.s32 3, %v2346
        %v2348 = vrot.slane %v2180, %v2347
        %v2349 = vlaneseq
        %v2350 = vshrl.u32 %v2349, 7
        %v2351 = vsub.s32 7, %v2350
        %v2352 = vrot.slane %v2180, %v2351
        %v2353 = vlaneseq
        %v2354 = vshrl.u32 %v2353, 7
        %v2355 = vsub.s32 3, %v2354
        %v2356 = vrot.slane %v2181, %v2355
        %v2360 = vlaneseq
        %v2361 = vshrl.u32 %v2360, 7
        %v2362 = vsub.s32 3, %v2361
        %v2363 = vrot.slane %v2348, %v2362
        %v2364 = vlaneseq
        %v2365 = vshrl.u32 %v2364, 7
        %v2366 = vsub.s32 3, %v2365
        %v2367 = vrot.slane %v2352, %v2366
        %v2368 = vlaneseq
        %v2369 = vshrl.u32 %v2368, 7
        %v2370 = vsub.s32 3, %v2369
        %v2371 = vrot.slane %v2356, %v2370
        %v2372 = vmul.f32 %v2343, %v2363
        %v2373 = vmul.f32 %v2343, %v2367
        %v2374 = vmul.f32 %v2343, %v2371
        %2378 = vrot.lane.b32.xlu0 %v2372, 94
        %v2379 = vpop.permute.xlu0 %2378
        %2380 = vrot.lane.b32.xlu0 %v2373, 94
        %v2381 = vpop.permute.xlu0 %2380
        %2382 = vrot.lane.b32.xlu0 %v2374, 94
        %v2383 = vpop.permute.xlu0 %2382
        %v2384 = vsel %vm2230, %v2379, %v2381
        %v2385 = vsel %vm2230, %v2381, %v2383
        %v2389 = vadd.f32 %v2338, %v2379
        %v2390 = vadd.f32 %v2339, %v2384
        %v2391 = vadd.f32 %v2340, %v2385
        %v2392 = vld [vmem:[%s5] sm:$0xf]
        %2394 = vset.pattern.permute.xlu0 0
        %2395 = vperm.xlu0 %2394, %v2392
        %v2396 = vpop.permute.xlu0 %2395
        %v2398 = vadd.f32 %v2389, %v2396
        %v2399 = vadd.f32 %v2390, %v2396
        %v2400 = vadd.f32 %v2391, %v2396
        %v2401 = vmax.f32 %v2398, 0.0
        %v2402 = vmax.f32 %v2399, 0.0
        %v2403 = vmax.f32 %v2400, 0.0
        %v2407 = vcombine.low %v2401, %v2402
        %2408 = vrot.lane.b32.xlu0 %v2407, 17
        %v2409 = vpop.permute.xlu0 %2408
        %2410 = vrot.lane.b32.xlu0 %v2403, 17
        %v2411 = vpop.permute.xlu0 %2410
        %v2412 = vrot.slane %v2409, 4
        %v2413 = vrot.slane %v2411, 4
        %v2414 = vsel %vm503, %v2412, %v2413
        %v2415 = vsel %vm2176, %v2409, %v2414
        %2417 = vst [vmem:[#allocation2 + $0x4] sm:$0xff] %v2415
        %v2418 = vld [vmem:[#allocation2] sm:$0xff]
        %v2419 = vld [vmem:[#allocation2 + $0x8] sm:$0xf]
        %v2420 = vmul.f32 %v2418, %v555
        %v2421 = vmul.f32 %v2419, %v553
        %v2422 = vld [vmem:[%s6] sm:$0xf]
        %2424 = vset.pattern.permute.xlu0 0
        %2425 = vperm.xlu0 %2424, %v2422
        %v2426 = vpop.permute.xlu0 %2425
        %v2430 = vlaneseq
        %v2431 = vshrl.u32 %v2430, 7
        %v2432 = vsub.s32 0, %v2431
        %v2433 = vrot.slane %v2420, %v2432
        %v2434 = vlaneseq
        %v2435 = vshrl.u32 %v2434, 7
        %v2436 = vsub.s32 4, %v2435
        %v2437 = vrot.slane %v2420, %v2436
        %v2438 = vlaneseq
        %v2439 = vshrl.u32 %v2438, 7
        %v2440 = vsub.s32 0, %v2439
        %v2441 = vrot.slane %v2421, %v2440
        %v2445 = vlaneseq
        %v2446 = vshrl.u32 %v2445, 7
        %v2447 = vsub.s32 0, %v2446
        %v2448 = vrot.slane %v2433, %v2447
        %v2449 = vlaneseq
        %v2450 = vshrl.u32 %v2449, 7
        %v2451 = vsub.s32 0, %v2450
        %v2452 = vrot.slane %v2437, %v2451
        %v2453 = vlaneseq
        %v2454 = vshrl.u32 %v2453, 7
        %v2455 = vsub.s32 0, %v2454
        %v2456 = vrot.slane %v2441, %v2455
        %v2457 = vmul.f32 %v2426, %v2448
        %v2458 = vmul.f32 %v2426, %v2452
        %v2459 = vmul.f32 %v2426, %v2456
        %v2460 = vadd.f32 %v2457, 0.0
        %v2461 = vadd.f32 %v2458, 0.0
        %v2462 = vadd.f32 %v2459, 0.0
        %2463 = vset.pattern.permute.xlu0 1
        %2464 = vperm.xlu0 %2463, %v2422
        %v2465 = vpop.permute.xlu0 %2464
        %v2467 = vlaneseq
        %v2468 = vshrl.u32 %v2467, 7
        %v2469 = vsub.s32 1, %v2468
        %v2470 = vrot.slane %v2420, %v2469
        %v2471 = vlaneseq
        %v2472 = vshrl.u32 %v2471, 7
        %v2473 = vsub.s32 5, %v2472
        %v2474 = vrot.slane %v2420, %v2473
        %v2475 = vlaneseq
        %v2476 = vshrl.u32 %v2475, 7
        %v2477 = vsub.s32 1, %v2476
        %v2478 = vrot.slane %v2421, %v2477
        %v2482 = vlaneseq
        %v2483 = vshrl.u32 %v2482, 7
        %v2484 = vsub.s32 1, %v2483
        %v2485 = vrot.slane %v2470, %v2484
        %v2486 = vlaneseq
        %v2487 = vshrl.u32 %v2486, 7
        %v2488 = vsub.s32 1, %v2487
        %v2489 = vrot.slane %v2474, %v2488
        %v2490 = vlaneseq
        %v2491 = vshrl.u32 %v2490, 7
        %v2492 = vsub.s32 1, %v2491
        %v2493 = vrot.slane %v2478, %v2492
        %v2494 = vmul.f32 %v2465, %v2485
        %v2495 = vmul.f32 %v2465, %v2489
        %v2496 = vmul.f32 %v2465, %v2493
        %v2497 = vadd.f32 %v2460, %v2494
        %v2498 = vadd.f32 %v2461, %v2495
        %v2499 = vadd.f32 %v2462, %v2496
        %2500 = vset.pattern.permute.xlu0 2
        %2501 = vperm.xlu0 %2500, %v2422
        %v2502 = vpop.permute.xlu0 %2501
        %v2504 = vlaneseq
        %v2505 = vshrl.u32 %v2504, 7
        %v2506 = vsub.s32 2, %v2505
        %v2507 = vrot.slane %v2420, %v2506
        %v2508 = vlaneseq
        %v2509 = vshrl.u32 %v2508, 7
        %v2510 = vsub.s32 6, %v2509
        %v2511 = vrot.slane %v2420, %v2510
        %v2512 = vlaneseq
        %v2513 = vshrl.u32 %v2512, 7
        %v2514 = vsub.s32 2, %v2513
        %v2515 = vrot.slane %v2421, %v2514
        %v2519 = vlaneseq
        %v2520 = vshrl.u32 %v2519, 7
        %v2521 = vsub.s32 2, %v2520
        %v2522 = vrot.slane %v2507, %v2521
        %v2523 = vlaneseq
        %v2524 = vshrl.u32 %v2523, 7
        %v2525 = vsub.s32 2, %v2524
        %v2526 = vrot.slane %v2511, %v2525
        %v2527 = vlaneseq
        %v2528 = vshrl.u32 %v2527, 7
        %v2529 = vsub.s32 2, %v2528
        %v2530 = vrot.slane %v2515, %v2529
        %v2531 = vmul.f32 %v2502, %v2522
        %v2532 = vmul.f32 %v2502, %v2526
        %v2533 = vmul.f32 %v2502, %v2530
        %v2534 = vadd.f32 %v2497, %v2531
        %v2535 = vadd.f32 %v2498, %v2532
        %v2536 = vadd.f32 %v2499, %v2533
        %2537 = vset.pattern.permute.xlu0 3
        %2538 = vperm.xlu0 %2537, %v2422
        %v2539 = vpop.permute.xlu0 %2538
        %v2541 = vlaneseq
        %v2542 = vshrl.u32 %v2541, 7
        %v2543 = vsub.s32 3, %v2542
        %v2544 = vrot.slane %v2420, %v2543
        %v2545 = vlaneseq
        %v2546 = vshrl.u32 %v2545, 7
        %v2547 = vsub.s32 7, %v2546
        %v2548 = vrot.slane %v2420, %v2547
        %v2549 = vlaneseq
        %v2550 = vshrl.u32 %v2549, 7
        %v2551 = vsub.s32 3, %v2550
        %v2552 = vrot.slane %v2421, %v2551
        %v2556 = vlaneseq
        %v2557 = vshrl.u32 %v2556, 7
        %v2558 = vsub.s32 3, %v2557
        %v2559 = vrot.slane %v2544, %v2558
        %v2560 = vlaneseq
        %v2561 = vshrl.u32 %v2560, 7
        %v2562 = vsub.s32 3, %v2561
        %v2563 = vrot.slane %v2548, %v2562
        %v2564 = vlaneseq
        %v2565 = vshrl.u32 %v2564, 7
        %v2566 = vsub.s32 3, %v2565
        %v2567 = vrot.slane %v2552, %v2566
        %v2568 = vmul.f32 %v2539, %v2559
        %v2569 = vmul.f32 %v2539, %v2563
        %v2570 = vmul.f32 %v2539, %v2567
        %v2571 = vadd.f32 %v2534, %v2568
        %v2572 = vadd.f32 %v2535, %v2569
        %v2573 = vadd.f32 %v2536, %v2570
        %v2574 = vld [vmem:[#allocation2] sm:$0xff]
        %v2575 = vld [vmem:[#allocation2 + $0x8] sm:$0xf]
        %s2576 = scalar_lea.vmem %s6, 4
        %v2577 = vld [vmem:[%s2576] sm:$0xf]
        %2579 = vset.pattern.permute.xlu0 0
        %2580 = vperm.xlu0 %2579, %v2577
        %v2581 = vpop.permute.xlu0 %2580
        %v2585 = vlaneseq
        %v2586 = vshrl.u32 %v2585, 7
        %v2587 = vsub.s32 0, %v2586
        %v2588 = vrot.slane %v2574, %v2587
        %v2589 = vlaneseq
        %v2590 = vshrl.u32 %v2589, 7
        %v2591 = vsub.s32 4, %v2590
        %v2592 = vrot.slane %v2574, %v2591
        %v2593 = vlaneseq
        %v2594 = vshrl.u32 %v2593, 7
        %v2595 = vsub.s32 0, %v2594
        %v2596 = vrot.slane %v2575, %v2595
        %v2600 = vlaneseq
        %v2601 = vshrl.u32 %v2600, 7
        %v2602 = vsub.s32 0, %v2601
        %v2603 = vrot.slane %v2588, %v2602
        %v2604 = vlaneseq
        %v2605 = vshrl.u32 %v2604, 7
        %v2606 = vsub.s32 0, %v2605
        %v2607 = vrot.slane %v2592, %v2606
        %v2608 = vlaneseq
        %v2609 = vshrl.u32 %v2608, 7
        %v2610 = vsub.s32 0, %v2609
        %v2611 = vrot.slane %v2596, %v2610
        %v2612 = vmul.f32 %v2581, %v2603
        %v2613 = vmul.f32 %v2581, %v2607
        %v2614 = vmul.f32 %v2581, %v2611
        %2618 = vrot.lane.b32.xlu0 %v2612, 127
        %v2619 = vpop.permute.xlu0 %2618
        %2620 = vrot.lane.b32.xlu0 %v2613, 127
        %v2621 = vpop.permute.xlu0 %2620
        %2622 = vrot.lane.b32.xlu0 %v2614, 127
        %v2623 = vpop.permute.xlu0 %2622
        %v2624 = vsel %vm762, %v2619, %v2621
        %v2625 = vsel %vm762, %v2621, %v2623
        %v2629 = vadd.f32 %v2571, %v2624
        %v2630 = vadd.f32 %v2572, %v2625
        %v2631 = vadd.f32 %v2573, %v2623
        %2632 = vset.pattern.permute.xlu0 1
        %2633 = vperm.xlu0 %2632, %v2577
        %v2634 = vpop.permute.xlu0 %2633
        %v2636 = vlaneseq
        %v2637 = vshrl.u32 %v2636, 7
        %v2638 = vsub.s32 1, %v2637
        %v2639 = vrot.slane %v2574, %v2638
        %v2640 = vlaneseq
        %v2641 = vshrl.u32 %v2640, 7
        %v2642 = vsub.s32 5, %v2641
        %v2643 = vrot.slane %v2574, %v2642
        %v2644 = vlaneseq
        %v2645 = vshrl.u32 %v2644, 7
        %v2646 = vsub.s32 1, %v2645
        %v2647 = vrot.slane %v2575, %v2646
        %v2651 = vlaneseq
        %v2652 = vshrl.u32 %v2651, 7
        %v2653 = vsub.s32 1, %v2652
        %v2654 = vrot.slane %v2639, %v2653
        %v2655 = vlaneseq
        %v2656 = vshrl.u32 %v2655, 7
        %v2657 = vsub.s32 1, %v2656
        %v2658 = vrot.slane %v2643, %v2657
        %v2659 = vlaneseq
        %v2660 = vshrl.u32 %v2659, 7
        %v2661 = vsub.s32 1, %v2660
        %v2662 = vrot.slane %v2647, %v2661
        %v2663 = vmul.f32 %v2634, %v2654
        %v2664 = vmul.f32 %v2634, %v2658
        %v2665 = vmul.f32 %v2634, %v2662
        %2669 = vrot.lane.b32.xlu0 %v2663, 127
        %v2670 = vpop.permute.xlu0 %2669
        %2671 = vrot.lane.b32.xlu0 %v2664, 127
        %v2672 = vpop.permute.xlu0 %2671
        %2673 = vrot.lane.b32.xlu0 %v2665, 127
        %v2674 = vpop.permute.xlu0 %2673
        %v2675 = vsel %vm762, %v2670, %v2672
        %v2676 = vsel %vm762, %v2672, %v2674
        %v2680 = vadd.f32 %v2629, %v2675
        %v2681 = vadd.f32 %v2630, %v2676
        %v2682 = vadd.f32 %v2631, %v2674
        %2683 = vset.pattern.permute.xlu0 2
        %2684 = vperm.xlu0 %2683, %v2577
        %v2685 = vpop.permute.xlu0 %2684
        %v2687 = vlaneseq
        %v2688 = vshrl.u32 %v2687, 7
        %v2689 = vsub.s32 2, %v2688
        %v2690 = vrot.slane %v2574, %v2689
        %v2691 = vlaneseq
        %v2692 = vshrl.u32 %v2691, 7
        %v2693 = vsub.s32 6, %v2692
        %v2694 = vrot.slane %v2574, %v2693
        %v2695 = vlaneseq
        %v2696 = vshrl.u32 %v2695, 7
        %v2697 = vsub.s32 2, %v2696
        %v2698 = vrot.slane %v2575, %v2697
        %v2702 = vlaneseq
        %v2703 = vshrl.u32 %v2702, 7
        %v2704 = vsub.s32 2, %v2703
        %v2705 = vrot.slane %v2690, %v2704
        %v2706 = vlaneseq
        %v2707 = vshrl.u32 %v2706, 7
        %v2708 = vsub.s32 2, %v2707
        %v2709 = vrot.slane %v2694, %v2708
        %v2710 = vlaneseq
        %v2711 = vshrl.u32 %v2710, 7
        %v2712 = vsub.s32 2, %v2711
        %v2713 = vrot.slane %v2698, %v2712
        %v2714 = vmul.f32 %v2685, %v2705
        %v2715 = vmul.f32 %v2685, %v2709
        %v2716 = vmul.f32 %v2685, %v2713
        %2720 = vrot.lane.b32.xlu0 %v2714, 127
        %v2721 = vpop.permute.xlu0 %2720
        %2722 = vrot.lane.b32.xlu0 %v2715, 127
        %v2723 = vpop.permute.xlu0 %2722
        %2724 = vrot.lane.b32.xlu0 %v2716, 127
        %v2725 = vpop.permute.xlu0 %2724
        %v2726 = vsel %vm762, %v2721, %v2723
        %v2727 = vsel %vm762, %v2723, %v2725
        %v2731 = vadd.f32 %v2680, %v2726
        %v2732 = vadd.f32 %v2681, %v2727
        %v2733 = vadd.f32 %v2682, %v2725
        %2734 = vset.pattern.permute.xlu0 3
        %2735 = vperm.xlu0 %2734, %v2577
        %v2736 = vpop.permute.xlu0 %2735
        %v2738 = vlaneseq
        %v2739 = vshrl.u32 %v2738, 7
        %v2740 = vsub.s32 3, %v2739
        %v2741 = vrot.slane %v2574, %v2740
        %v2742 = vlaneseq
        %v2743 = vshrl.u32 %v2742, 7
        %v2744 = vsub.s32 7, %v2743
        %v2745 = vrot.slane %v2574, %v2744
        %v2746 = vlaneseq
        %v2747 = vshrl.u32 %v2746, 7
        %v2748 = vsub.s32 3, %v2747
        %v2749 = vrot.slane %v2575, %v2748
        %v2753 = vlaneseq
        %v2754 = vshrl.u32 %v2753, 7
        %v2755 = vsub.s32 3, %v2754
        %v2756 = vrot.slane %v2741, %v2755
        %v2757 = vlaneseq
        %v2758 = vshrl.u32 %v2757, 7
        %v2759 = vsub.s32 3, %v2758
        %v2760 = vrot.slane %v2745, %v2759
        %v2761 = vlaneseq
        %v2762 = vshrl.u32 %v2761, 7
        %v2763 = vsub.s32 3, %v2762
        %v2764 = vrot.slane %v2749, %v2763
        %v2765 = vmul.f32 %v2736, %v2756
        %v2766 = vmul.f32 %v2736, %v2760
        %v2767 = vmul.f32 %v2736, %v2764
        %2771 = vrot.lane.b32.xlu0 %v2765, 127
        %v2772 = vpop.permute.xlu0 %2771
        %2773 = vrot.lane.b32.xlu0 %v2766, 127
        %v2774 = vpop.permute.xlu0 %2773
        %2775 = vrot.lane.b32.xlu0 %v2767, 127
        %v2776 = vpop.permute.xlu0 %2775
        %v2777 = vsel %vm762, %v2772, %v2774
        %v2778 = vsel %vm762, %v2774, %v2776
        %v2782 = vadd.f32 %v2731, %v2777
        %v2783 = vadd.f32 %v2732, %v2778
        %v2784 = vadd.f32 %v2733, %v2776
        %v2785 = vmul.f32 %v2574, %v931
        %v2786 = vmul.f32 %v2575, %v929
        %s2787 = scalar_lea.vmem %s6, 8
        %v2788 = vld [vmem:[%s2787] sm:$0xf]
        %2790 = vset.pattern.permute.xlu0 0
        %2791 = vperm.xlu0 %2790, %v2788
        %v2792 = vpop.permute.xlu0 %2791
        %v2796 = vlaneseq
        %v2797 = vshrl.u32 %v2796, 7
        %v2798 = vsub.s32 0, %v2797
        %v2799 = vrot.slane %v2785, %v2798
        %v2800 = vlaneseq
        %v2801 = vshrl.u32 %v2800, 7
        %v2802 = vsub.s32 4, %v2801
        %v2803 = vrot.slane %v2785, %v2802
        %v2804 = vlaneseq
        %v2805 = vshrl.u32 %v2804, 7
        %v2806 = vsub.s32 0, %v2805
        %v2807 = vrot.slane %v2786, %v2806
        %v2811 = vlaneseq
        %v2812 = vshrl.u32 %v2811, 7
        %v2813 = vsub.s32 0, %v2812
        %v2814 = vrot.slane %v2799, %v2813
        %v2815 = vlaneseq
        %v2816 = vshrl.u32 %v2815, 7
        %v2817 = vsub.s32 0, %v2816
        %v2818 = vrot.slane %v2803, %v2817
        %v2819 = vlaneseq
        %v2820 = vshrl.u32 %v2819, 7
        %v2821 = vsub.s32 0, %v2820
        %v2822 = vrot.slane %v2807, %v2821
        %v2823 = vmul.f32 %v2792, %v2814
        %v2824 = vmul.f32 %v2792, %v2818
        %v2825 = vmul.f32 %v2792, %v2822
        %2829 = vrot.lane.b32.xlu0 %v2823, 126
        %v2830 = vpop.permute.xlu0 %2829
        %2831 = vrot.lane.b32.xlu0 %v2824, 126
        %v2832 = vpop.permute.xlu0 %2831
        %2833 = vrot.lane.b32.xlu0 %v2825, 126
        %v2834 = vpop.permute.xlu0 %2833
        %v2835 = vsel %vm984, %v2830, %v2832
        %v2836 = vsel %vm984, %v2832, %v2834
        %v2840 = vadd.f32 %v2782, %v2835
        %v2841 = vadd.f32 %v2783, %v2836
        %v2842 = vadd.f32 %v2784, %v2834
        %2843 = vset.pattern.permute.xlu0 1
        %2844 = vperm.xlu0 %2843, %v2788
        %v2845 = vpop.permute.xlu0 %2844
        %v2847 = vlaneseq
        %v2848 = vshrl.u32 %v2847, 7
        %v2849 = vsub.s32 1, %v2848
        %v2850 = vrot.slane %v2785, %v2849
        %v2851 = vlaneseq
        %v2852 = vshrl.u32 %v2851, 7
        %v2853 = vsub.s32 5, %v2852
        %v2854 = vrot.slane %v2785, %v2853
        %v2855 = vlaneseq
        %v2856 = vshrl.u32 %v2855, 7
        %v2857 = vsub.s32 1, %v2856
        %v2858 = vrot.slane %v2786, %v2857
        %v2862 = vlaneseq
        %v2863 = vshrl.u32 %v2862, 7
        %v2864 = vsub.s32 1, %v2863
        %v2865 = vrot.slane %v2850, %v2864
        %v2866 = vlaneseq
        %v2867 = vshrl.u32 %v2866, 7
        %v2868 = vsub.s32 1, %v2867
        %v2869 = vrot.slane %v2854, %v2868
        %v2870 = vlaneseq
        %v2871 = vshrl.u32 %v2870, 7
        %v2872 = vsub.s32 1, %v2871
        %v2873 = vrot.slane %v2858, %v2872
        %v2874 = vmul.f32 %v2845, %v2865
        %v2875 = vmul.f32 %v2845, %v2869
        %v2876 = vmul.f32 %v2845, %v2873
        %2880 = vrot.lane.b32.xlu0 %v2874, 126
        %v2881 = vpop.permute.xlu0 %2880
        %2882 = vrot.lane.b32.xlu0 %v2875, 126
        %v2883 = vpop.permute.xlu0 %2882
        %2884 = vrot.lane.b32.xlu0 %v2876, 126
        %v2885 = vpop.permute.xlu0 %2884
        %v2886 = vsel %vm984, %v2881, %v2883
        %v2887 = vsel %vm984, %v2883, %v2885
        %v2891 = vadd.f32 %v2840, %v2886
        %v2892 = vadd.f32 %v2841, %v2887
        %v2893 = vadd.f32 %v2842, %v2885
        %2894 = vset.pattern.permute.xlu0 2
        %2895 = vperm.xlu0 %2894, %v2788
        %v2896 = vpop.permute.xlu0 %2895
        %v2898 = vlaneseq
        %v2899 = vshrl.u32 %v2898, 7
        %v2900 = vsub.s32 2, %v2899
        %v2901 = vrot.slane %v2785, %v2900
        %v2902 = vlaneseq
        %v2903 = vshrl.u32 %v2902, 7
        %v2904 = vsub.s32 6, %v2903
        %v2905 = vrot.slane %v2785, %v2904
        %v2906 = vlaneseq
        %v2907 = vshrl.u32 %v2906, 7
        %v2908 = vsub.s32 2, %v2907
        %v2909 = vrot.slane %v2786, %v2908
        %v2913 = vlaneseq
        %v2914 = vshrl.u32 %v2913, 7
        %v2915 = vsub.s32 2, %v2914
        %v2916 = vrot.slane %v2901, %v2915
        %v2917 = vlaneseq
        %v2918 = vshrl.u32 %v2917, 7
        %v2919 = vsub.s32 2, %v2918
        %v2920 = vrot.slane %v2905, %v2919
        %v2921 = vlaneseq
        %v2922 = vshrl.u32 %v2921, 7
        %v2923 = vsub.s32 2, %v2922
        %v2924 = vrot.slane %v2909, %v2923
        %v2925 = vmul.f32 %v2896, %v2916
        %v2926 = vmul.f32 %v2896, %v2920
        %v2927 = vmul.f32 %v2896, %v2924
        %2931 = vrot.lane.b32.xlu0 %v2925, 126
        %v2932 = vpop.permute.xlu0 %2931
        %2933 = vrot.lane.b32.xlu0 %v2926, 126
        %v2934 = vpop.permute.xlu0 %2933
        %2935 = vrot.lane.b32.xlu0 %v2927, 126
        %v2936 = vpop.permute.xlu0 %2935
        %v2937 = vsel %vm984, %v2932, %v2934
        %v2938 = vsel %vm984, %v2934, %v2936
        %v2942 = vadd.f32 %v2891, %v2937
        %v2943 = vadd.f32 %v2892, %v2938
        %v2944 = vadd.f32 %v2893, %v2936
        %2945 = vset.pattern.permute.xlu0 3
        %2946 = vperm.xlu0 %2945, %v2788
        %v2947 = vpop.permute.xlu0 %2946
        %v2949 = vlaneseq
        %v2950 = vshrl.u32 %v2949, 7
        %v2951 = vsub.s32 3, %v2950
        %v2952 = vrot.slane %v2785, %v2951
        %v2953 = vlaneseq
        %v2954 = vshrl.u32 %v2953, 7
        %v2955 = vsub.s32 7, %v2954
        %v2956 = vrot.slane %v2785, %v2955
        %v2957 = vlaneseq
        %v2958 = vshrl.u32 %v2957, 7
        %v2959 = vsub.s32 3, %v2958
        %v2960 = vrot.slane %v2786, %v2959
        %v2964 = vlaneseq
        %v2965 = vshrl.u32 %v2964, 7
        %v2966 = vsub.s32 3, %v2965
        %v2967 = vrot.slane %v2952, %v2966
        %v2968 = vlaneseq
        %v2969 = vshrl.u32 %v2968, 7
        %v2970 = vsub.s32 3, %v2969
        %v2971 = vrot.slane %v2956, %v2970
        %v2972 = vlaneseq
        %v2973 = vshrl.u32 %v2972, 7
        %v2974 = vsub.s32 3, %v2973
        %v2975 = vrot.slane %v2960, %v2974
        %v2976 = vmul.f32 %v2947, %v2967
        %v2977 = vmul.f32 %v2947, %v2971
        %v2978 = vmul.f32 %v2947, %v2975
        %2982 = vrot.lane.b32.xlu0 %v2976, 126
        %v2983 = vpop.permute.xlu0 %2982
        %2984 = vrot.lane.b32.xlu0 %v2977, 126
        %v2985 = vpop.permute.xlu0 %2984
        %2986 = vrot.lane.b32.xlu0 %v2978, 126
        %v2987 = vpop.permute.xlu0 %2986
        %v2988 = vsel %vm984, %v2983, %v2985
        %v2989 = vsel %vm984, %v2985, %v2987
        %v2993 = vadd.f32 %v2942, %v2988
        %v2994 = vadd.f32 %v2943, %v2989
        %v2995 = vadd.f32 %v2944, %v2987
        %v2996 = vld [vmem:[#allocation2] sm:$0xff]
        %v2997 = vld [vmem:[#allocation2 + $0x8] sm:$0xf]
        %v2998 = vmul.f32 %v2996, %v1151
        %v2999 = vmul.f32 %v2997, %v1150
        %s3000 = scalar_lea.vmem %s6, 12
        %v3001 = vld [vmem:[%s3000] sm:$0xf]
        %3003 = vset.pattern.permute.xlu0 0
        %3004 = vperm.xlu0 %3003, %v3001
        %v3005 = vpop.permute.xlu0 %3004
        %v3009 = vlaneseq
        %v3010 = vshrl.u32 %v3009, 7
        %v3011 = vsub.s32 0, %v3010
        %v3012 = vrot.slane %v2998, %v3011
        %v3013 = vlaneseq
        %v3014 = vshrl.u32 %v3013, 7
        %v3015 = vsub.s32 4, %v3014
        %v3016 = vrot.slane %v2998, %v3015
        %v3017 = vlaneseq
        %v3018 = vshrl.u32 %v3017, 7
        %v3019 = vsub.s32 0, %v3018
        %v3020 = vrot.slane %v2999, %v3019
        %v3024 = vlaneseq
        %v3025 = vshrl.u32 %v3024, 7
        %v3026 = vsub.s32 0, %v3025
        %v3027 = vrot.slane %v3012, %v3026
        %v3028 = vlaneseq
        %v3029 = vshrl.u32 %v3028, 7
        %v3030 = vsub.s32 0, %v3029
        %v3031 = vrot.slane %v3016, %v3030
        %v3032 = vlaneseq
        %v3033 = vshrl.u32 %v3032, 7
        %v3034 = vsub.s32 0, %v3033
        %v3035 = vrot.slane %v3020, %v3034
        %v3036 = vmul.f32 %v3005, %v3027
        %v3037 = vmul.f32 %v3005, %v3031
        %v3038 = vmul.f32 %v3005, %v3035
        %3042 = vrot.lane.b32.xlu0 %v3036, 112
        %v3043 = vpop.permute.xlu0 %3042
        %3044 = vrot.lane.b32.xlu0 %v3037, 112
        %v3045 = vpop.permute.xlu0 %3044
        %3046 = vrot.lane.b32.xlu0 %v3038, 112
        %v3047 = vpop.permute.xlu0 %3046
        %v3048 = vsel %vm1204, %v3043, %v3045
        %v3049 = vsel %vm1204, %v3045, %v3047
        %v3053 = vadd.f32 %v2993, %v3048
        %v3054 = vadd.f32 %v2994, %v3049
        %v3055 = vadd.f32 %v2995, %v3047
        %3056 = vset.pattern.permute.xlu0 1
        %3057 = vperm.xlu0 %3056, %v3001
        %v3058 = vpop.permute.xlu0 %3057
        %v3060 = vlaneseq
        %v3061 = vshrl.u32 %v3060, 7
        %v3062 = vsub.s32 1, %v3061
        %v3063 = vrot.slane %v2998, %v3062
        %v3064 = vlaneseq
        %v3065 = vshrl.u32 %v3064, 7
        %v3066 = vsub.s32 5, %v3065
        %v3067 = vrot.slane %v2998, %v3066
        %v3068 = vlaneseq
        %v3069 = vshrl.u32 %v3068, 7
        %v3070 = vsub.s32 1, %v3069
        %v3071 = vrot.slane %v2999, %v3070
        %v3075 = vlaneseq
        %v3076 = vshrl.u32 %v3075, 7
        %v3077 = vsub.s32 1, %v3076
        %v3078 = vrot.slane %v3063, %v3077
        %v3079 = vlaneseq
        %v3080 = vshrl.u32 %v3079, 7
        %v3081 = vsub.s32 1, %v3080
        %v3082 = vrot.slane %v3067, %v3081
        %v3083 = vlaneseq
        %v3084 = vshrl.u32 %v3083, 7
        %v3085 = vsub.s32 1, %v3084
        %v3086 = vrot.slane %v3071, %v3085
        %v3087 = vmul.f32 %v3058, %v3078
        %v3088 = vmul.f32 %v3058, %v3082
        %v3089 = vmul.f32 %v3058, %v3086
        %3093 = vrot.lane.b32.xlu0 %v3087, 112
        %v3094 = vpop.permute.xlu0 %3093
        %3095 = vrot.lane.b32.xlu0 %v3088, 112
        %v3096 = vpop.permute.xlu0 %3095
        %3097 = vrot.lane.b32.xlu0 %v3089, 112
        %v3098 = vpop.permute.xlu0 %3097
        %v3099 = vsel %vm1204, %v3094, %v3096
        %v3100 = vsel %vm1204, %v3096, %v3098
        %v3104 = vadd.f32 %v3053, %v3099
        %v3105 = vadd.f32 %v3054, %v3100
        %v3106 = vadd.f32 %v3055, %v3098
        %3107 = vset.pattern.permute.xlu0 2
        %3108 = vperm.xlu0 %3107, %v3001
        %v3109 = vpop.permute.xlu0 %3108
        %v3111 = vlaneseq
        %v3112 = vshrl.u32 %v3111, 7
        %v3113 = vsub.s32 2, %v3112
        %v3114 = vrot.slane %v2998, %v3113
        %v3115 = vlaneseq
        %v3116 = vshrl.u32 %v3115, 7
        %v3117 = vsub.s32 6, %v3116
        %v3118 = vrot.slane %v2998, %v3117
        %v3119 = vlaneseq
        %v3120 = vshrl.u32 %v3119, 7
        %v3121 = vsub.s32 2, %v3120
        %v3122 = vrot.slane %v2999, %v3121
        %v3126 = vlaneseq
        %v3127 = vshrl.u32 %v3126, 7
        %v3128 = vsub.s32 2, %v3127
        %v3129 = vrot.slane %v3114, %v3128
        %v3130 = vlaneseq
        %v3131 = vshrl.u32 %v3130, 7
        %v3132 = vsub.s32 2, %v3131
        %v3133 = vrot.slane %v3118, %v3132
        %v3134 = vlaneseq
        %v3135 = vshrl.u32 %v3134, 7
        %v3136 = vsub.s32 2, %v3135
        %v3137 = vrot.slane %v3122, %v3136
        %v3138 = vmul.f32 %v3109, %v3129
        %v3139 = vmul.f32 %v3109, %v3133
        %v3140 = vmul.f32 %v3109, %v3137
        %3144 = vrot.lane.b32.xlu0 %v3138, 112
        %v3145 = vpop.permute.xlu0 %3144
        %3146 = vrot.lane.b32.xlu0 %v3139, 112
        %v3147 = vpop.permute.xlu0 %3146
        %3148 = vrot.lane.b32.xlu0 %v3140, 112
        %v3149 = vpop.permute.xlu0 %3148
        %v3150 = vsel %vm1204, %v3145, %v3147
        %v3151 = vsel %vm1204, %v3147, %v3149
        %v3155 = vadd.f32 %v3104, %v3150
        %v3156 = vadd.f32 %v3105, %v3151
        %v3157 = vadd.f32 %v3106, %v3149
        %3158 = vset.pattern.permute.xlu0 3
        %3159 = vperm.xlu0 %3158, %v3001
        %v3160 = vpop.permute.xlu0 %3159
        %v3162 = vlaneseq
        %v3163 = vshrl.u32 %v3162, 7
        %v3164 = vsub.s32 3, %v3163
        %v3165 = vrot.slane %v2998, %v3164
        %v3166 = vlaneseq
        %v3167 = vshrl.u32 %v3166, 7
        %v3168 = vsub.s32 7, %v3167
        %v3169 = vrot.slane %v2998, %v3168
        %v3170 = vlaneseq
        %v3171 = vshrl.u32 %v3170, 7
        %v3172 = vsub.s32 3, %v3171
        %v3173 = vrot.slane %v2999, %v3172
        %v3177 = vlaneseq
        %v3178 = vshrl.u32 %v3177, 7
        %v3179 = vsub.s32 3, %v3178
        %v3180 = vrot.slane %v3165, %v3179
        %v3181 = vlaneseq
        %v3182 = vshrl.u32 %v3181, 7
        %v3183 = vsub.s32 3, %v3182
        %v3184 = vrot.slane %v3169, %v3183
        %v3185 = vlaneseq
        %v3186 = vshrl.u32 %v3185, 7
        %v3187 = vsub.s32 3, %v3186
        %v3188 = vrot.slane %v3173, %v3187
        %v3189 = vmul.f32 %v3160, %v3180
        %v3190 = vmul.f32 %v3160, %v3184
        %v3191 = vmul.f32 %v3160, %v3188
        %3195 = vrot.lane.b32.xlu0 %v3189, 112
        %v3196 = vpop.permute.xlu0 %3195
        %3197 = vrot.lane.b32.xlu0 %v3190, 112
        %v3198 = vpop.permute.xlu0 %3197
        %3199 = vrot.lane.b32.xlu0 %v3191, 112
        %v3200 = vpop.permute.xlu0 %3199
        %v3201 = vsel %vm1204, %v3196, %v3198
        %v3202 = vsel %vm1204, %v3198, %v3200
        %v3206 = vadd.f32 %v3155, %v3201
        %v3207 = vadd.f32 %v3156, %v3202
        %v3208 = vadd.f32 %v3157, %v3200
        %v3209 = vld [vmem:[#allocation2 + $0x4] sm:$0xff]
        %s3210 = scalar_lea.vmem %s6, 16
        %v3211 = vld [vmem:[%s3210] sm:$0xf]
        %3213 = vset.pattern.permute.xlu0 0
        %3214 = vperm.xlu0 %3213, %v3211
        %v3215 = vpop.permute.xlu0 %3214
        %v3218 = vlaneseq
        %v3219 = vshrl.u32 %v3218, 7
        %v3220 = vsub.s32 0, %v3219
        %v3221 = vrot.slane %v3209, %v3220
        %v3222 = vlaneseq
        %v3223 = vshrl.u32 %v3222, 7
        %v3224 = vsub.s32 4, %v3223
        %v3225 = vrot.slane %v3209, %v3224
        %v3228 = vlaneseq
        %v3229 = vshrl.u32 %v3228, 7
        %v3230 = vsub.s32 0, %v3229
        %v3231 = vrot.slane %v3221, %v3230
        %v3232 = vlaneseq
        %v3233 = vshrl.u32 %v3232, 7
        %v3234 = vsub.s32 0, %v3233
        %v3235 = vrot.slane %v3225, %v3234
        %v3236 = vmul.f32 %v3215, %v3231
        %v3237 = vmul.f32 %v3215, %v3235
        %3240 = vrot.lane.b32.xlu0 %v3236, 111
        %v3241 = vpop.permute.xlu0 %3240
        %3242 = vrot.lane.b32.xlu0 %v3237, 111
        %v3243 = vpop.permute.xlu0 %3242
        %v3244 = vsel %vm554, %v3241, %v3243
        %v3248 = vadd.f32 %v3206, %v3241
        %v3249 = vadd.f32 %v3207, %v3244
        %v3250 = vadd.f32 %v3208, %v3243
        %3251 = vset.pattern.permute.xlu0 1
        %3252 = vperm.xlu0 %3251, %v3211
        %v3253 = vpop.permute.xlu0 %3252
        %v3255 = vlaneseq
        %v3256 = vshrl.u32 %v3255, 7
        %v3257 = vsub.s32 1, %v3256
        %v3258 = vrot.slane %v3209, %v3257
        %v3259 = vlaneseq
        %v3260 = vshrl.u32 %v3259, 7
        %v3261 = vsub.s32 5, %v3260
        %v3262 = vrot.slane %v3209, %v3261
        %v3265 = vlaneseq
        %v3266 = vshrl.u32 %v3265, 7
        %v3267 = vsub.s32 1, %v3266
        %v3268 = vrot.slane %v3258, %v3267
        %v3269 = vlaneseq
        %v3270 = vshrl.u32 %v3269, 7
        %v3271 = vsub.s32 1, %v3270
        %v3272 = vrot.slane %v3262, %v3271
        %v3273 = vmul.f32 %v3253, %v3268
        %v3274 = vmul.f32 %v3253, %v3272
        %3277 = vrot.lane.b32.xlu0 %v3273, 111
        %v3278 = vpop.permute.xlu0 %3277
        %3279 = vrot.lane.b32.xlu0 %v3274, 111
        %v3280 = vpop.permute.xlu0 %3279
        %v3281 = vsel %vm554, %v3278, %v3280
        %v3285 = vadd.f32 %v3248, %v3278
        %v3286 = vadd.f32 %v3249, %v3281
        %v3287 = vadd.f32 %v3250, %v3280
        %3288 = vset.pattern.permute.xlu0 2
        %3289 = vperm.xlu0 %3288, %v3211
        %v3290 = vpop.permute.xlu0 %3289
        %v3292 = vlaneseq
        %v3293 = vshrl.u32 %v3292, 7
        %v3294 = vsub.s32 2, %v3293
        %v3295 = vrot.slane %v3209, %v3294
        %v3296 = vlaneseq
        %v3297 = vshrl.u32 %v3296, 7
        %v3298 = vsub.s32 6, %v3297
        %v3299 = vrot.slane %v3209, %v3298
        %v3302 = vlaneseq
        %v3303 = vshrl.u32 %v3302, 7
        %v3304 = vsub.s32 2, %v3303
        %v3305 = vrot.slane %v3295, %v3304
        %v3306 = vlaneseq
        %v3307 = vshrl.u32 %v3306, 7
        %v3308 = vsub.s32 2, %v3307
        %v3309 = vrot.slane %v3299, %v3308
        %v3310 = vmul.f32 %v3290, %v3305
        %v3311 = vmul.f32 %v3290, %v3309
        %3314 = vrot.lane.b32.xlu0 %v3310, 111
        %v3315 = vpop.permute.xlu0 %3314
        %3316 = vrot.lane.b32.xlu0 %v3311, 111
        %v3317 = vpop.permute.xlu0 %3316
        %v3318 = vsel %vm554, %v3315, %v3317
        %v3322 = vadd.f32 %v3285, %v3315
        %v3323 = vadd.f32 %v3286, %v3318
        %v3324 = vadd.f32 %v3287, %v3317
        %3325 = vset.pattern.permute.xlu0 3
        %3326 = vperm.xlu0 %3325, %v3211
        %v3327 = vpop.permute.xlu0 %3326
        %v3329 = vlaneseq
        %v3330 = vshrl.u32 %v3329, 7
        %v3331 = vsub.s32 3, %v3330
        %v3332 = vrot.slane %v3209, %v3331
        %v3333 = vlaneseq
        %v3334 = vshrl.u32 %v3333, 7
        %v3335 = vsub.s32 7, %v3334
        %v3336 = vrot.slane %v3209, %v3335
        %v3339 = vlaneseq
        %v3340 = vshrl.u32 %v3339, 7
        %v3341 = vsub.s32 3, %v3340
        %v3342 = vrot.slane %v3332, %v3341
        %v3343 = vlaneseq
        %v3344 = vshrl.u32 %v3343, 7
        %v3345 = vsub.s32 3, %v3344
        %v3346 = vrot.slane %v3336, %v3345
        %v3347 = vmul.f32 %v3327, %v3342
        %v3348 = vmul.f32 %v3327, %v3346
        %3351 = vrot.lane.b32.xlu0 %v3347, 111
        %v3352 = vpop.permute.xlu0 %3351
        %3353 = vrot.lane.b32.xlu0 %v3348, 111
        %v3354 = vpop.permute.xlu0 %3353
        %v3355 = vsel %vm554, %v3352, %v3354
        %v3359 = vadd.f32 %v3322, %v3352
        %v3360 = vadd.f32 %v3323, %v3355
        %v3361 = vadd.f32 %v3324, %v3354
        %v3362 = vld [vmem:[#allocation2 + $0x4] sm:$0xff]
        %v3363 = vld [vmem:[#allocation2 + $0xc] sm:$0xf]
        %v3364 = vmul.f32 %v3362, %v1525
        %v3365 = vmul.f32 %v3363, %v1523
        %s3366 = scalar_lea.vmem %s6, 20
        %v3367 = vld [vmem:[%s3366] sm:$0xf]
        %3369 = vset.pattern.permute.xlu0 0
        %3370 = vperm.xlu0 %3369, %v3367
        %v3371 = vpop.permute.xlu0 %3370
        %v3375 = vlaneseq
        %v3376 = vshrl.u32 %v3375, 7
        %v3377 = vsub.s32 0, %v3376
        %v3378 = vrot.slane %v3364, %v3377
        %v3379 = vlaneseq
        %v3380 = vshrl.u32 %v3379, 7
        %v3381 = vsub.s32 4, %v3380
        %v3382 = vrot.slane %v3364, %v3381
        %v3383 = vlaneseq
        %v3384 = vshrl.u32 %v3383, 7
        %v3385 = vsub.s32 0, %v3384
        %v3386 = vrot.slane %v3365, %v3385
        %v3390 = vlaneseq
        %v3391 = vshrl.u32 %v3390, 7
        %v3392 = vsub.s32 0, %v3391
        %v3393 = vrot.slane %v3378, %v3392
        %v3394 = vlaneseq
        %v3395 = vshrl.u32 %v3394, 7
        %v3396 = vsub.s32 0, %v3395
        %v3397 = vrot.slane %v3382, %v3396
        %v3398 = vlaneseq
        %v3399 = vshrl.u32 %v3398, 7
        %v3400 = vsub.s32 0, %v3399
        %v3401 = vrot.slane %v3386, %v3400
        %v3402 = vmul.f32 %v3371, %v3393
        %v3403 = vmul.f32 %v3371, %v3397
        %v3404 = vmul.f32 %v3371, %v3401
        %3408 = vrot.lane.b32.xlu0 %v3402, 110
        %v3409 = vpop.permute.xlu0 %3408
        %3410 = vrot.lane.b32.xlu0 %v3403, 110
        %v3411 = vpop.permute.xlu0 %3410
        %3412 = vrot.lane.b32.xlu0 %v3404, 110
        %v3413 = vpop.permute.xlu0 %3412
        %v3414 = vsel %vm1578, %v3409, %v3411
        %v3415 = vsel %vm1578, %v3411, %v3413
        %v3419 = vadd.f32 %v3359, %v3409
        %v3420 = vadd.f32 %v3360, %v3414
        %v3421 = vadd.f32 %v3361, %v3415
        %3422 = vset.pattern.permute.xlu0 1
        %3423 = vperm.xlu0 %3422, %v3367
        %v3424 = vpop.permute.xlu0 %3423
        %v3426 = vlaneseq
        %v3427 = vshrl.u32 %v3426, 7
        %v3428 = vsub.s32 1, %v3427
        %v3429 = vrot.slane %v3364, %v3428
        %v3430 = vlaneseq
        %v3431 = vshrl.u32 %v3430, 7
        %v3432 = vsub.s32 5, %v3431
        %v3433 = vrot.slane %v3364, %v3432
        %v3434 = vlaneseq
        %v3435 = vshrl.u32 %v3434, 7
        %v3436 = vsub.s32 1, %v3435
        %v3437 = vrot.slane %v3365, %v3436
        %v3441 = vlaneseq
        %v3442 = vshrl.u32 %v3441, 7
        %v3443 = vsub.s32 1, %v3442
        %v3444 = vrot.slane %v3429, %v3443
        %v3445 = vlaneseq
        %v3446 = vshrl.u32 %v3445, 7
        %v3447 = vsub.s32 1, %v3446
        %v3448 = vrot.slane %v3433, %v3447
        %v3449 = vlaneseq
        %v3450 = vshrl.u32 %v3449, 7
        %v3451 = vsub.s32 1, %v3450
        %v3452 = vrot.slane %v3437, %v3451
        %v3453 = vmul.f32 %v3424, %v3444
        %v3454 = vmul.f32 %v3424, %v3448
        %v3455 = vmul.f32 %v3424, %v3452
        %3459 = vrot.lane.b32.xlu0 %v3453, 110
        %v3460 = vpop.permute.xlu0 %3459
        %3461 = vrot.lane.b32.xlu0 %v3454, 110
        %v3462 = vpop.permute.xlu0 %3461
        %3463 = vrot.lane.b32.xlu0 %v3455, 110
        %v3464 = vpop.permute.xlu0 %3463
        %v3465 = vsel %vm1578, %v3460, %v3462
        %v3466 = vsel %vm1578, %v3462, %v3464
        %v3470 = vadd.f32 %v3419, %v3460
        %v3471 = vadd.f32 %v3420, %v3465
        %v3472 = vadd.f32 %v3421, %v3466
        %3473 = vset.pattern.permute.xlu0 2
        %3474 = vperm.xlu0 %3473, %v3367
        %v3475 = vpop.permute.xlu0 %3474
        %v3477 = vlaneseq
        %v3478 = vshrl.u32 %v3477, 7
        %v3479 = vsub.s32 2, %v3478
        %v3480 = vrot.slane %v3364, %v3479
        %v3481 = vlaneseq
        %v3482 = vshrl.u32 %v3481, 7
        %v3483 = vsub.s32 6, %v3482
        %v3484 = vrot.slane %v3364, %v3483
        %v3485 = vlaneseq
        %v3486 = vshrl.u32 %v3485, 7
        %v3487 = vsub.s32 2, %v3486
        %v3488 = vrot.slane %v3365, %v3487
        %v3492 = vlaneseq
        %v3493 = vshrl.u32 %v3492, 7
        %v3494 = vsub.s32 2, %v3493
        %v3495 = vrot.slane %v3480, %v3494
        %v3496 = vlaneseq
        %v3497 = vshrl.u32 %v3496, 7
        %v3498 = vsub.s32 2, %v3497
        %v3499 = vrot.slane %v3484, %v3498
        %v3500 = vlaneseq
        %v3501 = vshrl.u32 %v3500, 7
        %v3502 = vsub.s32 2, %v3501
        %v3503 = vrot.slane %v3488, %v3502
        %v3504 = vmul.f32 %v3475, %v3495
        %v3505 = vmul.f32 %v3475, %v3499
        %v3506 = vmul.f32 %v3475, %v3503
        %3510 = vrot.lane.b32.xlu0 %v3504, 110
        %v3511 = vpop.permute.xlu0 %3510
        %3512 = vrot.lane.b32.xlu0 %v3505, 110
        %v3513 = vpop.permute.xlu0 %3512
        %3514 = vrot.lane.b32.xlu0 %v3506, 110
        %v3515 = vpop.permute.xlu0 %3514
        %v3516 = vsel %vm1578, %v3511, %v3513
        %v3517 = vsel %vm1578, %v3513, %v3515
        %v3521 = vadd.f32 %v3470, %v3511
        %v3522 = vadd.f32 %v3471, %v3516
        %v3523 = vadd.f32 %v3472, %v3517
        %3524 = vset.pattern.permute.xlu0 3
        %3525 = vperm.xlu0 %3524, %v3367
        %v3526 = vpop.permute.xlu0 %3525
        %v3528 = vlaneseq
        %v3529 = vshrl.u32 %v3528, 7
        %v3530 = vsub.s32 3, %v3529
        %v3531 = vrot.slane %v3364, %v3530
        %v3532 = vlaneseq
        %v3533 = vshrl.u32 %v3532, 7
        %v3534 = vsub.s32 7, %v3533
        %v3535 = vrot.slane %v3364, %v3534
        %v3536 = vlaneseq
        %v3537 = vshrl.u32 %v3536, 7
        %v3538 = vsub.s32 3, %v3537
        %v3539 = vrot.slane %v3365, %v3538
        %v3543 = vlaneseq
        %v3544 = vshrl.u32 %v3543, 7
        %v3545 = vsub.s32 3, %v3544
        %v3546 = vrot.slane %v3531, %v3545
        %v3547 = vlaneseq
        %v3548 = vshrl.u32 %v3547, 7
        %v3549 = vsub.s32 3, %v3548
        %v3550 = vrot.slane %v3535, %v3549
        %v3551 = vlaneseq
        %v3552 = vshrl.u32 %v3551, 7
        %v3553 = vsub.s32 3, %v3552
        %v3554 = vrot.slane %v3539, %v3553
        %v3555 = vmul.f32 %v3526, %v3546
        %v3556 = vmul.f32 %v3526, %v3550
        %v3557 = vmul.f32 %v3526, %v3554
        %3561 = vrot.lane.b32.xlu0 %v3555, 110
        %v3562 = vpop.permute.xlu0 %3561
        %3563 = vrot.lane.b32.xlu0 %v3556, 110
        %v3564 = vpop.permute.xlu0 %3563
        %3565 = vrot.lane.b32.xlu0 %v3557, 110
        %v3566 = vpop.permute.xlu0 %3565
        %v3567 = vsel %vm1578, %v3562, %v3564
        %v3568 = vsel %vm1578, %v3564, %v3566
        %v3572 = vadd.f32 %v3521, %v3562
        %v3573 = vadd.f32 %v3522, %v3567
        %v3574 = vadd.f32 %v3523, %v3568
        %v3575 = vld [vmem:[#allocation2 + $0x4] sm:$0xff]
        %v3576 = vld [vmem:[#allocation2 + $0xc] sm:$0xf]
        %v3577 = vmul.f32 %v3575, %v1746
        %v3578 = vmul.f32 %v3576, %v1744
        %s3579 = scalar_lea.vmem %s6, 24
        %v3580 = vld [vmem:[%s3579] sm:$0xf]
        %3582 = vset.pattern.permute.xlu0 0
        %3583 = vperm.xlu0 %3582, %v3580
        %v3584 = vpop.permute.xlu0 %3583
        %v3588 = vlaneseq
        %v3589 = vshrl.u32 %v3588, 7
        %v3590 = vsub.s32 0, %v3589
        %v3591 = vrot.slane %v3577, %v3590
        %v3592 = vlaneseq
        %v3593 = vshrl.u32 %v3592, 7
        %v3594 = vsub.s32 4, %v3593
        %v3595 = vrot.slane %v3577, %v3594
        %v3596 = vlaneseq
        %v3597 = vshrl.u32 %v3596, 7
        %v3598 = vsub.s32 0, %v3597
        %v3599 = vrot.slane %v3578, %v3598
        %v3603 = vlaneseq
        %v3604 = vshrl.u32 %v3603, 7
        %v3605 = vsub.s32 0, %v3604
        %v3606 = vrot.slane %v3591, %v3605
        %v3607 = vlaneseq
        %v3608 = vshrl.u32 %v3607, 7
        %v3609 = vsub.s32 0, %v3608
        %v3610 = vrot.slane %v3595, %v3609
        %v3611 = vlaneseq
        %v3612 = vshrl.u32 %v3611, 7
        %v3613 = vsub.s32 0, %v3612
        %v3614 = vrot.slane %v3599, %v3613
        %v3615 = vmul.f32 %v3584, %v3606
        %v3616 = vmul.f32 %v3584, %v3610
        %v3617 = vmul.f32 %v3584, %v3614
        %3621 = vrot.lane.b32.xlu0 %v3615, 96
        %v3622 = vpop.permute.xlu0 %3621
        %3623 = vrot.lane.b32.xlu0 %v3616, 96
        %v3624 = vpop.permute.xlu0 %3623
        %3625 = vrot.lane.b32.xlu0 %v3617, 96
        %v3626 = vpop.permute.xlu0 %3625
        %v3627 = vsel %vm1799, %v3622, %v3624
        %v3628 = vsel %vm1799, %v3624, %v3626
        %v3632 = vadd.f32 %v3572, %v3622
        %v3633 = vadd.f32 %v3573, %v3627
        %v3634 = vadd.f32 %v3574, %v3628
        %3635 = vset.pattern.permute.xlu0 1
        %3636 = vperm.xlu0 %3635, %v3580
        %v3637 = vpop.permute.xlu0 %3636
        %v3639 = vlaneseq
        %v3640 = vshrl.u32 %v3639, 7
        %v3641 = vsub.s32 1, %v3640
        %v3642 = vrot.slane %v3577, %v3641
        %v3643 = vlaneseq
        %v3644 = vshrl.u32 %v3643, 7
        %v3645 = vsub.s32 5, %v3644
        %v3646 = vrot.slane %v3577, %v3645
        %v3647 = vlaneseq
        %v3648 = vshrl.u32 %v3647, 7
        %v3649 = vsub.s32 1, %v3648
        %v3650 = vrot.slane %v3578, %v3649
        %v3654 = vlaneseq
        %v3655 = vshrl.u32 %v3654, 7
        %v3656 = vsub.s32 1, %v3655
        %v3657 = vrot.slane %v3642, %v3656
        %v3658 = vlaneseq
        %v3659 = vshrl.u32 %v3658, 7
        %v3660 = vsub.s32 1, %v3659
        %v3661 = vrot.slane %v3646, %v3660
        %v3662 = vlaneseq
        %v3663 = vshrl.u32 %v3662, 7
        %v3664 = vsub.s32 1, %v3663
        %v3665 = vrot.slane %v3650, %v3664
        %v3666 = vmul.f32 %v3637, %v3657
        %v3667 = vmul.f32 %v3637, %v3661
        %v3668 = vmul.f32 %v3637, %v3665
        %3672 = vrot.lane.b32.xlu0 %v3666, 96
        %v3673 = vpop.permute.xlu0 %3672
        %3674 = vrot.lane.b32.xlu0 %v3667, 96
        %v3675 = vpop.permute.xlu0 %3674
        %3676 = vrot.lane.b32.xlu0 %v3668, 96
        %v3677 = vpop.permute.xlu0 %3676
        %v3678 = vsel %vm1799, %v3673, %v3675
        %v3679 = vsel %vm1799, %v3675, %v3677
        %v3683 = vadd.f32 %v3632, %v3673
        %v3684 = vadd.f32 %v3633, %v3678
        %v3685 = vadd.f32 %v3634, %v3679
        %3686 = vset.pattern.permute.xlu0 2
        %3687 = vperm.xlu0 %3686, %v3580
        %v3688 = vpop.permute.xlu0 %3687
        %v3690 = vlaneseq
        %v3691 = vshrl.u32 %v3690, 7
        %v3692 = vsub.s32 2, %v3691
        %v3693 = vrot.slane %v3577, %v3692
        %v3694 = vlaneseq
        %v3695 = vshrl.u32 %v3694, 7
        %v3696 = vsub.s32 6, %v3695
        %v3697 = vrot.slane %v3577, %v3696
        %v3698 = vlaneseq
        %v3699 = vshrl.u32 %v3698, 7
        %v3700 = vsub.s32 2, %v3699
        %v3701 = vrot.slane %v3578, %v3700
        %v3705 = vlaneseq
        %v3706 = vshrl.u32 %v3705, 7
        %v3707 = vsub.s32 2, %v3706
        %v3708 = vrot.slane %v3693, %v3707
        %v3709 = vlaneseq
        %v3710 = vshrl.u32 %v3709, 7
        %v3711 = vsub.s32 2, %v3710
        %v3712 = vrot.slane %v3697, %v3711
        %v3713 = vlaneseq
        %v3714 = vshrl.u32 %v3713, 7
        %v3715 = vsub.s32 2, %v3714
        %v3716 = vrot.slane %v3701, %v3715
        %v3717 = vmul.f32 %v3688, %v3708
        %v3718 = vmul.f32 %v3688, %v3712
        %v3719 = vmul.f32 %v3688, %v3716
        %3723 = vrot.lane.b32.xlu0 %v3717, 96
        %v3724 = vpop.permute.xlu0 %3723
        %3725 = vrot.lane.b32.xlu0 %v3718, 96
        %v3726 = vpop.permute.xlu0 %3725
        %3727 = vrot.lane.b32.xlu0 %v3719, 96
        %v3728 = vpop.permute.xlu0 %3727
        %v3729 = vsel %vm1799, %v3724, %v3726
        %v3730 = vsel %vm1799, %v3726, %v3728
        %v3734 = vadd.f32 %v3683, %v3724
        %v3735 = vadd.f32 %v3684, %v3729
        %v3736 = vadd.f32 %v3685, %v3730
        %3737 = vset.pattern.permute.xlu0 3
        %3738 = vperm.xlu0 %3737, %v3580
        %v3739 = vpop.permute.xlu0 %3738
        %v3741 = vlaneseq
        %v3742 = vshrl.u32 %v3741, 7
        %v3743 = vsub.s32 3, %v3742
        %v3744 = vrot.slane %v3577, %v3743
        %v3745 = vlaneseq
        %v3746 = vshrl.u32 %v3745, 7
        %v3747 = vsub.s32 7, %v3746
        %v3748 = vrot.slane %v3577, %v3747
        %v3749 = vlaneseq
        %v3750 = vshrl.u32 %v3749, 7
        %v3751 = vsub.s32 3, %v3750
        %v3752 = vrot.slane %v3578, %v3751
        %v3756 = vlaneseq
        %v3757 = vshrl.u32 %v3756, 7
        %v3758 = vsub.s32 3, %v3757
        %v3759 = vrot.slane %v3744, %v3758
        %v3760 = vlaneseq
        %v3761 = vshrl.u32 %v3760, 7
        %v3762 = vsub.s32 3, %v3761
        %v3763 = vrot.slane %v3748, %v3762
        %v3764 = vlaneseq
        %v3765 = vshrl.u32 %v3764, 7
        %v3766 = vsub.s32 3, %v3765
        %v3767 = vrot.slane %v3752, %v3766
        %v3768 = vmul.f32 %v3739, %v3759
        %v3769 = vmul.f32 %v3739, %v3763
        %v3770 = vmul.f32 %v3739, %v3767
        %3774 = vrot.lane.b32.xlu0 %v3768, 96
        %v3775 = vpop.permute.xlu0 %3774
        %3776 = vrot.lane.b32.xlu0 %v3769, 96
        %v3777 = vpop.permute.xlu0 %3776
        %3778 = vrot.lane.b32.xlu0 %v3770, 96
        %v3779 = vpop.permute.xlu0 %3778
        %v3780 = vsel %vm1799, %v3775, %v3777
        %v3781 = vsel %vm1799, %v3777, %v3779
        %v3785 = vadd.f32 %v3734, %v3775
        %v3786 = vadd.f32 %v3735, %v3780
        %v3787 = vadd.f32 %v3736, %v3781
        %v3788 = vld [vmem:[#allocation2 + $0x4] sm:$0xff]
        %v3789 = vld [vmem:[#allocation2 + $0xc] sm:$0xf]
        %s3790 = scalar_lea.vmem %s6, 28
        %v3791 = vld [vmem:[%s3790] sm:$0xf]
        %3793 = vset.pattern.permute.xlu0 0
        %3794 = vperm.xlu0 %3793, %v3791
        %v3795 = vpop.permute.xlu0 %3794
        %v3799 = vlaneseq
        %v3800 = vshrl.u32 %v3799, 7
        %v3801 = vsub.s32 0, %v3800
        %v3802 = vrot.slane %v3788, %v3801
        %v3803 = vlaneseq
        %v3804 = vshrl.u32 %v3803, 7
        %v3805 = vsub.s32 4, %v3804
        %v3806 = vrot.slane %v3788, %v3805
        %v3807 = vlaneseq
        %v3808 = vshrl.u32 %v3807, 7
        %v3809 = vsub.s32 0, %v3808
        %v3810 = vrot.slane %v3789, %v3809
        %v3814 = vlaneseq
        %v3815 = vshrl.u32 %v3814, 7
        %v3816 = vsub.s32 0, %v3815
        %v3817 = vrot.slane %v3802, %v3816
        %v3818 = vlaneseq
        %v3819 = vshrl.u32 %v3818, 7
        %v3820 = vsub.s32 0, %v3819
        %v3821 = vrot.slane %v3806, %v3820
        %v3822 = vlaneseq
        %v3823 = vshrl.u32 %v3822, 7
        %v3824 = vsub.s32 0, %v3823
        %v3825 = vrot.slane %v3810, %v3824
        %v3826 = vmul.f32 %v3795, %v3817
        %v3827 = vmul.f32 %v3795, %v3821
        %v3828 = vmul.f32 %v3795, %v3825
        %3832 = vrot.lane.b32.xlu0 %v3826, 95
        %v3833 = vpop.permute.xlu0 %3832
        %3834 = vrot.lane.b32.xlu0 %v3827, 95
        %v3835 = vpop.permute.xlu0 %3834
        %3836 = vrot.lane.b32.xlu0 %v3828, 95
        %v3837 = vpop.permute.xlu0 %3836
        %v3838 = vsel %vm2011, %v3833, %v3835
        %v3839 = vsel %vm2011, %v3835, %v3837
        %v3843 = vadd.f32 %v3785, %v3833
        %v3844 = vadd.f32 %v3786, %v3838
        %v3845 = vadd.f32 %v3787, %v3839
        %3846 = vset.pattern.permute.xlu0 1
        %3847 = vperm.xlu0 %3846, %v3791
        %v3848 = vpop.permute.xlu0 %3847
        %v3850 = vlaneseq
        %v3851 = vshrl.u32 %v3850, 7
        %v3852 = vsub.s32 1, %v3851
        %v3853 = vrot.slane %v3788, %v3852
        %v3854 = vlaneseq
        %v3855 = vshrl.u32 %v3854, 7
        %v3856 = vsub.s32 5, %v3855
        %v3857 = vrot.slane %v3788, %v3856
        %v3858 = vlaneseq
        %v3859 = vshrl.u32 %v3858, 7
        %v3860 = vsub.s32 1, %v3859
        %v3861 = vrot.slane %v3789, %v3860
        %v3865 = vlaneseq
        %v3866 = vshrl.u32 %v3865, 7
        %v3867 = vsub.s32 1, %v3866
        %v3868 = vrot.slane %v3853, %v3867
        %v3869 = vlaneseq
        %v3870 = vshrl.u32 %v3869, 7
        %v3871 = vsub.s32 1, %v3870
        %v3872 = vrot.slane %v3857, %v3871
        %v3873 = vlaneseq
        %v3874 = vshrl.u32 %v3873, 7
        %v3875 = vsub.s32 1, %v3874
        %v3876 = vrot.slane %v3861, %v3875
        %v3877 = vmul.f32 %v3848, %v3868
        %v3878 = vmul.f32 %v3848, %v3872
        %v3879 = vmul.f32 %v3848, %v3876
        %3883 = vrot.lane.b32.xlu0 %v3877, 95
        %v3884 = vpop.permute.xlu0 %3883
        %3885 = vrot.lane.b32.xlu0 %v3878, 95
        %v3886 = vpop.permute.xlu0 %3885
        %3887 = vrot.lane.b32.xlu0 %v3879, 95
        %v3888 = vpop.permute.xlu0 %3887
        %v3889 = vsel %vm2011, %v3884, %v3886
        %v3890 = vsel %vm2011, %v3886, %v3888
        %v3894 = vadd.f32 %v3843, %v3884
        %v3895 = vadd.f32 %v3844, %v3889
        %v3896 = vadd.f32 %v3845, %v3890
        %3897 = vset.pattern.permute.xlu0 2
        %3898 = vperm.xlu0 %3897, %v3791
        %v3899 = vpop.permute.xlu0 %3898
        %v3901 = vlaneseq
        %v3902 = vshrl.u32 %v3901, 7
        %v3903 = vsub.s32 2, %v3902
        %v3904 = vrot.slane %v3788, %v3903
        %v3905 = vlaneseq
        %v3906 = vshrl.u32 %v3905, 7
        %v3907 = vsub.s32 6, %v3906
        %v3908 = vrot.slane %v3788, %v3907
        %v3909 = vlaneseq
        %v3910 = vshrl.u32 %v3909, 7
        %v3911 = vsub.s32 2, %v3910
        %v3912 = vrot.slane %v3789, %v3911
        %v3916 = vlaneseq
        %v3917 = vshrl.u32 %v3916, 7
        %v3918 = vsub.s32 2, %v3917
        %v3919 = vrot.slane %v3904, %v3918
        %v3920 = vlaneseq
        %v3921 = vshrl.u32 %v3920, 7
        %v3922 = vsub.s32 2, %v3921
        %v3923 = vrot.slane %v3908, %v3922
        %v3924 = vlaneseq
        %v3925 = vshrl.u32 %v3924, 7
        %v3926 = vsub.s32 2, %v3925
        %v3927 = vrot.slane %v3912, %v3926
        %v3928 = vmul.f32 %v3899, %v3919
        %v3929 = vmul.f32 %v3899, %v3923
        %v3930 = vmul.f32 %v3899, %v3927
        %3934 = vrot.lane.b32.xlu0 %v3928, 95
        %v3935 = vpop.permute.xlu0 %3934
        %3936 = vrot.lane.b32.xlu0 %v3929, 95
        %v3937 = vpop.permute.xlu0 %3936
        %3938 = vrot.lane.b32.xlu0 %v3930, 95
        %v3939 = vpop.permute.xlu0 %3938
        %v3940 = vsel %vm2011, %v3935, %v3937
        %v3941 = vsel %vm2011, %v3937, %v3939
        %v3945 = vadd.f32 %v3894, %v3935
        %v3946 = vadd.f32 %v3895, %v3940
        %v3947 = vadd.f32 %v3896, %v3941
        %3948 = vset.pattern.permute.xlu0 3
        %3949 = vperm.xlu0 %3948, %v3791
        %v3950 = vpop.permute.xlu0 %3949
        %v3952 = vlaneseq
        %v3953 = vshrl.u32 %v3952, 7
        %v3954 = vsub.s32 3, %v3953
        %v3955 = vrot.slane %v3788, %v3954
        %v3956 = vlaneseq
        %v3957 = vshrl.u32 %v3956, 7
        %v3958 = vsub.s32 7, %v3957
        %v3959 = vrot.slane %v3788, %v3958
        %v3960 = vlaneseq
        %v3961 = vshrl.u32 %v3960, 7
        %v3962 = vsub.s32 3, %v3961
        %v3963 = vrot.slane %v3789, %v3962
        %v3967 = vlaneseq
        %v3968 = vshrl.u32 %v3967, 7
        %v3969 = vsub.s32 3, %v3968
        %v3970 = vrot.slane %v3955, %v3969
        %v3971 = vlaneseq
        %v3972 = vshrl.u32 %v3971, 7
        %v3973 = vsub.s32 3, %v3972
        %v3974 = vrot.slane %v3959, %v3973
        %v3975 = vlaneseq
        %v3976 = vshrl.u32 %v3975, 7
        %v3977 = vsub.s32 3, %v3976
        %v3978 = vrot.slane %v3963, %v3977
        %v3979 = vmul.f32 %v3950, %v3970
        %v3980 = vmul.f32 %v3950, %v3974
        %v3981 = vmul.f32 %v3950, %v3978
        %3985 = vrot.lane.b32.xlu0 %v3979, 95
        %v3986 = vpop.permute.xlu0 %3985
        %3987 = vrot.lane.b32.xlu0 %v3980, 95
        %v3988 = vpop.permute.xlu0 %3987
        %3989 = vrot.lane.b32.xlu0 %v3981, 95
        %v3990 = vpop.permute.xlu0 %3989
        %v3991 = vsel %vm2011, %v3986, %v3988
        %v3992 = vsel %vm2011, %v3988, %v3990
        %v3996 = vadd.f32 %v3945, %v3986
        %v3997 = vadd.f32 %v3946, %v3991
        %v3998 = vadd.f32 %v3947, %v3992
        %v3999 = vmul.f32 %v3788, %v2177
        %v4000 = vmul.f32 %v3789, %v2175
        %s4001 = scalar_lea.vmem %s6, 32
        %v4002 = vld [vmem:[%s4001] sm:$0xf]
        %4004 = vset.pattern.permute.xlu0 0
        %4005 = vperm.xlu0 %4004, %v4002
        %v4006 = vpop.permute.xlu0 %4005
        %v4010 = vlaneseq
        %v4011 = vshrl.u32 %v4010, 7
        %v4012 = vsub.s32 0, %v4011
        %v4013 = vrot.slane %v3999, %v4012
        %v4014 = vlaneseq
        %v4015 = vshrl.u32 %v4014, 7
        %v4016 = vsub.s32 4, %v4015
        %v4017 = vrot.slane %v3999, %v4016
        %v4018 = vlaneseq
        %v4019 = vshrl.u32 %v4018, 7
        %v4020 = vsub.s32 0, %v4019
        %v4021 = vrot.slane %v4000, %v4020
        %v4025 = vlaneseq
        %v4026 = vshrl.u32 %v4025, 7
        %v4027 = vsub.s32 0, %v4026
        %v4028 = vrot.slane %v4013, %v4027
        %v4029 = vlaneseq
        %v4030 = vshrl.u32 %v4029, 7
        %v4031 = vsub.s32 0, %v4030
        %v4032 = vrot.slane %v4017, %v4031
        %v4033 = vlaneseq
        %v4034 = vshrl.u32 %v4033, 7
        %v4035 = vsub.s32 0, %v4034
        %v4036 = vrot.slane %v4021, %v4035
        %v4037 = vmul.f32 %v4006, %v4028
        %v4038 = vmul.f32 %v4006, %v4032
        %v4039 = vmul.f32 %v4006, %v4036
        %4043 = vrot.lane.b32.xlu0 %v4037, 94
        %v4044 = vpop.permute.xlu0 %4043
        %4045 = vrot.lane.b32.xlu0 %v4038, 94
        %v4046 = vpop.permute.xlu0 %4045
        %4047 = vrot.lane.b32.xlu0 %v4039, 94
        %v4048 = vpop.permute.xlu0 %4047
        %v4049 = vsel %vm2230, %v4044, %v4046
        %v4050 = vsel %vm2230, %v4046, %v4048
        %v4054 = vadd.f32 %v3996, %v4044
        %v4055 = vadd.f32 %v3997, %v4049
        %v4056 = vadd.f32 %v3998, %v4050
        %4057 = vset.pattern.permute.xlu0 1
        %4058 = vperm.xlu0 %4057, %v4002
        %v4059 = vpop.permute.xlu0 %4058
        %v4061 = vlaneseq
        %v4062 = vshrl.u32 %v4061, 7
        %v4063 = vsub.s32 1, %v4062
        %v4064 = vrot.slane %v3999, %v4063
        %v4065 = vlaneseq
        %v4066 = vshrl.u32 %v4065, 7
        %v4067 = vsub.s32 5, %v4066
        %v4068 = vrot.slane %v3999, %v4067
        %v4069 = vlaneseq
        %v4070 = vshrl.u32 %v4069, 7
        %v4071 = vsub.s32 1, %v4070
        %v4072 = vrot.slane %v4000, %v4071
        %v4076 = vlaneseq
        %v4077 = vshrl.u32 %v4076, 7
        %v4078 = vsub.s32 1, %v4077
        %v4079 = vrot.slane %v4064, %v4078
        %v4080 = vlaneseq
        %v4081 = vshrl.u32 %v4080, 7
        %v4082 = vsub.s32 1, %v4081
        %v4083 = vrot.slane %v4068, %v4082
        %v4084 = vlaneseq
        %v4085 = vshrl.u32 %v4084, 7
        %v4086 = vsub.s32 1, %v4085
        %v4087 = vrot.slane %v4072, %v4086
        %v4088 = vmul.f32 %v4059, %v4079
        %v4089 = vmul.f32 %v4059, %v4083
        %v4090 = vmul.f32 %v4059, %v4087
        %4094 = vrot.lane.b32.xlu0 %v4088, 94
        %v4095 = vpop.permute.xlu0 %4094
        %4096 = vrot.lane.b32.xlu0 %v4089, 94
        %v4097 = vpop.permute.xlu0 %4096
        %4098 = vrot.lane.b32.xlu0 %v4090, 94
        %v4099 = vpop.permute.xlu0 %4098
        %v4100 = vsel %vm2230, %v4095, %v4097
        %v4101 = vsel %vm2230, %v4097, %v4099
        %v4105 = vadd.f32 %v4054, %v4095
        %v4106 = vadd.f32 %v4055, %v4100
        %v4107 = vadd.f32 %v4056, %v4101
        %4108 = vset.pattern.permute.xlu0 2
        %4109 = vperm.xlu0 %4108, %v4002
        %v4110 = vpop.permute.xlu0 %4109
        %v4112 = vlaneseq
        %v4113 = vshrl.u32 %v4112, 7
        %v4114 = vsub.s32 2, %v4113
        %v4115 = vrot.slane %v3999, %v4114
        %v4116 = vlaneseq
        %v4117 = vshrl.u32 %v4116, 7
        %v4118 = vsub.s32 6, %v4117
        %v4119 = vrot.slane %v3999, %v4118
        %v4120 = vlaneseq
        %v4121 = vshrl.u32 %v4120, 7
        %v4122 = vsub.s32 2, %v4121
        %v4123 = vrot.slane %v4000, %v4122
        %v4127 = vlaneseq
        %v4128 = vshrl.u32 %v4127, 7
        %v4129 = vsub.s32 2, %v4128
        %v4130 = vrot.slane %v4115, %v4129
        %v4131 = vlaneseq
        %v4132 = vshrl.u32 %v4131, 7
        %v4133 = vsub.s32 2, %v4132
        %v4134 = vrot.slane %v4119, %v4133
        %v4135 = vlaneseq
        %v4136 = vshrl.u32 %v4135, 7
        %v4137 = vsub.s32 2, %v4136
        %v4138 = vrot.slane %v4123, %v4137
        %v4139 = vmul.f32 %v4110, %v4130
        %v4140 = vmul.f32 %v4110, %v4134
        %v4141 = vmul.f32 %v4110, %v4138
        %4145 = vrot.lane.b32.xlu0 %v4139, 94
        %v4146 = vpop.permute.xlu0 %4145
        %4147 = vrot.lane.b32.xlu0 %v4140, 94
        %v4148 = vpop.permute.xlu0 %4147
        %4149 = vrot.lane.b32.xlu0 %v4141, 94
        %v4150 = vpop.permute.xlu0 %4149
        %v4151 = vsel %vm2230, %v4146, %v4148
        %v4152 = vsel %vm2230, %v4148, %v4150
        %v4156 = vadd.f32 %v4105, %v4146
        %v4157 = vadd.f32 %v4106, %v4151
        %v4158 = vadd.f32 %v4107, %v4152
        %4159 = vset.pattern.permute.xlu0 3
        %4160 = vperm.xlu0 %4159, %v4002
        %v4161 = vpop.permute.xlu0 %4160
        %v4163 = vlaneseq
        %v4164 = vshrl.u32 %v4163, 7
        %v4165 = vsub.s32 3, %v4164
        %v4166 = vrot.slane %v3999, %v4165
        %v4167 = vlaneseq
        %v4168 = vshrl.u32 %v4167, 7
        %v4169 = vsub.s32 7, %v4168
        %v4170 = vrot.slane %v3999, %v4169
        %v4171 = vlaneseq
        %v4172 = vshrl.u32 %v4171, 7
        %v4173 = vsub.s32 3, %v4172
        %v4174 = vrot.slane %v4000, %v4173
        %v4178 = vlaneseq
        %v4179 = vshrl.u32 %v4178, 7
        %v4180 = vsub.s32 3, %v4179
        %v4181 = vrot.slane %v4166, %v4180
        %v4182 = vlaneseq
        %v4183 = vshrl.u32 %v4182, 7
        %v4184 = vsub.s32 3, %v4183
        %v4185 = vrot.slane %v4170, %v4184
        %v4186 = vlaneseq
        %v4187 = vshrl.u32 %v4186, 7
        %v4188 = vsub.s32 3, %v4187
        %v4189 = vrot.slane %v4174, %v4188
        %v4190 = vmul.f32 %v4161, %v4181
        %v4191 = vmul.f32 %v4161, %v4185
        %v4192 = vmul.f32 %v4161, %v4189
        %4196 = vrot.lane.b32.xlu0 %v4190, 94
        %v4197 = vpop.permute.xlu0 %4196
        %4198 = vrot.lane.b32.xlu0 %v4191, 94
        %v4199 = vpop.permute.xlu0 %4198
        %4200 = vrot.lane.b32.xlu0 %v4192, 94
        %v4201 = vpop.permute.xlu0 %4200
        %v4202 = vsel %vm2230, %v4197, %v4199
        %v4203 = vsel %vm2230, %v4199, %v4201
        %v4207 = vadd.f32 %v4156, %v4197
        %v4208 = vadd.f32 %v4157, %v4202
        %v4209 = vadd.f32 %v4158, %v4203
        %v4210 = vld [vmem:[%s7] sm:$0xf]
        %4212 = vset.pattern.permute.xlu0 0
        %4213 = vperm.xlu0 %4212, %v4210
        %v4214 = vpop.permute.xlu0 %4213
        %v4216 = vadd.f32 %v4207, %v4214
        %v4217 = vadd.f32 %v4208, %v4214
        %v4218 = vadd.f32 %v4209, %v4214
        %4222 = vrot.lane.b32.xlu0 %v4216, 17
        %v4223 = vpop.permute.xlu0 %4222
        %4224 = vrot.lane.b32.xlu0 %v4217, 17
        %v4225 = vpop.permute.xlu0 %4224
        %4226 = vrot.lane.b32.xlu0 %v4218, 17
        %v4227 = vpop.permute.xlu0 %4226
        %v4228 = vsel %vm2176, %v4223, %v4225
        %v4229 = vsel %vm2176, %v4225, %v4227
        %v4232 = vsel %vm503, %v4228, 0.0
        %v4233 = vsel %vm503, %v4229, 0.0
        %v4234 = vadd.f32 %v4232, %v4233
        %4235 = vadd.xlane.f32.xlu0 %v4234
        %v4236 = vpop.xlane.xlu0 %4235
        %v4237 = vrot.slane %v4236, 4
        %v4238 = vadd.f32 %v4236, %v4237
        %v4239 = vrot.slane %v4238, 2
        %v4240 = vadd.f32 %v4238, %v4239
        %v4241 = vrot.slane %v4240, 1
        %v4242 = vadd.f32 %v4240, %v4241
        %s4243 = vtos %v4242
        %v4244 = vstv %s4243
        %v4245 = vmul.f32 %v4244, %v517
        %v4246 = vsub.f32 %v4216, %v4245
        %v4247 = vsub.f32 %v4217, %v4245
        %v4248 = vsub.f32 %v4218, %v4245
        %v4249 = vmul.f32 %v4246, %v4246
        %v4250 = vmul.f32 %v4247, %v4247
        %v4251 = vmul.f32 %v4248, %v4248
        %4255 = vrot.lane.b32.xlu0 %v4249, 17
        %v4256 = vpop.permute.xlu0 %4255
        %4257 = vrot.lane.b32.xlu0 %v4250, 17
        %v4258 = vpop.permute.xlu0 %4257
        %4259 = vrot.lane.b32.xlu0 %v4251, 17
        %v4260 = vpop.permute.xlu0 %4259
        %v4261 = vsel %vm2176, %v4256, %v4258
        %v4262 = vsel %vm2176, %v4258, %v4260
        %v4265 = vsel %vm503, %v4261, 0.0
        %v4266 = vsel %vm503, %v4262, 0.0
        %v4267 = vadd.f32 %v4265, %v4266
        %4268 = vadd.xlane.f32.xlu0 %v4267
        %v4269 = vpop.xlane.xlu0 %4268
        %v4270 = vrot.slane %v4269, 4
        %v4271 = vadd.f32 %v4269, %v4270
        %v4272 = vrot.slane %v4271, 2
        %v4273 = vadd.f32 %v4271, %v4272
        %v4274 = vrot.slane %v4273, 1
        %v4275 = vadd.f32 %v4273, %v4274
        %s4276 = vtos %v4275
        %v4277 = vstv %s4276
        %v4278 = vmul.f32 %v4277, %v517
        %v4279 = vadd.f32 %v4278, 1e-05
        %v4280 = vrsqrt.pop %v4279
        %v4281 = vmul.f32 %v4246, %v4280
        %v4282 = vmul.f32 %v4247, %v4280
        %v4283 = vmul.f32 %v4248, %v4280
        %v4284 = vld [vmem:[%s8] sm:$0xff]
        %v4286 = vcombine.high %v4284, %v4284
        %4287 = vrot.lane.b32.xlu0 %v4284, 111
        %v4288 = vpop.permute.xlu0 %4287
        %4289 = vrot.lane.b32.xlu0 %v4286, 111
        %v4290 = vpop.permute.xlu0 %4289
        %v4291 = vsel %vm554, %v4288, %v4290
        %v4295 = vmul.f32 %v4281, %v4288
        %v4296 = vmul.f32 %v4282, %v4291
        %v4297 = vmul.f32 %v4283, %v4290
        %v4298 = vld [vmem:[%s9] sm:$0xff]
        %v4300 = vcombine.high %v4298, %v4298
        %4301 = vrot.lane.b32.xlu0 %v4298, 111
        %v4302 = vpop.permute.xlu0 %4301
        %4303 = vrot.lane.b32.xlu0 %v4300, 111
        %v4304 = vpop.permute.xlu0 %4303
        %v4305 = vsel %vm554, %v4302, %v4304
        %v4309 = vadd.f32 %v4295, %v4302
        %v4310 = vadd.f32 %v4296, %v4305
        %v4311 = vadd.f32 %v4297, %v4304
        %v4312 = vld [vmem:[%s479] sm:$0x1]
        %v4313 = vld [vmem:[%s10] sm:$0xf]
        %v4315 = vlaneseq
        %v4316 = vshrl.u32 %v4315, 7
        %v4317 = vsub.s32 0, %v4316
        %v4318 = vrot.slane %v4312, %v4317
        %v4320 = vmul.f32 %v4313, %v4318
        %vm4321 = vcmask 257024
        %v4322 = vsel %vm4321, %v4320, 0.0
        %4323 = vadd.xlane.f32.xlu0 %v4322
        %v4324 = vpop.xlane.xlu0 %4323
        %v4325 = vld [vmem:[%s11] sm:$0xf]
        %v4326 = vadd.f32 %v4324, %v4325
        %v4327 = vld [vmem:[%s12] sm:$0xf]
        %v4328 = vmul.f32 %v4327, %v4318
        %v4329 = vsel %vm4321, %v4328, 0.0
        %4330 = vadd.xlane.f32.xlu0 %v4329
        %v4331 = vpop.xlane.xlu0 %4330
        %v4332 = vld [vmem:[%s13] sm:$0xf]
        %v4333 = vadd.f32 %v4331, %v4332
        %4335 = vset.pattern.permute.xlu0 0
        %4336 = vperm.xlu0 %4335, %v4326
        %v4337 = vpop.permute.xlu0 %4336
        %v4339 = vmul.f32 %v4337, %v4309
        %v4340 = vmul.f32 %v4337, %v4310
        %v4341 = vmul.f32 %v4337, %v4311
        %4343 = vset.pattern.permute.xlu0 0
        %4344 = vperm.xlu0 %4343, %v4333
        %v4345 = vpop.permute.xlu0 %4344
        %v4347 = vadd.f32 %v4339, %v4345
        %v4348 = vadd.f32 %v4340, %v4345
        %v4349 = vadd.f32 %v4341, %v4345
        %v4350 = vmax.f32 %v4347, 0.0
        %v4351 = vmax.f32 %v4348, 0.0
        %v4352 = vmax.f32 %v4349, 0.0
        %4353 = vrot.lane.b32.xlu0 %v480, 111
        %v4354 = vpop.permute.xlu0 %4353
        %4355 = vrot.lane.b32.xlu0 %v501, 111
        %v4356 = vpop.permute.xlu0 %4355
        %v4357 = vsel %vm554, %v4354, %v4356
        %v4361 = vadd.f32 %v4350, %v4354
        %v4362 = vadd.f32 %v4351, %v4357
        %v4363 = vadd.f32 %v4352, %v4356
        %v4367 = vcombine.low %v4361, %v4362
        %4368 = vrot.lane.b32.xlu0 %v4367, 17
        %v4369 = vpop.permute.xlu0 %4368
        %4370 = vrot.lane.b32.xlu0 %v4363, 17
        %v4371 = vpop.permute.xlu0 %4370
        %v4372 = vrot.slane %v4369, 4
        %v4373 = vrot.slane %v4371, 4
        %v4374 = vsel %vm503, %v4372, %v4373
        %v4375 = vsel %vm2176, %v4369, %v4374
        %4377 = vst [vmem:[%s471] sm:$0xff] %v4375
        %s4378 = sand.u32 %s340, 1
        %s4379 = scalar_lea.sflag [#allocation4], %s4378
        %s4380 = sand.u32 %s340, 1
        %s4381 = smul.addr %s4380, 8
        %s4382 = scalar_lea.vmem [#allocation3], %s4381
        // Predicated region
        $region77: #{tpu_custom_call.1} parent=75 // pred_check
          %p4383 = pneg %p350
        $region78: #{tpu_custom_call.1} parent=75 // pred_check_branch
          %4385 = sbr.rel (%p4383) target = $region80
        $region79: #{tpu_custom_call.1} parent=75 // pred_region
          %s4387 = ssub.s32 128, 128
          %4388 = vsyncadd %s4379, %s4387
          %s4389 = smul.addr %s28, 2
          %s4390 = smul.addr %s4389, 64
          %s4391 = scalar_lea.hbm %s14, %s4390
          %s4393 = sshll.u32 %s4382, 4
          %s4394 = int_to_ptr.vmem [resolvable:$true] %s4393
          %4396 = dma.vmem_to_hbm [thread:$0]  %s4394, 128, %s4391, %s4379
        $region80: #{tpu_custom_call.1} parent=75 // pred_fallthru
          _
      $region76: #{tpu_custom_call.1} parent=5 // pred_fallthru
        _
      %p4397 = scmp.le.s32.totalorder 2, %s23
      // Predicated region
      $region81: #{tpu_custom_call.1} parent=5 // pred_check
        %p4398 = pneg %p4397
      $region82: #{tpu_custom_call.1} parent=5 // pred_check_branch
        %4400 = sbr.rel (%p4398) target = $region84
      $region83: #{tpu_custom_call.1} parent=5 // pred_region
        %s4401 = ssub.s32 %s23, 2
        // Predicated region
        $region85: #{tpu_custom_call.1} parent=83 // pred_check
          %p4402 = pneg %p356
        $region86: #{tpu_custom_call.1} parent=83 // pred_check_branch
          %4404 = sbr.rel (%p4402) target = $region88
        $region87: #{tpu_custom_call.1} parent=83 // pred_region
          %s4405 = sand.u32 %s341, 1
          %s4406 = scalar_lea.sflag [#allocation4], %s4405
          %s4407 = sand.u32 %s341, 1
          %s4408 = smul.addr %s4407, 8
          %s4409 = scalar_lea.vmem [#allocation3], %s4408
          %4410 = dma.done %s4406, 128
        $region88: #{tpu_custom_call.1} parent=83 // pred_fallthru
          _
      $region84: #{tpu_custom_call.1} parent=5 // pred_fallthru
        _
    $region6: #{tpu_custom_call.1} parent=1 // loop_footer
      %s27 = sadd.s32 1, %s23
    $region7: #{tpu_custom_call.1} parent=1 // loop_footer_branch
      %22 = sbr.rel target = $region3
    $region8: #{tpu_custom_call.1} parent=1 // loop_exit
      _
    %4411 = vsyncpa [#allocation4], 1
    %s4412 = scalar_lea.sflag [#allocation4], 1
    %4413 = vsyncpa %s4412, 1

</llo_original>
